<compile_context>
chip_gen: v7x
topology: tpu7x:2x2x1
jax: 0.10.0
libtpu: 0.0.40
codegen_flags: <defaults>
</compile_context>

<pallas_src>
import functools
import math

import jax
import jax.numpy as jnp
from jax import lax
from jax.experimental import pallas as pl
from jax.experimental.pallas import tpu as pltpu

IMG_DIM = 16       # img_embed_dim
NUM_USERS = 4
USER_DIM = 16      # user_embed_dim
TIME_DIM = 100
SCORE_DIM = 16
HIDDEN = 512       # hidden_dim
NUM_BLOCKS = 2     # num_res_blocks
IN_DIM = IMG_DIM + USER_DIM + TIME_DIM + SCORE_DIM   # 148
IN_PAD = 256       # 148 zero-padded to a 128-lane multiple
OUT_PAD = 128      # 16 zero-padded to a full lane width (lane-dense stores)
EPS = 1e-5
M_TARGET = 256     # target TS*B rows per matmul (full MXU rows on v6e/v7x)


def _gelu(v):
    # exact (erf-based) GELU, matching torch.nn.GELU() default
    return 0.5 * v * (1.0 + lax.erf(v * 0.7071067811865475))


def _batchnorm_per_step(v, ts, b):
    """BatchNorm1d, training mode, identity affine, PER ORIGINAL STEP of b rows.
    v: (ts*b, H) f32 -> (ts*b, H) f32."""
    h = v.shape[-1]
    v3 = v.reshape(ts, b, h)
    mean = jnp.mean(v3, axis=1, keepdims=True)
    var = jnp.mean(jnp.square(v3 - mean), axis=1, keepdims=True)
    out = (v3 - mean) * lax.rsqrt(var + EPS)
    return out.reshape(ts * b, h)


def mlp_kernel(net_ref, x_ref,
               w_in_ref, w_blk_ref, w_out_ref, b_out_ref,
               out_ref, *, ts, b):
    net = net_ref[...]                                      # (M, IN_PAD) bf16

    # input_fc -> input_bn -> GELU   (fc bias omitted: cancelled by batch-stat BN)
    h = jnp.dot(net, w_in_ref[...], preferred_element_type=jnp.float32)
    h = _gelu(_batchnorm_per_step(h, ts, b))

    # residual blocks (unrolled; NUM_BLOCKS is a static Python constant)
    for blk in range(NUM_BLOCKS):
        res = h
        i1, i2 = 2 * blk, 2 * blk + 1
        o = jnp.dot(h.astype(jnp.bfloat16), w_blk_ref[i1],
                    preferred_element_type=jnp.float32)
        o = _gelu(_batchnorm_per_step(o, ts, b))
        o = jnp.dot(o.astype(jnp.bfloat16), w_blk_ref[i2],
                    preferred_element_type=jnp.float32)
        o = _batchnorm_per_step(o, ts, b)
        h = _gelu(o + res)

    # output_fc (padded to 128 lanes) + bias + residual add with zero-padded x
    out = jnp.dot(h.astype(jnp.bfloat16), w_out_ref[...],
                  preferred_element_type=jnp.float32)
    out_ref[...] = out + b_out_ref[...] + x_ref[...]


def init_params(key):
    def linear(k, fan_in, fan_out):
        kw, kb = jax.random.split(k)
        bound = 1.0 / math.sqrt(fan_in)
        w = jax.random.uniform(kw, (fan_in, fan_out), jnp.float32, -bound, bound)
        b = jax.random.uniform(kb, (fan_out,), jnp.float32, -bound, bound)
        return w, b

    keys = jax.random.split(key, 8)
    user_table = jax.random.normal(keys[0], (NUM_USERS, USER_DIM), jnp.float32)
    score_table = jax.random.normal(keys[1], (2, SCORE_DIM), jnp.float32)

    # input_fc: bias omitted (exactly cancelled by the following batch-stat BN)
    w_in, _ = linear(keys[2], IN_DIM, HIDDEN)
    w_in_pad = jnp.zeros((IN_PAD, HIDDEN), jnp.float32).at[:IN_DIM].set(w_in)

    # residual-block fcs: biases omitted for the same reason
    blk_keys = jax.random.split(keys[3], 2 * NUM_BLOCKS)
    w_blk = jnp.stack([linear(bk, HIDDEN, HIDDEN)[0] for bk in blk_keys])  # (4,512,512)

    # output_fc: keep bias; pad N 16 -> 128 for lane-dense output
    w_out, b_out = linear(keys[4], HIDDEN, IMG_DIM)
    w_out_pad = jnp.zeros((HIDDEN, OUT_PAD), jnp.float32).at[:, :IMG_DIM].set(w_out)
    b_out_pad = jnp.zeros((1, OUT_PAD), jnp.float32).at[0, :IMG_DIM].set(b_out)

    params = dict(
        user_table=user_table,
        score_table=score_table,
        # big weights in bf16 (halves HBM traffic; MXU-native on v5e/v6e/v7x)
        w_in=w_in_pad.astype(jnp.bfloat16),
        w_blk=w_blk.astype(jnp.bfloat16),
        w_out=w_out_pad.astype(jnp.bfloat16),
        # output bias stays f32 (added to the f32 accumulator)
        b_out=b_out_pad,
        # TODO(synk): BatchNorm gamma/beta and the pre-BN linear biases are
        # omitted (identity affine + batch-stat BN make them no-ops); re-add as
        # kernel inputs if eval-mode running stats or trained affine are used.
    )
    return params


def _embed_and_concat(params, x, t, user_id, score):
    """Embedding / sinusoidal-time glue in plain JAX. Works with any number of
    leading axes (…, B). Returns padded bf16 net_input of shape (..., IN_PAD)."""
    half = TIME_DIM // 2
    freqs = jnp.exp(jnp.arange(half, dtype=jnp.float32)
                    * (-(math.log(10000.0) / (half - 1))))
    te = t.astype(jnp.float32)[..., None] * freqs
    t_embed = jnp.concatenate([jnp.sin(te), jnp.cos(te)], axis=-1)   # (..., 100)
    user_embed = params["user_table"][user_id]                        # (..., 16)
    score_embed = params["score_table"][score]                        # (..., 16)
    net = jnp.concatenate([x, user_embed, t_embed, score_embed], axis=-1)  # (...,148)
    pad = [(0, 0)] * (net.ndim - 1) + [(0, IN_PAD - IN_DIM)]
    net = jnp.pad(net, pad)                                           # (..., 256)
    return net.astype(jnp.bfloat16)


def _forward_pallas(params, net, x):
    """net: (T, B, IN_PAD) bf16, x: (T, B, IMG_DIM) f32 -> (T, B, IMG_DIM) f32."""
    T, B, _ = net.shape

    # Steps per grid block: fold TS steps into the matmul M dimension.
    ts = max(1, min(T, -(-M_TARGET // B)))        # ceil(M_TARGET / B), capped at T
    t_pad = -(-T // ts) * ts                      # round T up to a multiple of ts
    if t_pad != T:
        net = jnp.pad(net, ((0, t_pad - T), (0, 0), (0, 0)))
        x = jnp.pad(x, ((0, t_pad - T), (0, 0), (0, 0)))
    x_pad = jnp.pad(x, ((0, 0), (0, 0), (0, OUT_PAD - IMG_DIM)))      # lane-dense

    m = ts * B
    net_flat = net.reshape(t_pad * B, IN_PAD)
    x_flat = x_pad.reshape(t_pad * B, OUT_PAD)

    def step_spec(feat):
        return pl.BlockSpec((m, feat), lambda i: (i, 0))

    def const_spec(shape):
        nd = len(shape)
        return pl.BlockSpec(shape, lambda i, _nd=nd: (0,) * _nd)

    kernel = functools.partial(mlp_kernel, ts=ts, b=B)

    out_flat = pl.pallas_call(
        kernel,
        out_shape=jax.ShapeDtypeStruct((t_pad * B, OUT_PAD), jnp.float32),
        grid=(t_pad // ts,),
        in_specs=[
            step_spec(IN_PAD),                  # net_input  (advances per block)
            step_spec(OUT_PAD),                 # x residual (advances per block)
            const_spec(params["w_in"].shape),   # weights: constant block index
            const_spec(params["w_blk"].shape),  # -> VMEM-resident across steps
            const_spec(params["w_out"].shape),
            const_spec(params["b_out"].shape),
        ],
        out_specs=step_spec(OUT_PAD),
        compiler_params=pltpu.CompilerParams(
            dimension_semantics=("parallel",)),   # step-blocks are independent
    )(net_flat, x_flat,
      params["w_in"], params["w_blk"], params["w_out"], params["b_out"])

    out = out_flat.reshape(t_pad, B, OUT_PAD)[:T, :, :IMG_DIM]
    return out


def forward(params, x, t, user_id, score):
    """Single forward pass, matching SimulationREBECAModel.forward.
    x: (B, IMG_DIM), t: (B,), user_id: (B,), score: (B,)."""
    net = _embed_and_concat(params, x, t, user_id, score)
    out = _forward_pallas(params, net[None], x[None])
    return out[0]


def forward_steps(params, x, t, user_id, score):
    """T independent forward passes in one pallas_call (weights loaded once,
    TS steps merged per grid iteration).
    x: (T, B, IMG_DIM), t/user_id/score: (T, B)."""
    net = _embed_and_concat(params, x, t, user_id, score)
    return _forward_pallas(params, net, x)


if __name__ == "__main__":
    key = jax.random.PRNGKey(0)
    kp, kx, kt, ku, ks = jax.random.split(key, 5)

    B = 8     # keep B a multiple of 8 so in-kernel BN reshapes stay free views
    T = 4
    params = init_params(kp)

    # single-step call
    x = jax.random.normal(kx, (B, IMG_DIM), jnp.float32)
    t = jax.random.uniform(kt, (B,), jnp.float32, 0.0, 100.0)
    user_id = jax.random.randint(ku, (B,), 0, NUM_USERS)
    score = jax.random.randint(ks, (B,), 0, 2)
    out = jax.jit(forward)(params, x, t, user_id, score)
    jax.block_until_ready(out)
    assert out.shape == (B, IMG_DIM)
    assert bool(jnp.all(jnp.isfinite(out)))

    # multi-step call: weights stay VMEM-resident, steps merged into matmul M
    xs = jax.random.normal(kx, (T, B, IMG_DIM), jnp.float32)
    ts = jax.random.uniform(kt, (T, B), jnp.float32, 0.0, 100.0)
    us = jax.random.randint(ku, (T, B), 0, NUM_USERS)
    ss = jax.random.randint(ks, (T, B), 0, 2)
    outs = jax.jit(forward_steps)(params, xs, ts, us, ss)
    jax.block_until_ready(outs)
    assert outs.shape == (T, B, IMG_DIM)
    assert bool(jnp.all(jnp.isfinite(outs)))

    print("KERNEL_OK")
</pallas_src>

<mosaic_0001>
module attributes {stable_mosaic.version = 11 : i64} {
  func.func @mlp_kernel(%arg0: i32, %arg1: memref<8x256xbf16, #tpu.memory_space<vmem>>, %arg2: memref<8x128xf32, #tpu.memory_space<vmem>>, %arg3: memref<256x512xbf16, #tpu.memory_space<vmem>>, %arg4: memref<4x512x512xbf16, #tpu.memory_space<vmem>>, %arg5: memref<512x128xbf16, #tpu.memory_space<vmem>>, %arg6: memref<1x128xf32, #tpu.memory_space<vmem>>, %arg7: memref<8x128xf32, #tpu.memory_space<vmem>>) attributes {dimension_semantics = [#tpu.dimension_semantics<parallel>], iteration_bounds = array<i64: 1>, scalar_prefetch = 0 : i64, scratch_operands = 0 : i64, tpu.core_type = #tpu.core_type<tc>, window_params = [{transform_indices = @transform_0, window_bounds = array<i64: 8, 256>}, {transform_indices = @transform_1, window_bounds = array<i64: 8, 128>}, {pipeline_mode = #tpu.pipeline_mode<synchronous>, transform_indices = @transform_2, window_bounds = array<i64: 256, 512>}, {pipeline_mode = #tpu.pipeline_mode<synchronous>, transform_indices = @transform_3, window_bounds = array<i64: 4, 512, 512>}, {pipeline_mode = #tpu.pipeline_mode<synchronous>, transform_indices = @transform_4, window_bounds = array<i64: 512, 128>}, {pipeline_mode = #tpu.pipeline_mode<synchronous>, transform_indices = @transform_5, window_bounds = array<i64: 1, 128>}, {transform_indices = @transform_6, window_bounds = array<i64: 8, 128>}]} {
    %c0 = arith.constant 0 : index
    %c0_0 = arith.constant 0 : index
    %0 = vector.load %arg1[%c0, %c0_0] : memref<8x256xbf16, #tpu.memory_space<vmem>>, vector<8x256xbf16>
    %c0_1 = arith.constant 0 : index
    %c0_2 = arith.constant 0 : index
    %1 = vector.load %arg3[%c0_1, %c0_2] : memref<256x512xbf16, #tpu.memory_space<vmem>>, vector<256x512xbf16>
    %cst = arith.constant dense<0.000000e+00> : vector<8x512xf32>
    %2 = tpu.matmul %0, %1, %cst {dimension_numbers = #tpu.dot_dimension_numbers<[1], [0], [0], [1], [0, 0, 1, 1], [], []>} : vector<8x256xbf16>, vector<256x512xbf16>, vector<8x512xf32> -> vector<8x512xf32>
    %3 = vector.shape_cast %2 : vector<8x512xf32> to vector<1x8x512xf32>
    %cst_3 = arith.constant dense<0.000000e+00> : vector<1x512xf32>
    %4 = vector.multi_reduction <add>, %3, %cst_3 [1] : vector<1x8x512xf32> to vector<1x512xf32>
    %5 = vector.shape_cast %4 : vector<1x512xf32> to vector<1x1x512xf32>
    %cst_4 = arith.constant 8.000000e+00 : f32
    %6 = vector.broadcast %cst_4 : f32 to vector<1x1x512xf32>
    %7 = arith.divf %5, %6 : vector<1x1x512xf32>
    %8 = vector.broadcast %7 : vector<1x1x512xf32> to vector<1x8x512xf32>
    %9 = arith.subf %3, %8 : vector<1x8x512xf32>
    %10 = arith.mulf %9, %9 : vector<1x8x512xf32>
    %cst_5 = arith.constant dense<0.000000e+00> : vector<1x512xf32>
    %11 = vector.multi_reduction <add>, %10, %cst_5 [1] : vector<1x8x512xf32> to vector<1x512xf32>
    %12 = vector.shape_cast %11 : vector<1x512xf32> to vector<1x1x512xf32>
    %cst_6 = arith.constant 8.000000e+00 : f32
    %13 = vector.broadcast %cst_6 : f32 to vector<1x1x512xf32>
    %14 = arith.divf %12, %13 : vector<1x1x512xf32>
    %15 = vector.broadcast %7 : vector<1x1x512xf32> to vector<1x8x512xf32>
    %16 = arith.subf %3, %15 : vector<1x8x512xf32>
    %cst_7 = arith.constant 9.99999974E-6 : f32
    %17 = vector.broadcast %cst_7 : f32 to vector<1x1x512xf32>
    %18 = arith.addf %14, %17 : vector<1x1x512xf32>
    %19 = math.rsqrt %18 : vector<1x1x512xf32>
    %20 = vector.broadcast %19 : vector<1x1x512xf32> to vector<1x8x512xf32>
    %21 = arith.mulf %16, %20 : vector<1x8x512xf32>
    %22 = vector.shape_cast %21 : vector<1x8x512xf32> to vector<8x512xf32>
    %cst_8 = arith.constant 5.000000e-01 : f32
    %23 = vector.broadcast %cst_8 : f32 to vector<8x512xf32>
    %24 = arith.mulf %23, %22 : vector<8x512xf32>
    %cst_9 = arith.constant 0.707106769 : f32
    %25 = vector.broadcast %cst_9 : f32 to vector<8x512xf32>
    %26 = arith.mulf %22, %25 : vector<8x512xf32>
    %27 = math.erf %26 : vector<8x512xf32>
    %cst_10 = arith.constant 1.000000e+00 : f32
    %28 = vector.broadcast %cst_10 : f32 to vector<8x512xf32>
    %29 = arith.addf %28, %27 : vector<8x512xf32>
    %30 = arith.mulf %24, %29 : vector<8x512xf32>
    %31 = arith.truncf %30 : vector<8x512xf32> to vector<8x512xbf16>
    %c0_11 = arith.constant 0 : index
    %c0_12 = arith.constant 0 : index
    %c0_13 = arith.constant 0 : index
    %32 = vector.load %arg4[%c0_11, %c0_12, %c0_13] : memref<4x512x512xbf16, #tpu.memory_space<vmem>>, vector<1x512x512xbf16>
    %33 = vector.shape_cast %32 : vector<1x512x512xbf16> to vector<512x512xbf16>
    %cst_14 = arith.constant dense<0.000000e+00> : vector<8x512xf32>
    %34 = tpu.matmul %31, %33, %cst_14 {dimension_numbers = #tpu.dot_dimension_numbers<[1], [0], [0], [1], [0, 0, 1, 1], [], []>} : vector<8x512xbf16>, vector<512x512xbf16>, vector<8x512xf32> -> vector<8x512xf32>
    %35 = vector.shape_cast %34 : vector<8x512xf32> to vector<1x8x512xf32>
    %cst_15 = arith.constant dense<0.000000e+00> : vector<1x512xf32>
    %36 = vector.multi_reduction <add>, %35, %cst_15 [1] : vector<1x8x512xf32> to vector<1x512xf32>
    %37 = vector.shape_cast %36 : vector<1x512xf32> to vector<1x1x512xf32>
    %cst_16 = arith.constant 8.000000e+00 : f32
    %38 = vector.broadcast %cst_16 : f32 to vector<1x1x512xf32>
    %39 = arith.divf %37, %38 : vector<1x1x512xf32>
    %40 = vector.broadcast %39 : vector<1x1x512xf32> to vector<1x8x512xf32>
    %41 = arith.subf %35, %40 : vector<1x8x512xf32>
    %42 = arith.mulf %41, %41 : vector<1x8x512xf32>
    %cst_17 = arith.constant dense<0.000000e+00> : vector<1x512xf32>
    %43 = vector.multi_reduction <add>, %42, %cst_17 [1] : vector<1x8x512xf32> to vector<1x512xf32>
    %44 = vector.shape_cast %43 : vector<1x512xf32> to vector<1x1x512xf32>
    %cst_18 = arith.constant 8.000000e+00 : f32
    %45 = vector.broadcast %cst_18 : f32 to vector<1x1x512xf32>
    %46 = arith.divf %44, %45 : vector<1x1x512xf32>
    %47 = vector.broadcast %39 : vector<1x1x512xf32> to vector<1x8x512xf32>
    %48 = arith.subf %35, %47 : vector<1x8x512xf32>
    %cst_19 = arith.constant 9.99999974E-6 : f32
    %49 = vector.broadcast %cst_19 : f32 to vector<1x1x512xf32>
    %50 = arith.addf %46, %49 : vector<1x1x512xf32>
    %51 = math.rsqrt %50 : vector<1x1x512xf32>
    %52 = vector.broadcast %51 : vector<1x1x512xf32> to vector<1x8x512xf32>
    %53 = arith.mulf %48, %52 : vector<1x8x512xf32>
    %54 = vector.shape_cast %53 : vector<1x8x512xf32> to vector<8x512xf32>
    %cst_20 = arith.constant 5.000000e-01 : f32
    %55 = vector.broadcast %cst_20 : f32 to vector<8x512xf32>
    %56 = arith.mulf %55, %54 : vector<8x512xf32>
    %cst_21 = arith.constant 0.707106769 : f32
    %57 = vector.broadcast %cst_21 : f32 to vector<8x512xf32>
    %58 = arith.mulf %54, %57 : vector<8x512xf32>
    %59 = math.erf %58 : vector<8x512xf32>
    %cst_22 = arith.constant 1.000000e+00 : f32
    %60 = vector.broadcast %cst_22 : f32 to vector<8x512xf32>
    %61 = arith.addf %60, %59 : vector<8x512xf32>
    %62 = arith.mulf %56, %61 : vector<8x512xf32>
    %63 = arith.truncf %62 : vector<8x512xf32> to vector<8x512xbf16>
    %c1 = arith.constant 1 : index
    %c0_23 = arith.constant 0 : index
    %c0_24 = arith.constant 0 : index
    %64 = vector.load %arg4[%c1, %c0_23, %c0_24] : memref<4x512x512xbf16, #tpu.memory_space<vmem>>, vector<1x512x512xbf16>
    %65 = vector.shape_cast %64 : vector<1x512x512xbf16> to vector<512x512xbf16>
    %cst_25 = arith.constant dense<0.000000e+00> : vector<8x512xf32>
    %66 = tpu.matmul %63, %65, %cst_25 {dimension_numbers = #tpu.dot_dimension_numbers<[1], [0], [0], [1], [0, 0, 1, 1], [], []>} : vector<8x512xbf16>, vector<512x512xbf16>, vector<8x512xf32> -> vector<8x512xf32>
    %67 = vector.shape_cast %66 : vector<8x512xf32> to vector<1x8x512xf32>
    %cst_26 = arith.constant dense<0.000000e+00> : vector<1x512xf32>
    %68 = vector.multi_reduction <add>, %67, %cst_26 [1] : vector<1x8x512xf32> to vector<1x512xf32>
    %69 = vector.shape_cast %68 : vector<1x512xf32> to vector<1x1x512xf32>
    %cst_27 = arith.constant 8.000000e+00 : f32
    %70 = vector.broadcast %cst_27 : f32 to vector<1x1x512xf32>
    %71 = arith.divf %69, %70 : vector<1x1x512xf32>
    %72 = vector.broadcast %71 : vector<1x1x512xf32> to vector<1x8x512xf32>
    %73 = arith.subf %67, %72 : vector<1x8x512xf32>
    %74 = arith.mulf %73, %73 : vector<1x8x512xf32>
    %cst_28 = arith.constant dense<0.000000e+00> : vector<1x512xf32>
    %75 = vector.multi_reduction <add>, %74, %cst_28 [1] : vector<1x8x512xf32> to vector<1x512xf32>
    %76 = vector.shape_cast %75 : vector<1x512xf32> to vector<1x1x512xf32>
    %cst_29 = arith.constant 8.000000e+00 : f32
    %77 = vector.broadcast %cst_29 : f32 to vector<1x1x512xf32>
    %78 = arith.divf %76, %77 : vector<1x1x512xf32>
    %79 = vector.broadcast %71 : vector<1x1x512xf32> to vector<1x8x512xf32>
    %80 = arith.subf %67, %79 : vector<1x8x512xf32>
    %cst_30 = arith.constant 9.99999974E-6 : f32
    %81 = vector.broadcast %cst_30 : f32 to vector<1x1x512xf32>
    %82 = arith.addf %78, %81 : vector<1x1x512xf32>
    %83 = math.rsqrt %82 : vector<1x1x512xf32>
    %84 = vector.broadcast %83 : vector<1x1x512xf32> to vector<1x8x512xf32>
    %85 = arith.mulf %80, %84 : vector<1x8x512xf32>
    %86 = vector.shape_cast %85 : vector<1x8x512xf32> to vector<8x512xf32>
    %87 = arith.addf %86, %30 : vector<8x512xf32>
    %cst_31 = arith.constant 5.000000e-01 : f32
    %88 = vector.broadcast %cst_31 : f32 to vector<8x512xf32>
    %89 = arith.mulf %88, %87 : vector<8x512xf32>
    %cst_32 = arith.constant 0.707106769 : f32
    %90 = vector.broadcast %cst_32 : f32 to vector<8x512xf32>
    %91 = arith.mulf %87, %90 : vector<8x512xf32>
    %92 = math.erf %91 : vector<8x512xf32>
    %cst_33 = arith.constant 1.000000e+00 : f32
    %93 = vector.broadcast %cst_33 : f32 to vector<8x512xf32>
    %94 = arith.addf %93, %92 : vector<8x512xf32>
    %95 = arith.mulf %89, %94 : vector<8x512xf32>
    %96 = arith.truncf %95 : vector<8x512xf32> to vector<8x512xbf16>
    %c2 = arith.constant 2 : index
    %c0_34 = arith.constant 0 : index
    %c0_35 = arith.constant 0 : index
    %97 = vector.load %arg4[%c2, %c0_34, %c0_35] : memref<4x512x512xbf16, #tpu.memory_space<vmem>>, vector<1x512x512xbf16>
    %98 = vector.shape_cast %97 : vector<1x512x512xbf16> to vector<512x512xbf16>
    %cst_36 = arith.constant dense<0.000000e+00> : vector<8x512xf32>
    %99 = tpu.matmul %96, %98, %cst_36 {dimension_numbers = #tpu.dot_dimension_numbers<[1], [0], [0], [1], [0, 0, 1, 1], [], []>} : vector<8x512xbf16>, vector<512x512xbf16>, vector<8x512xf32> -> vector<8x512xf32>
    %100 = vector.shape_cast %99 : vector<8x512xf32> to vector<1x8x512xf32>
    %cst_37 = arith.constant dense<0.000000e+00> : vector<1x512xf32>
    %101 = vector.multi_reduction <add>, %100, %cst_37 [1] : vector<1x8x512xf32> to vector<1x512xf32>
    %102 = vector.shape_cast %101 : vector<1x512xf32> to vector<1x1x512xf32>
    %cst_38 = arith.constant 8.000000e+00 : f32
    %103 = vector.broadcast %cst_38 : f32 to vector<1x1x512xf32>
    %104 = arith.divf %102, %103 : vector<1x1x512xf32>
    %105 = vector.broadcast %104 : vector<1x1x512xf32> to vector<1x8x512xf32>
    %106 = arith.subf %100, %105 : vector<1x8x512xf32>
    %107 = arith.mulf %106, %106 : vector<1x8x512xf32>
    %cst_39 = arith.constant dense<0.000000e+00> : vector<1x512xf32>
    %108 = vector.multi_reduction <add>, %107, %cst_39 [1] : vector<1x8x512xf32> to vector<1x512xf32>
    %109 = vector.shape_cast %108 : vector<1x512xf32> to vector<1x1x512xf32>
    %cst_40 = arith.constant 8.000000e+00 : f32
    %110 = vector.broadcast %cst_40 : f32 to vector<1x1x512xf32>
    %111 = arith.divf %109, %110 : vector<1x1x512xf32>
    %112 = vector.broadcast %104 : vector<1x1x512xf32> to vector<1x8x512xf32>
    %113 = arith.subf %100, %112 : vector<1x8x512xf32>
    %cst_41 = arith.constant 9.99999974E-6 : f32
    %114 = vector.broadcast %cst_41 : f32 to vector<1x1x512xf32>
    %115 = arith.addf %111, %114 : vector<1x1x512xf32>
    %116 = math.rsqrt %115 : vector<1x1x512xf32>
    %117 = vector.broadcast %116 : vector<1x1x512xf32> to vector<1x8x512xf32>
    %118 = arith.mulf %113, %117 : vector<1x8x512xf32>
    %119 = vector.shape_cast %118 : vector<1x8x512xf32> to vector<8x512xf32>
    %cst_42 = arith.constant 5.000000e-01 : f32
    %120 = vector.broadcast %cst_42 : f32 to vector<8x512xf32>
    %121 = arith.mulf %120, %119 : vector<8x512xf32>
    %cst_43 = arith.constant 0.707106769 : f32
    %122 = vector.broadcast %cst_43 : f32 to vector<8x512xf32>
    %123 = arith.mulf %119, %122 : vector<8x512xf32>
    %124 = math.erf %123 : vector<8x512xf32>
    %cst_44 = arith.constant 1.000000e+00 : f32
    %125 = vector.broadcast %cst_44 : f32 to vector<8x512xf32>
    %126 = arith.addf %125, %124 : vector<8x512xf32>
    %127 = arith.mulf %121, %126 : vector<8x512xf32>
    %128 = arith.truncf %127 : vector<8x512xf32> to vector<8x512xbf16>
    %c3 = arith.constant 3 : index
    %c0_45 = arith.constant 0 : index
    %c0_46 = arith.constant 0 : index
    %129 = vector.load %arg4[%c3, %c0_45, %c0_46] : memref<4x512x512xbf16, #tpu.memory_space<vmem>>, vector<1x512x512xbf16>
    %130 = vector.shape_cast %129 : vector<1x512x512xbf16> to vector<512x512xbf16>
    %cst_47 = arith.constant dense<0.000000e+00> : vector<8x512xf32>
    %131 = tpu.matmul %128, %130, %cst_47 {dimension_numbers = #tpu.dot_dimension_numbers<[1], [0], [0], [1], [0, 0, 1, 1], [], []>} : vector<8x512xbf16>, vector<512x512xbf16>, vector<8x512xf32> -> vector<8x512xf32>
    %132 = vector.shape_cast %131 : vector<8x512xf32> to vector<1x8x512xf32>
    %cst_48 = arith.constant dense<0.000000e+00> : vector<1x512xf32>
    %133 = vector.multi_reduction <add>, %132, %cst_48 [1] : vector<1x8x512xf32> to vector<1x512xf32>
    %134 = vector.shape_cast %133 : vector<1x512xf32> to vector<1x1x512xf32>
    %cst_49 = arith.constant 8.000000e+00 : f32
    %135 = vector.broadcast %cst_49 : f32 to vector<1x1x512xf32>
    %136 = arith.divf %134, %135 : vector<1x1x512xf32>
    %137 = vector.broadcast %136 : vector<1x1x512xf32> to vector<1x8x512xf32>
    %138 = arith.subf %132, %137 : vector<1x8x512xf32>
    %139 = arith.mulf %138, %138 : vector<1x8x512xf32>
    %cst_50 = arith.constant dense<0.000000e+00> : vector<1x512xf32>
    %140 = vector.multi_reduction <add>, %139, %cst_50 [1] : vector<1x8x512xf32> to vector<1x512xf32>
    %141 = vector.shape_cast %140 : vector<1x512xf32> to vector<1x1x512xf32>
    %cst_51 = arith.constant 8.000000e+00 : f32
    %142 = vector.broadcast %cst_51 : f32 to vector<1x1x512xf32>
    %143 = arith.divf %141, %142 : vector<1x1x512xf32>
    %144 = vector.broadcast %136 : vector<1x1x512xf32> to vector<1x8x512xf32>
    %145 = arith.subf %132, %144 : vector<1x8x512xf32>
    %cst_52 = arith.constant 9.99999974E-6 : f32
    %146 = vector.broadcast %cst_52 : f32 to vector<1x1x512xf32>
    %147 = arith.addf %143, %146 : vector<1x1x512xf32>
    %148 = math.rsqrt %147 : vector<1x1x512xf32>
    %149 = vector.broadcast %148 : vector<1x1x512xf32> to vector<1x8x512xf32>
    %150 = arith.mulf %145, %149 : vector<1x8x512xf32>
    %151 = vector.shape_cast %150 : vector<1x8x512xf32> to vector<8x512xf32>
    %152 = arith.addf %151, %95 : vector<8x512xf32>
    %cst_53 = arith.constant 5.000000e-01 : f32
    %153 = vector.broadcast %cst_53 : f32 to vector<8x512xf32>
    %154 = arith.mulf %153, %152 : vector<8x512xf32>
    %cst_54 = arith.constant 0.707106769 : f32
    %155 = vector.broadcast %cst_54 : f32 to vector<8x512xf32>
    %156 = arith.mulf %152, %155 : vector<8x512xf32>
    %157 = math.erf %156 : vector<8x512xf32>
    %cst_55 = arith.constant 1.000000e+00 : f32
    %158 = vector.broadcast %cst_55 : f32 to vector<8x512xf32>
    %159 = arith.addf %158, %157 : vector<8x512xf32>
    %160 = arith.mulf %154, %159 : vector<8x512xf32>
    %161 = arith.truncf %160 : vector<8x512xf32> to vector<8x512xbf16>
    %c0_56 = arith.constant 0 : index
    %c0_57 = arith.constant 0 : index
    %162 = vector.load %arg5[%c0_56, %c0_57] : memref<512x128xbf16, #tpu.memory_space<vmem>>, vector<512x128xbf16>
    %cst_58 = arith.constant dense<0.000000e+00> : vector<8x128xf32>
    %163 = tpu.matmul %161, %162, %cst_58 {dimension_numbers = #tpu.dot_dimension_numbers<[1], [0], [0], [1], [0, 0, 1, 1], [], []>} : vector<8x512xbf16>, vector<512x128xbf16>, vector<8x128xf32> -> vector<8x128xf32>
    %c0_59 = arith.constant 0 : index
    %c0_60 = arith.constant 0 : index
    %164 = vector.load %arg6[%c0_59, %c0_60] : memref<1x128xf32, #tpu.memory_space<vmem>>, vector<1x128xf32>
    %165 = vector.broadcast %164 : vector<1x128xf32> to vector<8x128xf32>
    %166 = arith.addf %163, %165 : vector<8x128xf32>
    %c0_61 = arith.constant 0 : index
    %c0_62 = arith.constant 0 : index
    %167 = vector.load %arg2[%c0_61, %c0_62] : memref<8x128xf32, #tpu.memory_space<vmem>>, vector<8x128xf32>
    %168 = arith.addf %166, %167 : vector<8x128xf32>
    %c0_63 = arith.constant 0 : index
    %c0_64 = arith.constant 0 : index
    %169 = vector.load %arg7[%c0_63, %c0_64] : memref<8x128xf32, #tpu.memory_space<vmem>>, vector<8x128xf32>
    tpu.vector_store %arg7[%c0_63, %c0_64], %168 {strides = array<i32>} : memref<8x128xf32, #tpu.memory_space<vmem>>, vector<8x128xf32>,
    return
  }
  func.func @transform_0(%arg0: i32) -> (i32, i32) {
    %c0_i32 = arith.constant 0 : i32
    %c0_i32_0 = arith.constant 0 : i32
    return %arg0, %c0_i32 : i32, i32
  }
  func.func @transform_1(%arg0: i32) -> (i32, i32) {
    %c0_i32 = arith.constant 0 : i32
    %c0_i32_0 = arith.constant 0 : i32
    return %arg0, %c0_i32 : i32, i32
  }
  func.func @transform_2(%arg0: i32) -> (i32, i32) {
    %c0_i32 = arith.constant 0 : i32
    %c0_i32_0 = arith.constant 0 : i32
    %c0_i32_1 = arith.constant 0 : i32
    return %c0_i32, %c0_i32_0 : i32, i32
  }
  func.func @transform_3(%arg0: i32) -> (i32, i32, i32) {
    %c0_i32 = arith.constant 0 : i32
    %c0_i32_0 = arith.constant 0 : i32
    %c0_i32_1 = arith.constant 0 : i32
    %c0_i32_2 = arith.constant 0 : i32
    return %c0_i32, %c0_i32_0, %c0_i32_1 : i32, i32, i32
  }
  func.func @transform_4(%arg0: i32) -> (i32, i32) {
    %c0_i32 = arith.constant 0 : i32
    %c0_i32_0 = arith.constant 0 : i32
    %c0_i32_1 = arith.constant 0 : i32
    return %c0_i32, %c0_i32_0 : i32, i32
  }
  func.func @transform_5(%arg0: i32) -> (i32, i32) {
    %c0_i32 = arith.constant 0 : i32
    %c0_i32_0 = arith.constant 0 : i32
    %c0_i32_1 = arith.constant 0 : i32
    return %c0_i32, %c0_i32_0 : i32, i32
  }
  func.func @transform_6(%arg0: i32) -> (i32, i32) {
    %c0_i32 = arith.constant 0 : i32
    %c0_i32_0 = arith.constant 0 : i32
    return %arg0, %c0_i32 : i32, i32
  }
}

</mosaic_0001>

<llo_original>
// kernel: forward.1
$region0: #{forward.1}
  #allocation0 [shape = 'u32[]', space=smem, size = 0x4, offset = 0x4, fixed_abs, tag = 'smem constant byte address 0x4 - core index']
  #allocation1 [shape = 'u32[144,128]{1,0:T(1,128)}', space=vmem, size = 0x12000, scoped, tag = 'internal scratch']
  %s0 = inlined_call_operand.vmem [shape: bf16[8,256], index: 0, kind: input, shape index: {}]
  %s1 = inlined_call_operand.vmem [shape: f32[8,128], index: 1, kind: input, shape index: {}]
  %s2 = inlined_call_operand.hbm [shape: bf16[256,512], index: 2, kind: input, shape index: {}]
  %s3 = inlined_call_operand.hbm [shape: bf16[4,512,512], index: 3, kind: input, shape index: {}]
  %s4 = inlined_call_operand.hbm [shape: bf16[512,128], index: 4, kind: input, shape index: {}]
  %s5 = inlined_call_operand.hbm [shape: f32[1,128], index: 5, kind: input, shape index: {}]
  %s6 = inlined_call_operand.vmem [shape: f32[8,128], index: 6, kind: output, shape index: {}]
  %s7 = sld [smem:[#allocation0]]
  $region50: #{forward.1} parent=0
    _
  %s9 = ssub.s32 1, %s7
  %s10 = scalar_select 0, %s9, %s7
  $region1: #{forward.1} parent=0
    #allocation2 [shape = 'u8[262144]{0}', space=vmem, size = 0x40000, scoped, tag = 'input window, operand 2, single buffered']
    #allocation3 [shape = 's32[1]{0}', space=sflag, size = 0x4, scoped, tag = 'scoped memory for forward.1']
    #allocation4 [shape = 'u8[2097152]{0}', space=vmem, size = 0x200000, scoped, tag = 'input window, operand 3, single buffered']
    #allocation5 [shape = 's32[1]{0}', space=sflag, size = 0x4, scoped, tag = 'scoped memory for forward.1']
    #allocation6 [shape = 'u8[131072]{0}', space=vmem, size = 0x20000, scoped, tag = 'input window, operand 4, single buffered']
    #allocation7 [shape = 'u8[512]{0}', space=vmem, size = 0x400, scoped, tag = 'input window, operand 5, single buffered']
    #allocation8 [shape = 's32[1]{0}', space=sflag, size = 0x4, scoped, tag = 'scoped memory for forward.1']
    %11 = vsyncpa [#allocation3], 0
    %12 = vsyncpa [#allocation5], 0
    %13 = vsyncpa [#allocation8], 0
    // Predicated region
    $region2: #{forward.1} parent=1 // pred_check
      _
    $region3: #{forward.1} parent=1 // pred_check_branch
      %15 = sbr.rel (0) target = $region5
    $region4: #{forward.1} parent=1 // pred_region
      _
    $region5: #{forward.1} parent=1 // pred_fallthru
      _
    // Predicated region
    $region6: #{forward.1} parent=1 // pred_check
      _
    $region7: #{forward.1} parent=1 // pred_check_branch
      %17 = sbr.rel (0) target = $region9
    $region8: #{forward.1} parent=1 // pred_region
      _
    $region9: #{forward.1} parent=1 // pred_fallthru
      _
    // Predicated region
    $region10: #{forward.1} parent=1 // pred_check
      _
    $region11: #{forward.1} parent=1 // pred_check_branch
      %19 = sbr.rel (0) target = $region13
    $region12: #{forward.1} parent=1 // pred_region
      %s21 = ssub.s32 8192, 8192
      %22 = vsyncadd [#allocation3], %s21
      %s23 = sshll.u32 [#allocation2], 4
      %s24 = int_to_ptr.vmem [resolvable:$true] %s23
      %29 = dma.hbm_to_vmem [thread:$0]  %s2, 8192, %s24, [#allocation3], 256, 256, 16
    $region13: #{forward.1} parent=1 // pred_fallthru
      _
    // Predicated region
    $region14: #{forward.1} parent=1 // pred_check
      _
    $region15: #{forward.1} parent=1 // pred_check_branch
      %31 = sbr.rel (0) target = $region17
    $region16: #{forward.1} parent=1 // pred_region
      %s33 = ssub.s32 65536, 65536
      %34 = vsyncadd [#allocation5], %s33
      %s35 = sshll.u32 [#allocation4], 4
      %s36 = int_to_ptr.vmem [resolvable:$true] %s35
      %41 = dma.hbm_to_vmem [thread:$0]  %s3, 65536, %s36, [#allocation5], 256, 256, 16
    $region17: #{forward.1} parent=1 // pred_fallthru
      _
    // Predicated region
    $region18: #{forward.1} parent=1 // pred_check
      _
    $region19: #{forward.1} parent=1 // pred_check_branch
      %43 = sbr.rel (0) target = $region21
    $region20: #{forward.1} parent=1 // pred_region
      %s45 = ssub.s32 4096, 4096
      %46 = vsyncadd [#allocation5], %s45
      %s47 = sshll.u32 [#allocation6], 4
      %s48 = int_to_ptr.vmem [resolvable:$true] %s47
      %53 = dma.hbm_to_vmem [thread:$0]  %s4, 4096, %s48, [#allocation5], 64, 64, 4
    $region21: #{forward.1} parent=1 // pred_fallthru
      _
    // Predicated region
    $region22: #{forward.1} parent=1 // pred_check
      _
    $region23: #{forward.1} parent=1 // pred_check_branch
      %55 = sbr.rel (0) target = $region25
    $region24: #{forward.1} parent=1 // pred_region
      %s57 = ssub.s32 16, 16
      %58 = vsyncadd [#allocation8], %s57
      %s60 = sshll.u32 [#allocation7], 4
      %s61 = int_to_ptr.vmem [resolvable:$true] %s60
      %63 = dma.hbm_to_vmem [thread:$0]  %s5, 16, %s61, [#allocation8]
    $region25: #{forward.1} parent=1 // pred_fallthru
      _
    // Predicated region
    $region26: #{forward.1} parent=1 // pred_check
      _
    $region27: #{forward.1} parent=1 // pred_check_branch
      %65 = sbr.rel (0) target = $region29
    $region28: #{forward.1} parent=1 // pred_region
      %66 = dma.done [#allocation3], 8192
    $region29: #{forward.1} parent=1 // pred_fallthru
      _
    // Predicated region
    $region30: #{forward.1} parent=1 // pred_check
      _
    $region31: #{forward.1} parent=1 // pred_check_branch
      %68 = sbr.rel (0) target = $region33
    $region32: #{forward.1} parent=1 // pred_region
      %69 = dma.done [#allocation5], 65536
    $region33: #{forward.1} parent=1 // pred_fallthru
      _
    // Predicated region
    $region34: #{forward.1} parent=1 // pred_check
      _
    $region35: #{forward.1} parent=1 // pred_check_branch
      %71 = sbr.rel (0) target = $region37
    $region36: #{forward.1} parent=1 // pred_region
      %72 = dma.done [#allocation5], 4096
    $region37: #{forward.1} parent=1 // pred_fallthru
      _
    // Predicated region
    $region38: #{forward.1} parent=1 // pred_check
      _
    $region39: #{forward.1} parent=1 // pred_check_branch
      %74 = sbr.rel (0) target = $region41
    $region40: #{forward.1} parent=1 // pred_region
      %75 = dma.done [#allocation8], 16
    $region41: #{forward.1} parent=1 // pred_fallthru
      _
    %v77 = vld [vmem:[%s0] sm:$0xff]
    %v78 = vld [vmem:[#allocation2] sm:$0xff]
    %v79 = vld [vmem:[#allocation2 + $0x8] sm:$0xff]
    %v80 = vld [vmem:[#allocation2 + $0x10] sm:$0xff]
    %v81 = vld [vmem:[#allocation2 + $0x18] sm:$0xff]
    %v82 = vld [vmem:[#allocation2 + $0x20] sm:$0xff]
    %v83 = vld [vmem:[#allocation2 + $0x28] sm:$0xff]
    %v84 = vld [vmem:[#allocation2 + $0x30] sm:$0xff]
    %v85 = vld [vmem:[#allocation2 + $0x38] sm:$0xff]
    %v86 = vld [vmem:[#allocation2 + $0x40] sm:$0xff]
    %v87 = vld [vmem:[#allocation2 + $0x48] sm:$0xff]
    %v88 = vld [vmem:[#allocation2 + $0x50] sm:$0xff]
    %v89 = vld [vmem:[#allocation2 + $0x58] sm:$0xff]
    %v90 = vld [vmem:[#allocation2 + $0x60] sm:$0xff]
    %v91 = vld [vmem:[#allocation2 + $0x68] sm:$0xff]
    %v92 = vld [vmem:[#allocation2 + $0x70] sm:$0xff]
    %v93 = vld [vmem:[#allocation2 + $0x78] sm:$0xff]
    %v94 = vld [vmem:[#allocation2 + $0x80] sm:$0xff]
    %v95 = vld [vmem:[#allocation2 + $0x88] sm:$0xff]
    %v96 = vld [vmem:[#allocation2 + $0x90] sm:$0xff]
    %v97 = vld [vmem:[#allocation2 + $0x98] sm:$0xff]
    %v98 = vld [vmem:[#allocation2 + $0xa0] sm:$0xff]
    %v99 = vld [vmem:[#allocation2 + $0xa8] sm:$0xff]
    %v100 = vld [vmem:[#allocation2 + $0xb0] sm:$0xff]
    %v101 = vld [vmem:[#allocation2 + $0xb8] sm:$0xff]
    %v102 = vld [vmem:[#allocation2 + $0xc0] sm:$0xff]
    %v103 = vld [vmem:[#allocation2 + $0xc8] sm:$0xff]
    %v104 = vld [vmem:[#allocation2 + $0xd0] sm:$0xff]
    %v105 = vld [vmem:[#allocation2 + $0xd8] sm:$0xff]
    %v106 = vld [vmem:[#allocation2 + $0xe0] sm:$0xff]
    %v107 = vld [vmem:[#allocation2 + $0xe8] sm:$0xff]
    %v108 = vld [vmem:[#allocation2 + $0xf0] sm:$0xff]
    %v109 = vld [vmem:[#allocation2 + $0xf8] sm:$0xff]
    %v110 = vld [vmem:[#allocation2 + $0x100] sm:$0xff]
    %v111 = vld [vmem:[#allocation2 + $0x108] sm:$0xff]
    %v112 = vld [vmem:[#allocation2 + $0x110] sm:$0xff]
    %v113 = vld [vmem:[#allocation2 + $0x118] sm:$0xff]
    %v114 = vld [vmem:[#allocation2 + $0x120] sm:$0xff]
    %v115 = vld [vmem:[#allocation2 + $0x128] sm:$0xff]
    %v116 = vld [vmem:[#allocation2 + $0x130] sm:$0xff]
    %v117 = vld [vmem:[#allocation2 + $0x138] sm:$0xff]
    %v118 = vld [vmem:[#allocation2 + $0x140] sm:$0xff]
    %v119 = vld [vmem:[#allocation2 + $0x148] sm:$0xff]
    %v120 = vld [vmem:[#allocation2 + $0x150] sm:$0xff]
    %v121 = vld [vmem:[#allocation2 + $0x158] sm:$0xff]
    %v122 = vld [vmem:[#allocation2 + $0x160] sm:$0xff]
    %v123 = vld [vmem:[#allocation2 + $0x168] sm:$0xff]
    %v124 = vld [vmem:[#allocation2 + $0x170] sm:$0xff]
    %v125 = vld [vmem:[#allocation2 + $0x178] sm:$0xff]
    %v126 = vld [vmem:[#allocation2 + $0x180] sm:$0xff]
    %v127 = vld [vmem:[#allocation2 + $0x188] sm:$0xff]
    %v128 = vld [vmem:[#allocation2 + $0x190] sm:$0xff]
    %v129 = vld [vmem:[#allocation2 + $0x198] sm:$0xff]
    %v130 = vld [vmem:[#allocation2 + $0x1a0] sm:$0xff]
    %v131 = vld [vmem:[#allocation2 + $0x1a8] sm:$0xff]
    %v132 = vld [vmem:[#allocation2 + $0x1b0] sm:$0xff]
    %v133 = vld [vmem:[#allocation2 + $0x1b8] sm:$0xff]
    %v134 = vld [vmem:[#allocation2 + $0x1c0] sm:$0xff]
    %v135 = vld [vmem:[#allocation2 + $0x1c8] sm:$0xff]
    %v136 = vld [vmem:[#allocation2 + $0x1d0] sm:$0xff]
    %v137 = vld [vmem:[#allocation2 + $0x1d8] sm:$0xff]
    %v138 = vld [vmem:[#allocation2 + $0x1e0] sm:$0xff]
    %v139 = vld [vmem:[#allocation2 + $0x1e8] sm:$0xff]
    %v140 = vld [vmem:[#allocation2 + $0x1f0] sm:$0xff]
    %v141 = vld [vmem:[#allocation2 + $0x1f8] sm:$0xff]
    %v143 = vunpack.c.l.b16 %v77
    %v144 = vunpack.c.h.b16 %v77
    %v145 = vpack.c.b16 %v143, %v143
    %v146 = vpack.c.b16 %v144, %v144
    %v213 = vunpack.c.l.b16 %v78
    %v214 = vunpack.c.h.b16 %v78
    %v215 = vunpack.c.l.b16 %v79
    %v216 = vunpack.c.h.b16 %v79
    %v217 = vunpack.c.l.b16 %v80
    %v218 = vunpack.c.h.b16 %v80
    %v219 = vunpack.c.l.b16 %v81
    %v220 = vunpack.c.h.b16 %v81
    %v221 = vunpack.c.l.b16 %v82
    %v222 = vunpack.c.h.b16 %v82
    %v223 = vunpack.c.l.b16 %v83
    %v224 = vunpack.c.h.b16 %v83
    %v225 = vunpack.c.l.b16 %v84
    %v226 = vunpack.c.h.b16 %v84
    %v227 = vunpack.c.l.b16 %v85
    %v228 = vunpack.c.h.b16 %v85
    %v229 = vunpack.c.l.b16 %v86
    %v230 = vunpack.c.h.b16 %v86
    %v231 = vunpack.c.l.b16 %v87
    %v232 = vunpack.c.h.b16 %v87
    %v233 = vunpack.c.l.b16 %v88
    %v234 = vunpack.c.h.b16 %v88
    %v235 = vunpack.c.l.b16 %v89
    %v236 = vunpack.c.h.b16 %v89
    %v237 = vunpack.c.l.b16 %v90
    %v238 = vunpack.c.h.b16 %v90
    %v239 = vunpack.c.l.b16 %v91
    %v240 = vunpack.c.h.b16 %v91
    %v241 = vunpack.c.l.b16 %v92
    %v242 = vunpack.c.h.b16 %v92
    %v243 = vunpack.c.l.b16 %v93
    %v244 = vunpack.c.h.b16 %v93
    %v245 = vunpack.c.l.b16 %v94
    %v246 = vunpack.c.h.b16 %v94
    %v247 = vunpack.c.l.b16 %v95
    %v248 = vunpack.c.h.b16 %v95
    %v249 = vunpack.c.l.b16 %v96
    %v250 = vunpack.c.h.b16 %v96
    %v251 = vunpack.c.l.b16 %v97
    %v252 = vunpack.c.h.b16 %v97
    %v253 = vunpack.c.l.b16 %v98
    %v254 = vunpack.c.h.b16 %v98
    %v255 = vunpack.c.l.b16 %v99
    %v256 = vunpack.c.h.b16 %v99
    %v257 = vunpack.c.l.b16 %v100
    %v258 = vunpack.c.h.b16 %v100
    %v259 = vunpack.c.l.b16 %v101
    %v260 = vunpack.c.h.b16 %v101
    %v261 = vunpack.c.l.b16 %v102
    %v262 = vunpack.c.h.b16 %v102
    %v263 = vunpack.c.l.b16 %v103
    %v264 = vunpack.c.h.b16 %v103
    %v265 = vunpack.c.l.b16 %v104
    %v266 = vunpack.c.h.b16 %v104
    %v267 = vunpack.c.l.b16 %v105
    %v268 = vunpack.c.h.b16 %v105
    %v269 = vunpack.c.l.b16 %v106
    %v270 = vunpack.c.h.b16 %v106
    %v271 = vunpack.c.l.b16 %v107
    %v272 = vunpack.c.h.b16 %v107
    %v273 = vunpack.c.l.b16 %v108
    %v274 = vunpack.c.h.b16 %v108
    %v275 = vunpack.c.l.b16 %v109
    %v276 = vunpack.c.h.b16 %v109
    %v277 = vunpack.c.l.b16 %v110
    %v278 = vunpack.c.h.b16 %v110
    %v279 = vunpack.c.l.b16 %v111
    %v280 = vunpack.c.h.b16 %v111
    %v281 = vunpack.c.l.b16 %v112
    %v282 = vunpack.c.h.b16 %v112
    %v283 = vunpack.c.l.b16 %v113
    %v284 = vunpack.c.h.b16 %v113
    %v285 = vunpack.c.l.b16 %v114
    %v286 = vunpack.c.h.b16 %v114
    %v287 = vunpack.c.l.b16 %v115
    %v288 = vunpack.c.h.b16 %v115
    %v289 = vunpack.c.l.b16 %v116
    %v290 = vunpack.c.h.b16 %v116
    %v291 = vunpack.c.l.b16 %v117
    %v292 = vunpack.c.h.b16 %v117
    %v293 = vunpack.c.l.b16 %v118
    %v294 = vunpack.c.h.b16 %v118
    %v295 = vunpack.c.l.b16 %v119
    %v296 = vunpack.c.h.b16 %v119
    %v297 = vunpack.c.l.b16 %v120
    %v298 = vunpack.c.h.b16 %v120
    %v299 = vunpack.c.l.b16 %v121
    %v300 = vunpack.c.h.b16 %v121
    %v301 = vunpack.c.l.b16 %v122
    %v302 = vunpack.c.h.b16 %v122
    %v303 = vunpack.c.l.b16 %v123
    %v304 = vunpack.c.h.b16 %v123
    %v305 = vunpack.c.l.b16 %v124
    %v306 = vunpack.c.h.b16 %v124
    %v307 = vunpack.c.l.b16 %v125
    %v308 = vunpack.c.h.b16 %v125
    %v309 = vunpack.c.l.b16 %v126
    %v310 = vunpack.c.h.b16 %v126
    %v311 = vunpack.c.l.b16 %v127
    %v312 = vunpack.c.h.b16 %v127
    %v313 = vunpack.c.l.b16 %v128
    %v314 = vunpack.c.h.b16 %v128
    %v315 = vunpack.c.l.b16 %v129
    %v316 = vunpack.c.h.b16 %v129
    %v317 = vunpack.c.l.b16 %v130
    %v318 = vunpack.c.h.b16 %v130
    %v319 = vunpack.c.l.b16 %v131
    %v320 = vunpack.c.h.b16 %v131
    %v321 = vunpack.c.l.b16 %v132
    %v322 = vunpack.c.h.b16 %v132
    %v323 = vunpack.c.l.b16 %v133
    %v324 = vunpack.c.h.b16 %v133
    %v325 = vunpack.c.l.b16 %v134
    %v326 = vunpack.c.h.b16 %v134
    %v327 = vunpack.c.l.b16 %v135
    %v328 = vunpack.c.h.b16 %v135
    %v329 = vunpack.c.l.b16 %v136
    %v330 = vunpack.c.h.b16 %v136
    %v331 = vunpack.c.l.b16 %v137
    %v332 = vunpack.c.h.b16 %v137
    %v333 = vunpack.c.l.b16 %v138
    %v334 = vunpack.c.h.b16 %v138
    %v335 = vunpack.c.l.b16 %v139
    %v336 = vunpack.c.h.b16 %v139
    %v337 = vunpack.c.l.b16 %v140
    %v338 = vunpack.c.h.b16 %v140
    %v339 = vunpack.c.l.b16 %v141
    %v340 = vunpack.c.h.b16 %v141
    %v341 = vpack.c.b16 %v217, %v213
    %v342 = vpack.c.b16 %v218, %v214
    %v343 = vpack.c.b16 %v219, %v215
    %v344 = vpack.c.b16 %v220, %v216
    %v345 = vpack.c.b16 %v225, %v221
    %v346 = vpack.c.b16 %v226, %v222
    %v347 = vpack.c.b16 %v227, %v223
    %v348 = vpack.c.b16 %v228, %v224
    %v349 = vpack.c.b16 %v233, %v229
    %v350 = vpack.c.b16 %v234, %v230
    %v351 = vpack.c.b16 %v235, %v231
    %v352 = vpack.c.b16 %v236, %v232
    %v353 = vpack.c.b16 %v241, %v237
    %v354 = vpack.c.b16 %v242, %v238
    %v355 = vpack.c.b16 %v243, %v239
    %v356 = vpack.c.b16 %v244, %v240
    %v357 = vpack.c.b16 %v249, %v245
    %v358 = vpack.c.b16 %v250, %v246
    %v359 = vpack.c.b16 %v251, %v247
    %v360 = vpack.c.b16 %v252, %v248
    %v361 = vpack.c.b16 %v257, %v253
    %v362 = vpack.c.b16 %v258, %v254
    %v363 = vpack.c.b16 %v259, %v255
    %v364 = vpack.c.b16 %v260, %v256
    %v365 = vpack.c.b16 %v265, %v261
    %v366 = vpack.c.b16 %v266, %v262
    %v367 = vpack.c.b16 %v267, %v263
    %v368 = vpack.c.b16 %v268, %v264
    %v369 = vpack.c.b16 %v273, %v269
    %v370 = vpack.c.b16 %v274, %v270
    %v371 = vpack.c.b16 %v275, %v271
    %v372 = vpack.c.b16 %v276, %v272
    %v373 = vpack.c.b16 %v281, %v277
    %v374 = vpack.c.b16 %v282, %v278
    %v375 = vpack.c.b16 %v283, %v279
    %v376 = vpack.c.b16 %v284, %v280
    %v377 = vpack.c.b16 %v289, %v285
    %v378 = vpack.c.b16 %v290, %v286
    %v379 = vpack.c.b16 %v291, %v287
    %v380 = vpack.c.b16 %v292, %v288
    %v381 = vpack.c.b16 %v297, %v293
    %v382 = vpack.c.b16 %v298, %v294
    %v383 = vpack.c.b16 %v299, %v295
    %v384 = vpack.c.b16 %v300, %v296
    %v385 = vpack.c.b16 %v305, %v301
    %v386 = vpack.c.b16 %v306, %v302
    %v387 = vpack.c.b16 %v307, %v303
    %v388 = vpack.c.b16 %v308, %v304
    %v389 = vpack.c.b16 %v313, %v309
    %v390 = vpack.c.b16 %v314, %v310
    %v391 = vpack.c.b16 %v315, %v311
    %v392 = vpack.c.b16 %v316, %v312
    %v393 = vpack.c.b16 %v321, %v317
    %v394 = vpack.c.b16 %v322, %v318
    %v395 = vpack.c.b16 %v323, %v319
    %v396 = vpack.c.b16 %v324, %v320
    %v397 = vpack.c.b16 %v329, %v325
    %v398 = vpack.c.b16 %v330, %v326
    %v399 = vpack.c.b16 %v331, %v327
    %v400 = vpack.c.b16 %v332, %v328
    %v401 = vpack.c.b16 %v337, %v333
    %v402 = vpack.c.b16 %v338, %v334
    %v403 = vpack.c.b16 %v339, %v335
    %v404 = vpack.c.b16 %v340, %v336
    %469 = vmatprep.subr.bf16.mxu0 %v342
    %470 = vmatpush1.bf16.msra.mxu0 %v341
    %471 = vmatprep.subr.bf16.mxu0 %v346
    %472 = vmatpush1.bf16.msra.mxu0 %v345
    %473 = vmatprep.subr.bf16.mxu0 %v350
    %474 = vmatpush1.bf16.msra.mxu0 %v349
    %475 = vmatprep.subr.bf16.mxu0 %v354
    %476 = vmatpush1.bf16.msra.mxu0 %v353
    %477 = vmatprep.subr.bf16.mxu0 %v358
    %478 = vmatpush1.bf16.msra.mxu0 %v357
    %479 = vmatprep.subr.bf16.mxu0 %v362
    %480 = vmatpush1.bf16.msra.mxu0 %v361
    %481 = vmatprep.subr.bf16.mxu0 %v366
    %482 = vmatpush1.bf16.msra.mxu0 %v365
    %483 = vmatprep.subr.bf16.mxu0 %v370
    %484 = vmatpush1.bf16.msra.mxu0 %v369
    %485 = vmatprep.subr.bf16.mxu0 %v374
    %486 = vmatpush1.bf16.msra.mxu0 %v373
    %487 = vmatprep.subr.bf16.mxu0 %v378
    %488 = vmatpush1.bf16.msra.mxu0 %v377
    %489 = vmatprep.subr.bf16.mxu0 %v382
    %490 = vmatpush1.bf16.msra.mxu0 %v381
    %491 = vmatprep.subr.bf16.mxu0 %v386
    %492 = vmatpush1.bf16.msra.mxu0 %v385
    %493 = vmatprep.subr.bf16.mxu0 %v390
    %494 = vmatpush1.bf16.msra.mxu0 %v389
    %495 = vmatprep.subr.bf16.mxu0 %v394
    %496 = vmatpush1.bf16.msra.mxu0 %v393
    %497 = vmatprep.subr.bf16.mxu0 %v398
    %498 = vmatpush1.bf16.msra.mxu0 %v397
    %499 = vmatprep.subr.bf16.mxu0 %v402
    %500 = vmatpush1.bf16.msra.mxu0 %v401
    %501 = vmatprep.mubr.bf16.mxu0 %v146
    %502 = vmatmul.mubr.bf16.gmra.mrb[0].mxu0 %v145
    %v503 = vpop.f32.mrb[0].mxu0
    %v504 = vadd.f32 0.0, %v503
    %v505 = vpop.f32.mrb[0].mxu0
    %v506 = vadd.f32 0.0, %v505
    %v507 = vpop.f32.mrb[0].mxu0
    %v508 = vpop.f32.mrb[0].mxu0
    %509 = vdwg.mxu0
    %510 = vmatprep.subr.bf16.mxu0 %v344
    %511 = vmatpush1.bf16.msra.mxu0 %v343
    %512 = vmatprep.subr.bf16.mxu0 %v348
    %513 = vmatpush1.bf16.msra.mxu0 %v347
    %514 = vmatprep.subr.bf16.mxu0 %v352
    %515 = vmatpush1.bf16.msra.mxu0 %v351
    %516 = vmatprep.subr.bf16.mxu0 %v356
    %517 = vmatpush1.bf16.msra.mxu0 %v355
    %518 = vmatprep.subr.bf16.mxu0 %v360
    %519 = vmatpush1.bf16.msra.mxu0 %v359
    %520 = vmatprep.subr.bf16.mxu0 %v364
    %521 = vmatpush1.bf16.msra.mxu0 %v363
    %522 = vmatprep.subr.bf16.mxu0 %v368
    %523 = vmatpush1.bf16.msra.mxu0 %v367
    %524 = vmatprep.subr.bf16.mxu0 %v372
    %525 = vmatpush1.bf16.msra.mxu0 %v371
    %526 = vmatprep.subr.bf16.mxu0 %v376
    %527 = vmatpush1.bf16.msra.mxu0 %v375
    %528 = vmatprep.subr.bf16.mxu0 %v380
    %529 = vmatpush1.bf16.msra.mxu0 %v379
    %530 = vmatprep.subr.bf16.mxu0 %v384
    %531 = vmatpush1.bf16.msra.mxu0 %v383
    %532 = vmatprep.subr.bf16.mxu0 %v388
    %533 = vmatpush1.bf16.msra.mxu0 %v387
    %534 = vmatprep.subr.bf16.mxu0 %v392
    %535 = vmatpush1.bf16.msra.mxu0 %v391
    %536 = vmatprep.subr.bf16.mxu0 %v396
    %537 = vmatpush1.bf16.msra.mxu0 %v395
    %538 = vmatprep.subr.bf16.mxu0 %v400
    %539 = vmatpush1.bf16.msra.mxu0 %v399
    %540 = vmatprep.subr.bf16.mxu0 %v404
    %541 = vmatpush1.bf16.msra.mxu0 %v403
    %542 = vmatprep.mubr.bf16.mxu0 %v146
    %543 = vmatmul.mubr.bf16.gmra.mrb[0].mxu0 %v145
    %v544 = vpop.f32.mrb[0].mxu0
    %v545 = vadd.f32 0.0, %v544
    %v546 = vpop.f32.mrb[0].mxu0
    %v547 = vadd.f32 0.0, %v546
    %v548 = vpop.f32.mrb[0].mxu0
    %v549 = vpop.f32.mrb[0].mxu0
    %550 = vdwg.mxu0
    %v551 = vrot.slane %v504, 4
    %v552 = vadd.f32 %v504, %v551
    %v553 = vrot.slane %v552, 2
    %v554 = vadd.f32 %v552, %v553
    %v555 = vrot.slane %v554, 1
    %v556 = vadd.f32 %v554, %v555
    %v557 = vrot.slane %v506, 4
    %v558 = vadd.f32 %v506, %v557
    %v559 = vrot.slane %v558, 2
    %v560 = vadd.f32 %v558, %v559
    %v561 = vrot.slane %v560, 1
    %v562 = vadd.f32 %v560, %v561
    %v563 = vrot.slane %v545, 4
    %v564 = vadd.f32 %v545, %v563
    %v565 = vrot.slane %v564, 2
    %v566 = vadd.f32 %v564, %v565
    %v567 = vrot.slane %v566, 1
    %v568 = vadd.f32 %v566, %v567
    %v569 = vrot.slane %v547, 4
    %v570 = vadd.f32 %v547, %v569
    %v571 = vrot.slane %v570, 2
    %v572 = vadd.f32 %v570, %v571
    %v573 = vrot.slane %v572, 1
    %v574 = vadd.f32 %v572, %v573
    %v575 = vrcp.pop 8.0
    %v576 = vmul.f32 %v556, %v575
    %v577 = vmul.f32 %v562, %v575
    %v578 = vmul.f32 %v568, %v575
    %v579 = vmul.f32 %v574, %v575
    %v580 = vsub.f32 %v504, %v576
    %v581 = vsub.f32 %v506, %v577
    %v582 = vsub.f32 %v545, %v578
    %v583 = vsub.f32 %v547, %v579
    %v584 = vmul.f32 %v580, %v580
    %v585 = vmul.f32 %v581, %v581
    %v586 = vmul.f32 %v582, %v582
    %v587 = vmul.f32 %v583, %v583
    %v588 = vrot.slane %v584, 4
    %v589 = vadd.f32 %v584, %v588
    %v590 = vrot.slane %v589, 2
    %v591 = vadd.f32 %v589, %v590
    %v592 = vrot.slane %v591, 1
    %v593 = vadd.f32 %v591, %v592
    %v594 = vrot.slane %v585, 4
    %v595 = vadd.f32 %v585, %v594
    %v596 = vrot.slane %v595, 2
    %v597 = vadd.f32 %v595, %v596
    %v598 = vrot.slane %v597, 1
    %v599 = vadd.f32 %v597, %v598
    %v600 = vrot.slane %v586, 4
    %v601 = vadd.f32 %v586, %v600
    %v602 = vrot.slane %v601, 2
    %v603 = vadd.f32 %v601, %v602
    %v604 = vrot.slane %v603, 1
    %v605 = vadd.f32 %v603, %v604
    %v606 = vrot.slane %v587, 4
    %v607 = vadd.f32 %v587, %v606
    %v608 = vrot.slane %v607, 2
    %v609 = vadd.f32 %v607, %v608
    %v610 = vrot.slane %v609, 1
    %v611 = vadd.f32 %v609, %v610
    %v612 = vmul.f32 %v593, %v575
    %v613 = vmul.f32 %v599, %v575
    %v614 = vmul.f32 %v605, %v575
    %v615 = vmul.f32 %v611, %v575
    %v616 = vadd.f32 %v612, 1e-05
    %v617 = vadd.f32 %v613, 1e-05
    %v618 = vadd.f32 %v614, 1e-05
    %v619 = vadd.f32 %v615, 1e-05
    %v620 = vrsqrt.pop %v616
    %v621 = vrsqrt.pop %v617
    %v622 = vrsqrt.pop %v618
    %v623 = vrsqrt.pop %v619
    %v624 = vmul.f32 %v580, %v620
    %v625 = vmul.f32 %v581, %v621
    %v626 = vmul.f32 %v582, %v622
    %v627 = vmul.f32 %v583, %v623
    %v628 = vmul.f32 %v624, 0.5
    %v629 = vmul.f32 %v625, 0.5
    %v630 = vmul.f32 %v626, 0.5
    %v631 = vmul.f32 %v627, 0.5
    %v632 = vmul.f32 %v624, 0.70710677
    %v633 = vmul.f32 %v625, 0.70710677
    %v634 = vmul.f32 %v626, 0.70710677
    %v635 = vmul.f32 %v627, 0.70710677
    %v636 = verf.f32.pop %v632
    %v637 = verf.f32.pop %v633
    %v638 = verf.f32.pop %v634
    %v639 = verf.f32.pop %v635
    %v640 = vadd.f32 %v636, 1.0
    %v641 = vadd.f32 %v637, 1.0
    %v642 = vadd.f32 %v638, 1.0
    %v643 = vadd.f32 %v639, 1.0
    %v644 = vmul.f32 %v628, %v640
    %v645 = vmul.f32 %v629, %v641
    %v646 = vmul.f32 %v630, %v642
    %v647 = vmul.f32 %v631, %v643
    %v648 = vpack.c.bf16 %v644, %v644
    %v649 = vpack.c.bf16 %v645, %v645
    %v650 = vpack.c.bf16 %v646, %v646
    %v651 = vpack.c.bf16 %v647, %v647
    %v652 = vld [vmem:[#allocation4] sm:$0xff]
    %v653 = vld [vmem:[#allocation4 + $0x8] sm:$0xff]
    %v654 = vld [vmem:[#allocation4 + $0x10] sm:$0xff]
    %v655 = vld [vmem:[#allocation4 + $0x18] sm:$0xff]
    %v656 = vld [vmem:[#allocation4 + $0x20] sm:$0xff]
    %v657 = vld [vmem:[#allocation4 + $0x28] sm:$0xff]
    %v658 = vld [vmem:[#allocation4 + $0x30] sm:$0xff]
    %v659 = vld [vmem:[#allocation4 + $0x38] sm:$0xff]
    %v660 = vld [vmem:[#allocation4 + $0x40] sm:$0xff]
    %v661 = vld [vmem:[#allocation4 + $0x48] sm:$0xff]
    %v662 = vld [vmem:[#allocation4 + $0x50] sm:$0xff]
    %v663 = vld [vmem:[#allocation4 + $0x58] sm:$0xff]
    %v664 = vld [vmem:[#allocation4 + $0x60] sm:$0xff]
    %v665 = vld [vmem:[#allocation4 + $0x68] sm:$0xff]
    %v666 = vld [vmem:[#allocation4 + $0x70] sm:$0xff]
    %v667 = vld [vmem:[#allocation4 + $0x78] sm:$0xff]
    %v668 = vld [vmem:[#allocation4 + $0x80] sm:$0xff]
    %v669 = vld [vmem:[#allocation4 + $0x88] sm:$0xff]
    %v670 = vld [vmem:[#allocation4 + $0x90] sm:$0xff]
    %v671 = vld [vmem:[#allocation4 + $0x98] sm:$0xff]
    %v672 = vld [vmem:[#allocation4 + $0xa0] sm:$0xff]
    %v673 = vld [vmem:[#allocation4 + $0xa8] sm:$0xff]
    %v674 = vld [vmem:[#allocation4 + $0xb0] sm:$0xff]
    %v675 = vld [vmem:[#allocation4 + $0xb8] sm:$0xff]
    %v676 = vld [vmem:[#allocation4 + $0xc0] sm:$0xff]
    %v677 = vld [vmem:[#allocation4 + $0xc8] sm:$0xff]
    %v678 = vld [vmem:[#allocation4 + $0xd0] sm:$0xff]
    %v679 = vld [vmem:[#allocation4 + $0xd8] sm:$0xff]
    %v680 = vld [vmem:[#allocation4 + $0xe0] sm:$0xff]
    %v681 = vld [vmem:[#allocation4 + $0xe8] sm:$0xff]
    %v682 = vld [vmem:[#allocation4 + $0xf0] sm:$0xff]
    %v683 = vld [vmem:[#allocation4 + $0xf8] sm:$0xff]
    %v684 = vld [vmem:[#allocation4 + $0x100] sm:$0xff]
    %v685 = vld [vmem:[#allocation4 + $0x108] sm:$0xff]
    %v686 = vld [vmem:[#allocation4 + $0x110] sm:$0xff]
    %v687 = vld [vmem:[#allocation4 + $0x118] sm:$0xff]
    %v688 = vld [vmem:[#allocation4 + $0x120] sm:$0xff]
    %v689 = vld [vmem:[#allocation4 + $0x128] sm:$0xff]
    %v690 = vld [vmem:[#allocation4 + $0x130] sm:$0xff]
    %v691 = vld [vmem:[#allocation4 + $0x138] sm:$0xff]
    %v692 = vld [vmem:[#allocation4 + $0x140] sm:$0xff]
    %v693 = vld [vmem:[#allocation4 + $0x148] sm:$0xff]
    %v694 = vld [vmem:[#allocation4 + $0x150] sm:$0xff]
    %v695 = vld [vmem:[#allocation4 + $0x158] sm:$0xff]
    %v696 = vld [vmem:[#allocation4 + $0x160] sm:$0xff]
    %v697 = vld [vmem:[#allocation4 + $0x168] sm:$0xff]
    %v698 = vld [vmem:[#allocation4 + $0x170] sm:$0xff]
    %v699 = vld [vmem:[#allocation4 + $0x178] sm:$0xff]
    %v700 = vld [vmem:[#allocation4 + $0x180] sm:$0xff]
    %v701 = vld [vmem:[#allocation4 + $0x188] sm:$0xff]
    %v702 = vld [vmem:[#allocation4 + $0x190] sm:$0xff]
    %v703 = vld [vmem:[#allocation4 + $0x198] sm:$0xff]
    %v704 = vld [vmem:[#allocation4 + $0x1a0] sm:$0xff]
    %v705 = vld [vmem:[#allocation4 + $0x1a8] sm:$0xff]
    %v706 = vld [vmem:[#allocation4 + $0x1b0] sm:$0xff]
    %v707 = vld [vmem:[#allocation4 + $0x1b8] sm:$0xff]
    %v708 = vld [vmem:[#allocation4 + $0x1c0] sm:$0xff]
    %v709 = vld [vmem:[#allocation4 + $0x1c8] sm:$0xff]
    %v710 = vld [vmem:[#allocation4 + $0x1d0] sm:$0xff]
    %v711 = vld [vmem:[#allocation4 + $0x1d8] sm:$0xff]
    %v712 = vld [vmem:[#allocation4 + $0x1e0] sm:$0xff]
    %v713 = vld [vmem:[#allocation4 + $0x1e8] sm:$0xff]
    %v714 = vld [vmem:[#allocation4 + $0x1f0] sm:$0xff]
    %v715 = vld [vmem:[#allocation4 + $0x1f8] sm:$0xff]
    %v716 = vld [vmem:[#allocation4 + $0x200] sm:$0xff]
    %v717 = vld [vmem:[#allocation4 + $0x208] sm:$0xff]
    %v718 = vld [vmem:[#allocation4 + $0x210] sm:$0xff]
    %v719 = vld [vmem:[#allocation4 + $0x218] sm:$0xff]
    %v720 = vld [vmem:[#allocation4 + $0x220] sm:$0xff]
    %v721 = vld [vmem:[#allocation4 + $0x228] sm:$0xff]
    %v722 = vld [vmem:[#allocation4 + $0x230] sm:$0xff]
    %v723 = vld [vmem:[#allocation4 + $0x238] sm:$0xff]
    %v724 = vld [vmem:[#allocation4 + $0x240] sm:$0xff]
    %v725 = vld [vmem:[#allocation4 + $0x248] sm:$0xff]
    %v726 = vld [vmem:[#allocation4 + $0x250] sm:$0xff]
    %v727 = vld [vmem:[#allocation4 + $0x258] sm:$0xff]
    %v728 = vld [vmem:[#allocation4 + $0x260] sm:$0xff]
    %v729 = vld [vmem:[#allocation4 + $0x268] sm:$0xff]
    %v730 = vld [vmem:[#allocation4 + $0x270] sm:$0xff]
    %v731 = vld [vmem:[#allocation4 + $0x278] sm:$0xff]
    %v732 = vld [vmem:[#allocation4 + $0x280] sm:$0xff]
    %v733 = vld [vmem:[#allocation4 + $0x288] sm:$0xff]
    %v734 = vld [vmem:[#allocation4 + $0x290] sm:$0xff]
    %v735 = vld [vmem:[#allocation4 + $0x298] sm:$0xff]
    %v736 = vld [vmem:[#allocation4 + $0x2a0] sm:$0xff]
    %v737 = vld [vmem:[#allocation4 + $0x2a8] sm:$0xff]
    %v738 = vld [vmem:[#allocation4 + $0x2b0] sm:$0xff]
    %v739 = vld [vmem:[#allocation4 + $0x2b8] sm:$0xff]
    %v740 = vld [vmem:[#allocation4 + $0x2c0] sm:$0xff]
    %v741 = vld [vmem:[#allocation4 + $0x2c8] sm:$0xff]
    %v742 = vld [vmem:[#allocation4 + $0x2d0] sm:$0xff]
    %v743 = vld [vmem:[#allocation4 + $0x2d8] sm:$0xff]
    %v744 = vld [vmem:[#allocation4 + $0x2e0] sm:$0xff]
    %v745 = vld [vmem:[#allocation4 + $0x2e8] sm:$0xff]
    %v746 = vld [vmem:[#allocation4 + $0x2f0] sm:$0xff]
    %v747 = vld [vmem:[#allocation4 + $0x2f8] sm:$0xff]
    %v748 = vld [vmem:[#allocation4 + $0x300] sm:$0xff]
    %v749 = vld [vmem:[#allocation4 + $0x308] sm:$0xff]
    %v750 = vld [vmem:[#allocation4 + $0x310] sm:$0xff]
    %v751 = vld [vmem:[#allocation4 + $0x318] sm:$0xff]
    %v752 = vld [vmem:[#allocation4 + $0x320] sm:$0xff]
    %v753 = vld [vmem:[#allocation4 + $0x328] sm:$0xff]
    %v754 = vld [vmem:[#allocation4 + $0x330] sm:$0xff]
    %v755 = vld [vmem:[#allocation4 + $0x338] sm:$0xff]
    %v756 = vld [vmem:[#allocation4 + $0x340] sm:$0xff]
    %v757 = vld [vmem:[#allocation4 + $0x348] sm:$0xff]
    %v758 = vld [vmem:[#allocation4 + $0x350] sm:$0xff]
    %v759 = vld [vmem:[#allocation4 + $0x358] sm:$0xff]
    %v760 = vld [vmem:[#allocation4 + $0x360] sm:$0xff]
    %v761 = vld [vmem:[#allocation4 + $0x368] sm:$0xff]
    %v762 = vld [vmem:[#allocation4 + $0x370] sm:$0xff]
    %v763 = vld [vmem:[#allocation4 + $0x378] sm:$0xff]
    %v764 = vld [vmem:[#allocation4 + $0x380] sm:$0xff]
    %v765 = vld [vmem:[#allocation4 + $0x388] sm:$0xff]
    %v766 = vld [vmem:[#allocation4 + $0x390] sm:$0xff]
    %v767 = vld [vmem:[#allocation4 + $0x398] sm:$0xff]
    %v768 = vld [vmem:[#allocation4 + $0x3a0] sm:$0xff]
    %v769 = vld [vmem:[#allocation4 + $0x3a8] sm:$0xff]
    %v770 = vld [vmem:[#allocation4 + $0x3b0] sm:$0xff]
    %v771 = vld [vmem:[#allocation4 + $0x3b8] sm:$0xff]
    %v772 = vld [vmem:[#allocation4 + $0x3c0] sm:$0xff]
    %v773 = vld [vmem:[#allocation4 + $0x3c8] sm:$0xff]
    %v774 = vld [vmem:[#allocation4 + $0x3d0] sm:$0xff]
    %v775 = vld [vmem:[#allocation4 + $0x3d8] sm:$0xff]
    %v776 = vld [vmem:[#allocation4 + $0x3e0] sm:$0xff]
    %v777 = vld [vmem:[#allocation4 + $0x3e8] sm:$0xff]
    %v778 = vld [vmem:[#allocation4 + $0x3f0] sm:$0xff]
    %v779 = vld [vmem:[#allocation4 + $0x3f8] sm:$0xff]
    %v908 = vunpack.c.l.b16 %v652
    %v909 = vunpack.c.h.b16 %v652
    %v910 = vunpack.c.l.b16 %v653
    %v911 = vunpack.c.h.b16 %v653
    %v912 = vunpack.c.l.b16 %v654
    %v913 = vunpack.c.h.b16 %v654
    %v914 = vunpack.c.l.b16 %v655
    %v915 = vunpack.c.h.b16 %v655
    %v916 = vunpack.c.l.b16 %v656
    %v917 = vunpack.c.h.b16 %v656
    %v918 = vunpack.c.l.b16 %v657
    %v919 = vunpack.c.h.b16 %v657
    %v920 = vunpack.c.l.b16 %v658
    %v921 = vunpack.c.h.b16 %v658
    %v922 = vunpack.c.l.b16 %v659
    %v923 = vunpack.c.h.b16 %v659
    %v924 = vunpack.c.l.b16 %v660
    %v925 = vunpack.c.h.b16 %v660
    %v926 = vunpack.c.l.b16 %v661
    %v927 = vunpack.c.h.b16 %v661
    %v928 = vunpack.c.l.b16 %v662
    %v929 = vunpack.c.h.b16 %v662
    %v930 = vunpack.c.l.b16 %v663
    %v931 = vunpack.c.h.b16 %v663
    %v932 = vunpack.c.l.b16 %v664
    %v933 = vunpack.c.h.b16 %v664
    %v934 = vunpack.c.l.b16 %v665
    %v935 = vunpack.c.h.b16 %v665
    %v936 = vunpack.c.l.b16 %v666
    %v937 = vunpack.c.h.b16 %v666
    %v938 = vunpack.c.l.b16 %v667
    %v939 = vunpack.c.h.b16 %v667
    %v940 = vunpack.c.l.b16 %v668
    %v941 = vunpack.c.h.b16 %v668
    %v942 = vunpack.c.l.b16 %v669
    %v943 = vunpack.c.h.b16 %v669
    %v944 = vunpack.c.l.b16 %v670
    %v945 = vunpack.c.h.b16 %v670
    %v946 = vunpack.c.l.b16 %v671
    %v947 = vunpack.c.h.b16 %v671
    %v948 = vunpack.c.l.b16 %v672
    %v949 = vunpack.c.h.b16 %v672
    %v950 = vunpack.c.l.b16 %v673
    %v951 = vunpack.c.h.b16 %v673
    %v952 = vunpack.c.l.b16 %v674
    %v953 = vunpack.c.h.b16 %v674
    %v954 = vunpack.c.l.b16 %v675
    %v955 = vunpack.c.h.b16 %v675
    %v956 = vunpack.c.l.b16 %v676
    %v957 = vunpack.c.h.b16 %v676
    %v958 = vunpack.c.l.b16 %v677
    %v959 = vunpack.c.h.b16 %v677
    %v960 = vunpack.c.l.b16 %v678
    %v961 = vunpack.c.h.b16 %v678
    %v962 = vunpack.c.l.b16 %v679
    %v963 = vunpack.c.h.b16 %v679
    %v964 = vunpack.c.l.b16 %v680
    %v965 = vunpack.c.h.b16 %v680
    %v966 = vunpack.c.l.b16 %v681
    %v967 = vunpack.c.h.b16 %v681
    %v968 = vunpack.c.l.b16 %v682
    %v969 = vunpack.c.h.b16 %v682
    %v970 = vunpack.c.l.b16 %v683
    %v971 = vunpack.c.h.b16 %v683
    %v972 = vunpack.c.l.b16 %v684
    %v973 = vunpack.c.h.b16 %v684
    %v974 = vunpack.c.l.b16 %v685
    %v975 = vunpack.c.h.b16 %v685
    %v976 = vunpack.c.l.b16 %v686
    %v977 = vunpack.c.h.b16 %v686
    %v978 = vunpack.c.l.b16 %v687
    %v979 = vunpack.c.h.b16 %v687
    %v980 = vunpack.c.l.b16 %v688
    %v981 = vunpack.c.h.b16 %v688
    %v982 = vunpack.c.l.b16 %v689
    %v983 = vunpack.c.h.b16 %v689
    %v984 = vunpack.c.l.b16 %v690
    %v985 = vunpack.c.h.b16 %v690
    %v986 = vunpack.c.l.b16 %v691
    %v987 = vunpack.c.h.b16 %v691
    %v988 = vunpack.c.l.b16 %v692
    %v989 = vunpack.c.h.b16 %v692
    %v990 = vunpack.c.l.b16 %v693
    %v991 = vunpack.c.h.b16 %v693
    %v992 = vunpack.c.l.b16 %v694
    %v993 = vunpack.c.h.b16 %v694
    %v994 = vunpack.c.l.b16 %v695
    %v995 = vunpack.c.h.b16 %v695
    %v996 = vunpack.c.l.b16 %v696
    %v997 = vunpack.c.h.b16 %v696
    %v998 = vunpack.c.l.b16 %v697
    %v999 = vunpack.c.h.b16 %v697
    %v1000 = vunpack.c.l.b16 %v698
    %v1001 = vunpack.c.h.b16 %v698
    %v1002 = vunpack.c.l.b16 %v699
    %v1003 = vunpack.c.h.b16 %v699
    %v1004 = vunpack.c.l.b16 %v700
    %v1005 = vunpack.c.h.b16 %v700
    %v1006 = vunpack.c.l.b16 %v701
    %v1007 = vunpack.c.h.b16 %v701
    %v1008 = vunpack.c.l.b16 %v702
    %v1009 = vunpack.c.h.b16 %v702
    %v1010 = vunpack.c.l.b16 %v703
    %v1011 = vunpack.c.h.b16 %v703
    %v1012 = vunpack.c.l.b16 %v704
    %v1013 = vunpack.c.h.b16 %v704
    %v1014 = vunpack.c.l.b16 %v705
    %v1015 = vunpack.c.h.b16 %v705
    %v1016 = vunpack.c.l.b16 %v706
    %v1017 = vunpack.c.h.b16 %v706
    %v1018 = vunpack.c.l.b16 %v707
    %v1019 = vunpack.c.h.b16 %v707
    %v1020 = vunpack.c.l.b16 %v708
    %v1021 = vunpack.c.h.b16 %v708
    %v1022 = vunpack.c.l.b16 %v709
    %v1023 = vunpack.c.h.b16 %v709
    %v1024 = vunpack.c.l.b16 %v710
    %v1025 = vunpack.c.h.b16 %v710
    %v1026 = vunpack.c.l.b16 %v711
    %v1027 = vunpack.c.h.b16 %v711
    %v1028 = vunpack.c.l.b16 %v712
    %v1029 = vunpack.c.h.b16 %v712
    %v1030 = vunpack.c.l.b16 %v713
    %v1031 = vunpack.c.h.b16 %v713
    %v1032 = vunpack.c.l.b16 %v714
    %v1033 = vunpack.c.h.b16 %v714
    %v1034 = vunpack.c.l.b16 %v715
    %v1035 = vunpack.c.h.b16 %v715
    %v1036 = vunpack.c.l.b16 %v716
    %v1037 = vunpack.c.h.b16 %v716
    %v1038 = vunpack.c.l.b16 %v717
    %v1039 = vunpack.c.h.b16 %v717
    %v1040 = vunpack.c.l.b16 %v718
    %v1041 = vunpack.c.h.b16 %v718
    %v1042 = vunpack.c.l.b16 %v719
    %v1043 = vunpack.c.h.b16 %v719
    %v1044 = vunpack.c.l.b16 %v720
    %v1045 = vunpack.c.h.b16 %v720
    %v1046 = vunpack.c.l.b16 %v721
    %v1047 = vunpack.c.h.b16 %v721
    %v1048 = vunpack.c.l.b16 %v722
    %v1049 = vunpack.c.h.b16 %v722
    %v1050 = vunpack.c.l.b16 %v723
    %v1051 = vunpack.c.h.b16 %v723
    %v1052 = vunpack.c.l.b16 %v724
    %v1053 = vunpack.c.h.b16 %v724
    %v1054 = vunpack.c.l.b16 %v725
    %v1055 = vunpack.c.h.b16 %v725
    %v1056 = vunpack.c.l.b16 %v726
    %v1057 = vunpack.c.h.b16 %v726
    %v1058 = vunpack.c.l.b16 %v727
    %v1059 = vunpack.c.h.b16 %v727
    %v1060 = vunpack.c.l.b16 %v728
    %v1061 = vunpack.c.h.b16 %v728
    %v1062 = vunpack.c.l.b16 %v729
    %v1063 = vunpack.c.h.b16 %v729
    %v1064 = vunpack.c.l.b16 %v730
    %v1065 = vunpack.c.h.b16 %v730
    %v1066 = vunpack.c.l.b16 %v731
    %v1067 = vunpack.c.h.b16 %v731
    %v1068 = vunpack.c.l.b16 %v732
    %v1069 = vunpack.c.h.b16 %v732
    %v1070 = vunpack.c.l.b16 %v733
    %v1071 = vunpack.c.h.b16 %v733
    %v1072 = vunpack.c.l.b16 %v734
    %v1073 = vunpack.c.h.b16 %v734
    %v1074 = vunpack.c.l.b16 %v735
    %v1075 = vunpack.c.h.b16 %v735
    %v1076 = vunpack.c.l.b16 %v736
    %v1077 = vunpack.c.h.b16 %v736
    %v1078 = vunpack.c.l.b16 %v737
    %v1079 = vunpack.c.h.b16 %v737
    %v1080 = vunpack.c.l.b16 %v738
    %v1081 = vunpack.c.h.b16 %v738
    %v1082 = vunpack.c.l.b16 %v739
    %v1083 = vunpack.c.h.b16 %v739
    %v1084 = vunpack.c.l.b16 %v740
    %v1085 = vunpack.c.h.b16 %v740
    %v1086 = vunpack.c.l.b16 %v741
    %v1087 = vunpack.c.h.b16 %v741
    %v1088 = vunpack.c.l.b16 %v742
    %v1089 = vunpack.c.h.b16 %v742
    %v1090 = vunpack.c.l.b16 %v743
    %v1091 = vunpack.c.h.b16 %v743
    %v1092 = vunpack.c.l.b16 %v744
    %v1093 = vunpack.c.h.b16 %v744
    %v1094 = vunpack.c.l.b16 %v745
    %v1095 = vunpack.c.h.b16 %v745
    %v1096 = vunpack.c.l.b16 %v746
    %v1097 = vunpack.c.h.b16 %v746
    %v1098 = vunpack.c.l.b16 %v747
    %v1099 = vunpack.c.h.b16 %v747
    %v1100 = vunpack.c.l.b16 %v748
    %v1101 = vunpack.c.h.b16 %v748
    %v1102 = vunpack.c.l.b16 %v749
    %v1103 = vunpack.c.h.b16 %v749
    %v1104 = vunpack.c.l.b16 %v750
    %v1105 = vunpack.c.h.b16 %v750
    %v1106 = vunpack.c.l.b16 %v751
    %v1107 = vunpack.c.h.b16 %v751
    %v1108 = vunpack.c.l.b16 %v752
    %v1109 = vunpack.c.h.b16 %v752
    %v1110 = vunpack.c.l.b16 %v753
    %v1111 = vunpack.c.h.b16 %v753
    %v1112 = vunpack.c.l.b16 %v754
    %v1113 = vunpack.c.h.b16 %v754
    %v1114 = vunpack.c.l.b16 %v755
    %v1115 = vunpack.c.h.b16 %v755
    %v1116 = vunpack.c.l.b16 %v756
    %v1117 = vunpack.c.h.b16 %v756
    %v1118 = vunpack.c.l.b16 %v757
    %v1119 = vunpack.c.h.b16 %v757
    %v1120 = vunpack.c.l.b16 %v758
    %v1121 = vunpack.c.h.b16 %v758
    %v1122 = vunpack.c.l.b16 %v759
    %v1123 = vunpack.c.h.b16 %v759
    %v1124 = vunpack.c.l.b16 %v760
    %v1125 = vunpack.c.h.b16 %v760
    %v1126 = vunpack.c.l.b16 %v761
    %v1127 = vunpack.c.h.b16 %v761
    %v1128 = vunpack.c.l.b16 %v762
    %v1129 = vunpack.c.h.b16 %v762
    %v1130 = vunpack.c.l.b16 %v763
    %v1131 = vunpack.c.h.b16 %v763
    %v1132 = vunpack.c.l.b16 %v764
    %v1133 = vunpack.c.h.b16 %v764
    %v1134 = vunpack.c.l.b16 %v765
    %v1135 = vunpack.c.h.b16 %v765
    %v1136 = vunpack.c.l.b16 %v766
    %v1137 = vunpack.c.h.b16 %v766
    %v1138 = vunpack.c.l.b16 %v767
    %v1139 = vunpack.c.h.b16 %v767
    %v1140 = vunpack.c.l.b16 %v768
    %v1141 = vunpack.c.h.b16 %v768
    %v1142 = vunpack.c.l.b16 %v769
    %v1143 = vunpack.c.h.b16 %v769
    %v1144 = vunpack.c.l.b16 %v770
    %v1145 = vunpack.c.h.b16 %v770
    %v1146 = vunpack.c.l.b16 %v771
    %v1147 = vunpack.c.h.b16 %v771
    %v1148 = vunpack.c.l.b16 %v772
    %v1149 = vunpack.c.h.b16 %v772
    %v1150 = vunpack.c.l.b16 %v773
    %v1151 = vunpack.c.h.b16 %v773
    %v1152 = vunpack.c.l.b16 %v774
    %v1153 = vunpack.c.h.b16 %v774
    %v1154 = vunpack.c.l.b16 %v775
    %v1155 = vunpack.c.h.b16 %v775
    %v1156 = vunpack.c.l.b16 %v776
    %v1157 = vunpack.c.h.b16 %v776
    %v1158 = vunpack.c.l.b16 %v777
    %v1159 = vunpack.c.h.b16 %v777
    %v1160 = vunpack.c.l.b16 %v778
    %v1161 = vunpack.c.h.b16 %v778
    %v1162 = vunpack.c.l.b16 %v779
    %v1163 = vunpack.c.h.b16 %v779
    %v1164 = vpack.c.b16 %v912, %v908
    %v1165 = vpack.c.b16 %v913, %v909
    %v1166 = vpack.c.b16 %v914, %v910
    %v1167 = vpack.c.b16 %v915, %v911
    %v1168 = vpack.c.b16 %v920, %v916
    %v1169 = vpack.c.b16 %v921, %v917
    %v1170 = vpack.c.b16 %v922, %v918
    %v1171 = vpack.c.b16 %v923, %v919
    %v1172 = vpack.c.b16 %v928, %v924
    %v1173 = vpack.c.b16 %v929, %v925
    %v1174 = vpack.c.b16 %v930, %v926
    %v1175 = vpack.c.b16 %v931, %v927
    %v1176 = vpack.c.b16 %v936, %v932
    %v1177 = vpack.c.b16 %v937, %v933
    %v1178 = vpack.c.b16 %v938, %v934
    %v1179 = vpack.c.b16 %v939, %v935
    %v1180 = vpack.c.b16 %v944, %v940
    %v1181 = vpack.c.b16 %v945, %v941
    %v1182 = vpack.c.b16 %v946, %v942
    %v1183 = vpack.c.b16 %v947, %v943
    %v1184 = vpack.c.b16 %v952, %v948
    %v1185 = vpack.c.b16 %v953, %v949
    %v1186 = vpack.c.b16 %v954, %v950
    %v1187 = vpack.c.b16 %v955, %v951
    %v1188 = vpack.c.b16 %v960, %v956
    %v1189 = vpack.c.b16 %v961, %v957
    %v1190 = vpack.c.b16 %v962, %v958
    %v1191 = vpack.c.b16 %v963, %v959
    %v1192 = vpack.c.b16 %v968, %v964
    %v1193 = vpack.c.b16 %v969, %v965
    %v1194 = vpack.c.b16 %v970, %v966
    %v1195 = vpack.c.b16 %v971, %v967
    %v1196 = vpack.c.b16 %v976, %v972
    %v1197 = vpack.c.b16 %v977, %v973
    %v1198 = vpack.c.b16 %v978, %v974
    %v1199 = vpack.c.b16 %v979, %v975
    %v1200 = vpack.c.b16 %v984, %v980
    %v1201 = vpack.c.b16 %v985, %v981
    %v1202 = vpack.c.b16 %v986, %v982
    %v1203 = vpack.c.b16 %v987, %v983
    %v1204 = vpack.c.b16 %v992, %v988
    %v1205 = vpack.c.b16 %v993, %v989
    %v1206 = vpack.c.b16 %v994, %v990
    %v1207 = vpack.c.b16 %v995, %v991
    %v1208 = vpack.c.b16 %v1000, %v996
    %v1209 = vpack.c.b16 %v1001, %v997
    %v1210 = vpack.c.b16 %v1002, %v998
    %v1211 = vpack.c.b16 %v1003, %v999
    %v1212 = vpack.c.b16 %v1008, %v1004
    %v1213 = vpack.c.b16 %v1009, %v1005
    %v1214 = vpack.c.b16 %v1010, %v1006
    %v1215 = vpack.c.b16 %v1011, %v1007
    %v1216 = vpack.c.b16 %v1016, %v1012
    %v1217 = vpack.c.b16 %v1017, %v1013
    %v1218 = vpack.c.b16 %v1018, %v1014
    %v1219 = vpack.c.b16 %v1019, %v1015
    %v1220 = vpack.c.b16 %v1024, %v1020
    %v1221 = vpack.c.b16 %v1025, %v1021
    %v1222 = vpack.c.b16 %v1026, %v1022
    %v1223 = vpack.c.b16 %v1027, %v1023
    %v1224 = vpack.c.b16 %v1032, %v1028
    %v1225 = vpack.c.b16 %v1033, %v1029
    %v1226 = vpack.c.b16 %v1034, %v1030
    %v1227 = vpack.c.b16 %v1035, %v1031
    %v1228 = vpack.c.b16 %v1040, %v1036
    %v1229 = vpack.c.b16 %v1041, %v1037
    %v1230 = vpack.c.b16 %v1042, %v1038
    %v1231 = vpack.c.b16 %v1043, %v1039
    %v1232 = vpack.c.b16 %v1048, %v1044
    %v1233 = vpack.c.b16 %v1049, %v1045
    %v1234 = vpack.c.b16 %v1050, %v1046
    %v1235 = vpack.c.b16 %v1051, %v1047
    %v1236 = vpack.c.b16 %v1056, %v1052
    %v1237 = vpack.c.b16 %v1057, %v1053
    %v1238 = vpack.c.b16 %v1058, %v1054
    %v1239 = vpack.c.b16 %v1059, %v1055
    %v1240 = vpack.c.b16 %v1064, %v1060
    %v1241 = vpack.c.b16 %v1065, %v1061
    %v1242 = vpack.c.b16 %v1066, %v1062
    %v1243 = vpack.c.b16 %v1067, %v1063
    %v1244 = vpack.c.b16 %v1072, %v1068
    %v1245 = vpack.c.b16 %v1073, %v1069
    %v1246 = vpack.c.b16 %v1074, %v1070
    %v1247 = vpack.c.b16 %v1075, %v1071
    %v1248 = vpack.c.b16 %v1080, %v1076
    %v1249 = vpack.c.b16 %v1081, %v1077
    %v1250 = vpack.c.b16 %v1082, %v1078
    %v1251 = vpack.c.b16 %v1083, %v1079
    %v1252 = vpack.c.b16 %v1088, %v1084
    %v1253 = vpack.c.b16 %v1089, %v1085
    %v1254 = vpack.c.b16 %v1090, %v1086
    %v1255 = vpack.c.b16 %v1091, %v1087
    %v1256 = vpack.c.b16 %v1096, %v1092
    %v1257 = vpack.c.b16 %v1097, %v1093
    %v1258 = vpack.c.b16 %v1098, %v1094
    %v1259 = vpack.c.b16 %v1099, %v1095
    %v1260 = vpack.c.b16 %v1104, %v1100
    %v1261 = vpack.c.b16 %v1105, %v1101
    %v1262 = vpack.c.b16 %v1106, %v1102
    %v1263 = vpack.c.b16 %v1107, %v1103
    %v1264 = vpack.c.b16 %v1112, %v1108
    %v1265 = vpack.c.b16 %v1113, %v1109
    %v1266 = vpack.c.b16 %v1114, %v1110
    %v1267 = vpack.c.b16 %v1115, %v1111
    %v1268 = vpack.c.b16 %v1120, %v1116
    %v1269 = vpack.c.b16 %v1121, %v1117
    %v1270 = vpack.c.b16 %v1122, %v1118
    %v1271 = vpack.c.b16 %v1123, %v1119
    %v1272 = vpack.c.b16 %v1128, %v1124
    %v1273 = vpack.c.b16 %v1129, %v1125
    %v1274 = vpack.c.b16 %v1130, %v1126
    %v1275 = vpack.c.b16 %v1131, %v1127
    %v1276 = vpack.c.b16 %v1136, %v1132
    %v1277 = vpack.c.b16 %v1137, %v1133
    %v1278 = vpack.c.b16 %v1138, %v1134
    %v1279 = vpack.c.b16 %v1139, %v1135
    %v1280 = vpack.c.b16 %v1144, %v1140
    %v1281 = vpack.c.b16 %v1145, %v1141
    %v1282 = vpack.c.b16 %v1146, %v1142
    %v1283 = vpack.c.b16 %v1147, %v1143
    %v1284 = vpack.c.b16 %v1152, %v1148
    %v1285 = vpack.c.b16 %v1153, %v1149
    %v1286 = vpack.c.b16 %v1154, %v1150
    %v1287 = vpack.c.b16 %v1155, %v1151
    %v1288 = vpack.c.b16 %v1160, %v1156
    %v1289 = vpack.c.b16 %v1161, %v1157
    %v1290 = vpack.c.b16 %v1162, %v1158
    %v1291 = vpack.c.b16 %v1163, %v1159
    %1420 = vmatprep.subr.bf16.mxu0 %v1165
    %1421 = vmatpush1.bf16.msra.mxu0 %v1164
    %1422 = vmatprep.subr.bf16.mxu0 %v1169
    %1423 = vmatpush1.bf16.msra.mxu0 %v1168
    %1424 = vmatprep.subr.bf16.mxu0 %v1173
    %1425 = vmatpush1.bf16.msra.mxu0 %v1172
    %1426 = vmatprep.subr.bf16.mxu0 %v1177
    %1427 = vmatpush1.bf16.msra.mxu0 %v1176
    %1428 = vmatprep.subr.bf16.mxu0 %v1181
    %1429 = vmatpush1.bf16.msra.mxu0 %v1180
    %1430 = vmatprep.subr.bf16.mxu0 %v1185
    %1431 = vmatpush1.bf16.msra.mxu0 %v1184
    %1432 = vmatprep.subr.bf16.mxu0 %v1189
    %1433 = vmatpush1.bf16.msra.mxu0 %v1188
    %1434 = vmatprep.subr.bf16.mxu0 %v1193
    %1435 = vmatpush1.bf16.msra.mxu0 %v1192
    %1436 = vmatprep.subr.bf16.mxu0 %v1197
    %1437 = vmatpush1.bf16.msra.mxu0 %v1196
    %1438 = vmatprep.subr.bf16.mxu0 %v1201
    %1439 = vmatpush1.bf16.msra.mxu0 %v1200
    %1440 = vmatprep.subr.bf16.mxu0 %v1205
    %1441 = vmatpush1.bf16.msra.mxu0 %v1204
    %1442 = vmatprep.subr.bf16.mxu0 %v1209
    %1443 = vmatpush1.bf16.msra.mxu0 %v1208
    %1444 = vmatprep.subr.bf16.mxu0 %v1213
    %1445 = vmatpush1.bf16.msra.mxu0 %v1212
    %1446 = vmatprep.subr.bf16.mxu0 %v1217
    %1447 = vmatpush1.bf16.msra.mxu0 %v1216
    %1448 = vmatprep.subr.bf16.mxu0 %v1221
    %1449 = vmatpush1.bf16.msra.mxu0 %v1220
    %1450 = vmatprep.subr.bf16.mxu0 %v1225
    %1451 = vmatpush1.bf16.msra.mxu0 %v1224
    %1452 = vmatprep.mubr.bf16.mxu0 %v649
    %1453 = vmatmul.mubr.bf16.gmra.mrb[0].mxu0 %v648
    %v1454 = vpop.f32.mrb[0].mxu0
    %v1455 = vadd.f32 0.0, %v1454
    %v1456 = vpop.f32.mrb[0].mxu0
    %v1457 = vadd.f32 0.0, %v1456
    %v1458 = vpop.f32.mrb[0].mxu0
    %v1459 = vpop.f32.mrb[0].mxu0
    %1460 = vdwg.mxu0
    %1461 = vmatprep.subr.bf16.mxu0 %v1229
    %1462 = vmatpush1.bf16.msra.mxu0 %v1228
    %1463 = vmatprep.subr.bf16.mxu0 %v1233
    %1464 = vmatpush1.bf16.msra.mxu0 %v1232
    %1465 = vmatprep.subr.bf16.mxu0 %v1237
    %1466 = vmatpush1.bf16.msra.mxu0 %v1236
    %1467 = vmatprep.subr.bf16.mxu0 %v1241
    %1468 = vmatpush1.bf16.msra.mxu0 %v1240
    %1469 = vmatprep.subr.bf16.mxu0 %v1245
    %1470 = vmatpush1.bf16.msra.mxu0 %v1244
    %1471 = vmatprep.subr.bf16.mxu0 %v1249
    %1472 = vmatpush1.bf16.msra.mxu0 %v1248
    %1473 = vmatprep.subr.bf16.mxu0 %v1253
    %1474 = vmatpush1.bf16.msra.mxu0 %v1252
    %1475 = vmatprep.subr.bf16.mxu0 %v1257
    %1476 = vmatpush1.bf16.msra.mxu0 %v1256
    %1477 = vmatprep.subr.bf16.mxu0 %v1261
    %1478 = vmatpush1.bf16.msra.mxu0 %v1260
    %1479 = vmatprep.subr.bf16.mxu0 %v1265
    %1480 = vmatpush1.bf16.msra.mxu0 %v1264
    %1481 = vmatprep.subr.bf16.mxu0 %v1269
    %1482 = vmatpush1.bf16.msra.mxu0 %v1268
    %1483 = vmatprep.subr.bf16.mxu0 %v1273
    %1484 = vmatpush1.bf16.msra.mxu0 %v1272
    %1485 = vmatprep.subr.bf16.mxu0 %v1277
    %1486 = vmatpush1.bf16.msra.mxu0 %v1276
    %1487 = vmatprep.subr.bf16.mxu0 %v1281
    %1488 = vmatpush1.bf16.msra.mxu0 %v1280
    %1489 = vmatprep.subr.bf16.mxu0 %v1285
    %1490 = vmatpush1.bf16.msra.mxu0 %v1284
    %1491 = vmatprep.subr.bf16.mxu0 %v1289
    %1492 = vmatpush1.bf16.msra.mxu0 %v1288
    %1493 = vmatprep.mubr.bf16.mxu0 %v651
    %1494 = vmatmul.mubr.bf16.gmra.mrb[0].mxu0 %v650
    %v1495 = vpop.f32.mrb[0].mxu0
    %v1496 = vadd.f32 %v1455, %v1495
    %v1497 = vpop.f32.mrb[0].mxu0
    %v1498 = vadd.f32 %v1457, %v1497
    %v1499 = vpop.f32.mrb[0].mxu0
    %v1500 = vpop.f32.mrb[0].mxu0
    %1501 = vdwg.mxu0
    %1502 = vmatprep.subr.bf16.mxu0 %v1167
    %1503 = vmatpush1.bf16.msra.mxu0 %v1166
    %1504 = vmatprep.subr.bf16.mxu0 %v1171
    %1505 = vmatpush1.bf16.msra.mxu0 %v1170
    %1506 = vmatprep.subr.bf16.mxu0 %v1175
    %1507 = vmatpush1.bf16.msra.mxu0 %v1174
    %1508 = vmatprep.subr.bf16.mxu0 %v1179
    %1509 = vmatpush1.bf16.msra.mxu0 %v1178
    %1510 = vmatprep.subr.bf16.mxu0 %v1183
    %1511 = vmatpush1.bf16.msra.mxu0 %v1182
    %1512 = vmatprep.subr.bf16.mxu0 %v1187
    %1513 = vmatpush1.bf16.msra.mxu0 %v1186
    %1514 = vmatprep.subr.bf16.mxu0 %v1191
    %1515 = vmatpush1.bf16.msra.mxu0 %v1190
    %1516 = vmatprep.subr.bf16.mxu0 %v1195
    %1517 = vmatpush1.bf16.msra.mxu0 %v1194
    %1518 = vmatprep.subr.bf16.mxu0 %v1199
    %1519 = vmatpush1.bf16.msra.mxu0 %v1198
    %1520 = vmatprep.subr.bf16.mxu0 %v1203
    %1521 = vmatpush1.bf16.msra.mxu0 %v1202
    %1522 = vmatprep.subr.bf16.mxu0 %v1207
    %1523 = vmatpush1.bf16.msra.mxu0 %v1206
    %1524 = vmatprep.subr.bf16.mxu0 %v1211
    %1525 = vmatpush1.bf16.msra.mxu0 %v1210
    %1526 = vmatprep.subr.bf16.mxu0 %v1215
    %1527 = vmatpush1.bf16.msra.mxu0 %v1214
    %1528 = vmatprep.subr.bf16.mxu0 %v1219
    %1529 = vmatpush1.bf16.msra.mxu0 %v1218
    %1530 = vmatprep.subr.bf16.mxu0 %v1223
    %1531 = vmatpush1.bf16.msra.mxu0 %v1222
    %1532 = vmatprep.subr.bf16.mxu0 %v1227
    %1533 = vmatpush1.bf16.msra.mxu0 %v1226
    %1534 = vmatprep.mubr.bf16.mxu0 %v649
    %1535 = vmatmul.mubr.bf16.gmra.mrb[0].mxu0 %v648
    %v1536 = vpop.f32.mrb[0].mxu0
    %v1537 = vadd.f32 0.0, %v1536
    %v1538 = vpop.f32.mrb[0].mxu0
    %v1539 = vadd.f32 0.0, %v1538
    %v1540 = vpop.f32.mrb[0].mxu0
    %v1541 = vpop.f32.mrb[0].mxu0
    %1542 = vdwg.mxu0
    %1543 = vmatprep.subr.bf16.mxu0 %v1231
    %1544 = vmatpush1.bf16.msra.mxu0 %v1230
    %1545 = vmatprep.subr.bf16.mxu0 %v1235
    %1546 = vmatpush1.bf16.msra.mxu0 %v1234
    %1547 = vmatprep.subr.bf16.mxu0 %v1239
    %1548 = vmatpush1.bf16.msra.mxu0 %v1238
    %1549 = vmatprep.subr.bf16.mxu0 %v1243
    %1550 = vmatpush1.bf16.msra.mxu0 %v1242
    %1551 = vmatprep.subr.bf16.mxu0 %v1247
    %1552 = vmatpush1.bf16.msra.mxu0 %v1246
    %1553 = vmatprep.subr.bf16.mxu0 %v1251
    %1554 = vmatpush1.bf16.msra.mxu0 %v1250
    %1555 = vmatprep.subr.bf16.mxu0 %v1255
    %1556 = vmatpush1.bf16.msra.mxu0 %v1254
    %1557 = vmatprep.subr.bf16.mxu0 %v1259
    %1558 = vmatpush1.bf16.msra.mxu0 %v1258
    %1559 = vmatprep.subr.bf16.mxu0 %v1263
    %1560 = vmatpush1.bf16.msra.mxu0 %v1262
    %1561 = vmatprep.subr.bf16.mxu0 %v1267
    %1562 = vmatpush1.bf16.msra.mxu0 %v1266
    %1563 = vmatprep.subr.bf16.mxu0 %v1271
    %1564 = vmatpush1.bf16.msra.mxu0 %v1270
    %1565 = vmatprep.subr.bf16.mxu0 %v1275
    %1566 = vmatpush1.bf16.msra.mxu0 %v1274
    %1567 = vmatprep.subr.bf16.mxu0 %v1279
    %1568 = vmatpush1.bf16.msra.mxu0 %v1278
    %1569 = vmatprep.subr.bf16.mxu0 %v1283
    %1570 = vmatpush1.bf16.msra.mxu0 %v1282
    %1571 = vmatprep.subr.bf16.mxu0 %v1287
    %1572 = vmatpush1.bf16.msra.mxu0 %v1286
    %1573 = vmatprep.subr.bf16.mxu0 %v1291
    %1574 = vmatpush1.bf16.msra.mxu0 %v1290
    %1575 = vmatprep.mubr.bf16.mxu0 %v651
    %1576 = vmatmul.mubr.bf16.gmra.mrb[0].mxu0 %v650
    %v1577 = vpop.f32.mrb[0].mxu0
    %v1578 = vadd.f32 %v1537, %v1577
    %v1579 = vpop.f32.mrb[0].mxu0
    %v1580 = vadd.f32 %v1539, %v1579
    %v1581 = vpop.f32.mrb[0].mxu0
    %v1582 = vpop.f32.mrb[0].mxu0
    %1583 = vdwg.mxu0
    %v1584 = vrot.slane %v1496, 4
    %v1585 = vadd.f32 %v1496, %v1584
    %v1586 = vrot.slane %v1585, 2
    %v1587 = vadd.f32 %v1585, %v1586
    %v1588 = vrot.slane %v1587, 1
    %v1589 = vadd.f32 %v1587, %v1588
    %v1590 = vrot.slane %v1498, 4
    %v1591 = vadd.f32 %v1498, %v1590
    %v1592 = vrot.slane %v1591, 2
    %v1593 = vadd.f32 %v1591, %v1592
    %v1594 = vrot.slane %v1593, 1
    %v1595 = vadd.f32 %v1593, %v1594
    %v1596 = vrot.slane %v1578, 4
    %v1597 = vadd.f32 %v1578, %v1596
    %v1598 = vrot.slane %v1597, 2
    %v1599 = vadd.f32 %v1597, %v1598
    %v1600 = vrot.slane %v1599, 1
    %v1601 = vadd.f32 %v1599, %v1600
    %v1602 = vrot.slane %v1580, 4
    %v1603 = vadd.f32 %v1580, %v1602
    %v1604 = vrot.slane %v1603, 2
    %v1605 = vadd.f32 %v1603, %v1604
    %v1606 = vrot.slane %v1605, 1
    %v1607 = vadd.f32 %v1605, %v1606
    %v1608 = vmul.f32 %v1589, %v575
    %v1609 = vmul.f32 %v1595, %v575
    %v1610 = vmul.f32 %v1601, %v575
    %v1611 = vmul.f32 %v1607, %v575
    %v1612 = vsub.f32 %v1496, %v1608
    %v1613 = vsub.f32 %v1498, %v1609
    %v1614 = vsub.f32 %v1578, %v1610
    %v1615 = vsub.f32 %v1580, %v1611
    %v1616 = vmul.f32 %v1612, %v1612
    %v1617 = vmul.f32 %v1613, %v1613
    %v1618 = vmul.f32 %v1614, %v1614
    %v1619 = vmul.f32 %v1615, %v1615
    %v1620 = vrot.slane %v1616, 4
    %v1621 = vadd.f32 %v1616, %v1620
    %v1622 = vrot.slane %v1621, 2
    %v1623 = vadd.f32 %v1621, %v1622
    %v1624 = vrot.slane %v1623, 1
    %v1625 = vadd.f32 %v1623, %v1624
    %v1626 = vrot.slane %v1617, 4
    %v1627 = vadd.f32 %v1617, %v1626
    %v1628 = vrot.slane %v1627, 2
    %v1629 = vadd.f32 %v1627, %v1628
    %v1630 = vrot.slane %v1629, 1
    %v1631 = vadd.f32 %v1629, %v1630
    %v1632 = vrot.slane %v1618, 4
    %v1633 = vadd.f32 %v1618, %v1632
    %v1634 = vrot.slane %v1633, 2
    %v1635 = vadd.f32 %v1633, %v1634
    %v1636 = vrot.slane %v1635, 1
    %v1637 = vadd.f32 %v1635, %v1636
    %v1638 = vrot.slane %v1619, 4
    %v1639 = vadd.f32 %v1619, %v1638
    %v1640 = vrot.slane %v1639, 2
    %v1641 = vadd.f32 %v1639, %v1640
    %v1642 = vrot.slane %v1641, 1
    %v1643 = vadd.f32 %v1641, %v1642
    %v1644 = vmul.f32 %v1625, %v575
    %v1645 = vmul.f32 %v1631, %v575
    %v1646 = vmul.f32 %v1637, %v575
    %v1647 = vmul.f32 %v1643, %v575
    %v1648 = vadd.f32 %v1644, 1e-05
    %v1649 = vadd.f32 %v1645, 1e-05
    %v1650 = vadd.f32 %v1646, 1e-05
    %v1651 = vadd.f32 %v1647, 1e-05
    %v1652 = vrsqrt.pop %v1648
    %v1653 = vrsqrt.pop %v1649
    %v1654 = vrsqrt.pop %v1650
    %v1655 = vrsqrt.pop %v1651
    %v1656 = vmul.f32 %v1612, %v1652
    %v1657 = vmul.f32 %v1613, %v1653
    %v1658 = vmul.f32 %v1614, %v1654
    %v1659 = vmul.f32 %v1615, %v1655
    %v1660 = vmul.f32 %v1656, 0.5
    %v1661 = vmul.f32 %v1657, 0.5
    %v1662 = vmul.f32 %v1658, 0.5
    %v1663 = vmul.f32 %v1659, 0.5
    %v1664 = vmul.f32 %v1656, 0.70710677
    %v1665 = vmul.f32 %v1657, 0.70710677
    %v1666 = vmul.f32 %v1658, 0.70710677
    %v1667 = vmul.f32 %v1659, 0.70710677
    %v1668 = verf.f32.pop %v1664
    %v1669 = verf.f32.pop %v1665
    %v1670 = verf.f32.pop %v1666
    %v1671 = verf.f32.pop %v1667
    %v1672 = vadd.f32 %v1668, 1.0
    %v1673 = vadd.f32 %v1669, 1.0
    %v1674 = vadd.f32 %v1670, 1.0
    %v1675 = vadd.f32 %v1671, 1.0
    %v1676 = vmul.f32 %v1660, %v1672
    %v1677 = vmul.f32 %v1661, %v1673
    %v1678 = vmul.f32 %v1662, %v1674
    %v1679 = vmul.f32 %v1663, %v1675
    %v1680 = vpack.c.bf16 %v1676, %v1676
    %v1681 = vpack.c.bf16 %v1677, %v1677
    %v1682 = vpack.c.bf16 %v1678, %v1678
    %v1683 = vpack.c.bf16 %v1679, %v1679
    %s1684 = scalar_lea.vmem [#allocation4], 1024
    %v1685 = vld [vmem:[%s1684] sm:$0xff]
    %v1686 = vld [vmem:[%s1684 + $0x8] sm:$0xff]
    %v1687 = vld [vmem:[%s1684 + $0x10] sm:$0xff]
    %v1688 = vld [vmem:[%s1684 + $0x18] sm:$0xff]
    %v1689 = vld [vmem:[%s1684 + $0x20] sm:$0xff]
    %v1690 = vld [vmem:[%s1684 + $0x28] sm:$0xff]
    %v1691 = vld [vmem:[%s1684 + $0x30] sm:$0xff]
    %v1692 = vld [vmem:[%s1684 + $0x38] sm:$0xff]
    %v1693 = vld [vmem:[%s1684 + $0x40] sm:$0xff]
    %v1694 = vld [vmem:[%s1684 + $0x48] sm:$0xff]
    %v1695 = vld [vmem:[%s1684 + $0x50] sm:$0xff]
    %v1696 = vld [vmem:[%s1684 + $0x58] sm:$0xff]
    %v1697 = vld [vmem:[%s1684 + $0x60] sm:$0xff]
    %v1698 = vld [vmem:[%s1684 + $0x68] sm:$0xff]
    %v1699 = vld [vmem:[%s1684 + $0x70] sm:$0xff]
    %v1700 = vld [vmem:[%s1684 + $0x78] sm:$0xff]
    %v1701 = vld [vmem:[%s1684 + $0x80] sm:$0xff]
    %v1702 = vld [vmem:[%s1684 + $0x88] sm:$0xff]
    %v1703 = vld [vmem:[%s1684 + $0x90] sm:$0xff]
    %v1704 = vld [vmem:[%s1684 + $0x98] sm:$0xff]
    %v1705 = vld [vmem:[%s1684 + $0xa0] sm:$0xff]
    %v1706 = vld [vmem:[%s1684 + $0xa8] sm:$0xff]
    %v1707 = vld [vmem:[%s1684 + $0xb0] sm:$0xff]
    %v1708 = vld [vmem:[%s1684 + $0xb8] sm:$0xff]
    %v1709 = vld [vmem:[%s1684 + $0xc0] sm:$0xff]
    %v1710 = vld [vmem:[%s1684 + $0xc8] sm:$0xff]
    %v1711 = vld [vmem:[%s1684 + $0xd0] sm:$0xff]
    %v1712 = vld [vmem:[%s1684 + $0xd8] sm:$0xff]
    %v1713 = vld [vmem:[%s1684 + $0xe0] sm:$0xff]
    %v1714 = vld [vmem:[%s1684 + $0xe8] sm:$0xff]
    %v1715 = vld [vmem:[%s1684 + $0xf0] sm:$0xff]
    %v1716 = vld [vmem:[%s1684 + $0xf8] sm:$0xff]
    %v1717 = vld [vmem:[%s1684 + $0x100] sm:$0xff]
    %v1718 = vld [vmem:[%s1684 + $0x108] sm:$0xff]
    %v1719 = vld [vmem:[%s1684 + $0x110] sm:$0xff]
    %v1720 = vld [vmem:[%s1684 + $0x118] sm:$0xff]
    %v1721 = vld [vmem:[%s1684 + $0x120] sm:$0xff]
    %v1722 = vld [vmem:[%s1684 + $0x128] sm:$0xff]
    %v1723 = vld [vmem:[%s1684 + $0x130] sm:$0xff]
    %v1724 = vld [vmem:[%s1684 + $0x138] sm:$0xff]
    %v1725 = vld [vmem:[%s1684 + $0x140] sm:$0xff]
    %v1726 = vld [vmem:[%s1684 + $0x148] sm:$0xff]
    %v1727 = vld [vmem:[%s1684 + $0x150] sm:$0xff]
    %v1728 = vld [vmem:[%s1684 + $0x158] sm:$0xff]
    %v1729 = vld [vmem:[%s1684 + $0x160] sm:$0xff]
    %v1730 = vld [vmem:[%s1684 + $0x168] sm:$0xff]
    %v1731 = vld [vmem:[%s1684 + $0x170] sm:$0xff]
    %v1732 = vld [vmem:[%s1684 + $0x178] sm:$0xff]
    %v1733 = vld [vmem:[%s1684 + $0x180] sm:$0xff]
    %v1734 = vld [vmem:[%s1684 + $0x188] sm:$0xff]
    %v1735 = vld [vmem:[%s1684 + $0x190] sm:$0xff]
    %v1736 = vld [vmem:[%s1684 + $0x198] sm:$0xff]
    %v1737 = vld [vmem:[%s1684 + $0x1a0] sm:$0xff]
    %v1738 = vld [vmem:[%s1684 + $0x1a8] sm:$0xff]
    %v1739 = vld [vmem:[%s1684 + $0x1b0] sm:$0xff]
    %v1740 = vld [vmem:[%s1684 + $0x1b8] sm:$0xff]
    %v1741 = vld [vmem:[%s1684 + $0x1c0] sm:$0xff]
    %v1742 = vld [vmem:[%s1684 + $0x1c8] sm:$0xff]
    %v1743 = vld [vmem:[%s1684 + $0x1d0] sm:$0xff]
    %v1744 = vld [vmem:[%s1684 + $0x1d8] sm:$0xff]
    %v1745 = vld [vmem:[%s1684 + $0x1e0] sm:$0xff]
    %v1746 = vld [vmem:[%s1684 + $0x1e8] sm:$0xff]
    %v1747 = vld [vmem:[%s1684 + $0x1f0] sm:$0xff]
    %v1748 = vld [vmem:[%s1684 + $0x1f8] sm:$0xff]
    %v1749 = vld [vmem:[%s1684 + $0x200] sm:$0xff]
    %v1750 = vld [vmem:[%s1684 + $0x208] sm:$0xff]
    %v1751 = vld [vmem:[%s1684 + $0x210] sm:$0xff]
    %v1752 = vld [vmem:[%s1684 + $0x218] sm:$0xff]
    %v1753 = vld [vmem:[%s1684 + $0x220] sm:$0xff]
    %v1754 = vld [vmem:[%s1684 + $0x228] sm:$0xff]
    %v1755 = vld [vmem:[%s1684 + $0x230] sm:$0xff]
    %v1756 = vld [vmem:[%s1684 + $0x238] sm:$0xff]
    %v1757 = vld [vmem:[%s1684 + $0x240] sm:$0xff]
    %v1758 = vld [vmem:[%s1684 + $0x248] sm:$0xff]
    %v1759 = vld [vmem:[%s1684 + $0x250] sm:$0xff]
    %v1760 = vld [vmem:[%s1684 + $0x258] sm:$0xff]
    %v1761 = vld [vmem:[%s1684 + $0x260] sm:$0xff]
    %v1762 = vld [vmem:[%s1684 + $0x268] sm:$0xff]
    %v1763 = vld [vmem:[%s1684 + $0x270] sm:$0xff]
    %v1764 = vld [vmem:[%s1684 + $0x278] sm:$0xff]
    %v1765 = vld [vmem:[%s1684 + $0x280] sm:$0xff]
    %v1766 = vld [vmem:[%s1684 + $0x288] sm:$0xff]
    %v1767 = vld [vmem:[%s1684 + $0x290] sm:$0xff]
    %v1768 = vld [vmem:[%s1684 + $0x298] sm:$0xff]
    %v1769 = vld [vmem:[%s1684 + $0x2a0] sm:$0xff]
    %v1770 = vld [vmem:[%s1684 + $0x2a8] sm:$0xff]
    %v1771 = vld [vmem:[%s1684 + $0x2b0] sm:$0xff]
    %v1772 = vld [vmem:[%s1684 + $0x2b8] sm:$0xff]
    %v1773 = vld [vmem:[%s1684 + $0x2c0] sm:$0xff]
    %v1774 = vld [vmem:[%s1684 + $0x2c8] sm:$0xff]
    %v1775 = vld [vmem:[%s1684 + $0x2d0] sm:$0xff]
    %v1776 = vld [vmem:[%s1684 + $0x2d8] sm:$0xff]
    %v1777 = vld [vmem:[%s1684 + $0x2e0] sm:$0xff]
    %v1778 = vld [vmem:[%s1684 + $0x2e8] sm:$0xff]
    %v1779 = vld [vmem:[%s1684 + $0x2f0] sm:$0xff]
    %v1780 = vld [vmem:[%s1684 + $0x2f8] sm:$0xff]
    %v1781 = vld [vmem:[%s1684 + $0x300] sm:$0xff]
    %v1782 = vld [vmem:[%s1684 + $0x308] sm:$0xff]
    %v1783 = vld [vmem:[%s1684 + $0x310] sm:$0xff]
    %v1784 = vld [vmem:[%s1684 + $0x318] sm:$0xff]
    %v1785 = vld [vmem:[%s1684 + $0x320] sm:$0xff]
    %v1786 = vld [vmem:[%s1684 + $0x328] sm:$0xff]
    %v1787 = vld [vmem:[%s1684 + $0x330] sm:$0xff]
    %v1788 = vld [vmem:[%s1684 + $0x338] sm:$0xff]
    %v1789 = vld [vmem:[%s1684 + $0x340] sm:$0xff]
    %v1790 = vld [vmem:[%s1684 + $0x348] sm:$0xff]
    %v1791 = vld [vmem:[%s1684 + $0x350] sm:$0xff]
    %v1792 = vld [vmem:[%s1684 + $0x358] sm:$0xff]
    %v1793 = vld [vmem:[%s1684 + $0x360] sm:$0xff]
    %v1794 = vld [vmem:[%s1684 + $0x368] sm:$0xff]
    %v1795 = vld [vmem:[%s1684 + $0x370] sm:$0xff]
    %v1796 = vld [vmem:[%s1684 + $0x378] sm:$0xff]
    %v1797 = vld [vmem:[%s1684 + $0x380] sm:$0xff]
    %v1798 = vld [vmem:[%s1684 + $0x388] sm:$0xff]
    %v1799 = vld [vmem:[%s1684 + $0x390] sm:$0xff]
    %v1800 = vld [vmem:[%s1684 + $0x398] sm:$0xff]
    %v1801 = vld [vmem:[%s1684 + $0x3a0] sm:$0xff]
    %v1802 = vld [vmem:[%s1684 + $0x3a8] sm:$0xff]
    %v1803 = vld [vmem:[%s1684 + $0x3b0] sm:$0xff]
    %v1804 = vld [vmem:[%s1684 + $0x3b8] sm:$0xff]
    %v1805 = vld [vmem:[%s1684 + $0x3c0] sm:$0xff]
    %v1806 = vld [vmem:[%s1684 + $0x3c8] sm:$0xff]
    %v1807 = vld [vmem:[%s1684 + $0x3d0] sm:$0xff]
    %v1808 = vld [vmem:[%s1684 + $0x3d8] sm:$0xff]
    %v1809 = vld [vmem:[%s1684 + $0x3e0] sm:$0xff]
    %v1810 = vld [vmem:[%s1684 + $0x3e8] sm:$0xff]
    %v1811 = vld [vmem:[%s1684 + $0x3f0] sm:$0xff]
    %v1812 = vld [vmem:[%s1684 + $0x3f8] sm:$0xff]
    %v1941 = vunpack.c.l.b16 %v1685
    %v1942 = vunpack.c.h.b16 %v1685
    %v1943 = vunpack.c.l.b16 %v1686
    %v1944 = vunpack.c.h.b16 %v1686
    %v1945 = vunpack.c.l.b16 %v1687
    %v1946 = vunpack.c.h.b16 %v1687
    %v1947 = vunpack.c.l.b16 %v1688
    %v1948 = vunpack.c.h.b16 %v1688
    %v1949 = vunpack.c.l.b16 %v1689
    %v1950 = vunpack.c.h.b16 %v1689
    %v1951 = vunpack.c.l.b16 %v1690
    %v1952 = vunpack.c.h.b16 %v1690
    %v1953 = vunpack.c.l.b16 %v1691
    %v1954 = vunpack.c.h.b16 %v1691
    %v1955 = vunpack.c.l.b16 %v1692
    %v1956 = vunpack.c.h.b16 %v1692
    %v1957 = vunpack.c.l.b16 %v1693
    %v1958 = vunpack.c.h.b16 %v1693
    %v1959 = vunpack.c.l.b16 %v1694
    %v1960 = vunpack.c.h.b16 %v1694
    %v1961 = vunpack.c.l.b16 %v1695
    %v1962 = vunpack.c.h.b16 %v1695
    %v1963 = vunpack.c.l.b16 %v1696
    %v1964 = vunpack.c.h.b16 %v1696
    %v1965 = vunpack.c.l.b16 %v1697
    %v1966 = vunpack.c.h.b16 %v1697
    %v1967 = vunpack.c.l.b16 %v1698
    %v1968 = vunpack.c.h.b16 %v1698
    %v1969 = vunpack.c.l.b16 %v1699
    %v1970 = vunpack.c.h.b16 %v1699
    %v1971 = vunpack.c.l.b16 %v1700
    %v1972 = vunpack.c.h.b16 %v1700
    %v1973 = vunpack.c.l.b16 %v1701
    %v1974 = vunpack.c.h.b16 %v1701
    %v1975 = vunpack.c.l.b16 %v1702
    %v1976 = vunpack.c.h.b16 %v1702
    %v1977 = vunpack.c.l.b16 %v1703
    %v1978 = vunpack.c.h.b16 %v1703
    %v1979 = vunpack.c.l.b16 %v1704
    %v1980 = vunpack.c.h.b16 %v1704
    %v1981 = vunpack.c.l.b16 %v1705
    %v1982 = vunpack.c.h.b16 %v1705
    %v1983 = vunpack.c.l.b16 %v1706
    %v1984 = vunpack.c.h.b16 %v1706
    %v1985 = vunpack.c.l.b16 %v1707
    %v1986 = vunpack.c.h.b16 %v1707
    %v1987 = vunpack.c.l.b16 %v1708
    %v1988 = vunpack.c.h.b16 %v1708
    %v1989 = vunpack.c.l.b16 %v1709
    %v1990 = vunpack.c.h.b16 %v1709
    %v1991 = vunpack.c.l.b16 %v1710
    %v1992 = vunpack.c.h.b16 %v1710
    %v1993 = vunpack.c.l.b16 %v1711
    %v1994 = vunpack.c.h.b16 %v1711
    %v1995 = vunpack.c.l.b16 %v1712
    %v1996 = vunpack.c.h.b16 %v1712
    %v1997 = vunpack.c.l.b16 %v1713
    %v1998 = vunpack.c.h.b16 %v1713
    %v1999 = vunpack.c.l.b16 %v1714
    %v2000 = vunpack.c.h.b16 %v1714
    %v2001 = vunpack.c.l.b16 %v1715
    %v2002 = vunpack.c.h.b16 %v1715
    %v2003 = vunpack.c.l.b16 %v1716
    %v2004 = vunpack.c.h.b16 %v1716
    %v2005 = vunpack.c.l.b16 %v1717
    %v2006 = vunpack.c.h.b16 %v1717
    %v2007 = vunpack.c.l.b16 %v1718
    %v2008 = vunpack.c.h.b16 %v1718
    %v2009 = vunpack.c.l.b16 %v1719
    %v2010 = vunpack.c.h.b16 %v1719
    %v2011 = vunpack.c.l.b16 %v1720
    %v2012 = vunpack.c.h.b16 %v1720
    %v2013 = vunpack.c.l.b16 %v1721
    %v2014 = vunpack.c.h.b16 %v1721
    %v2015 = vunpack.c.l.b16 %v1722
    %v2016 = vunpack.c.h.b16 %v1722
    %v2017 = vunpack.c.l.b16 %v1723
    %v2018 = vunpack.c.h.b16 %v1723
    %v2019 = vunpack.c.l.b16 %v1724
    %v2020 = vunpack.c.h.b16 %v1724
    %v2021 = vunpack.c.l.b16 %v1725
    %v2022 = vunpack.c.h.b16 %v1725
    %v2023 = vunpack.c.l.b16 %v1726
    %v2024 = vunpack.c.h.b16 %v1726
    %v2025 = vunpack.c.l.b16 %v1727
    %v2026 = vunpack.c.h.b16 %v1727
    %v2027 = vunpack.c.l.b16 %v1728
    %v2028 = vunpack.c.h.b16 %v1728
    %v2029 = vunpack.c.l.b16 %v1729
    %v2030 = vunpack.c.h.b16 %v1729
    %v2031 = vunpack.c.l.b16 %v1730
    %v2032 = vunpack.c.h.b16 %v1730
    %v2033 = vunpack.c.l.b16 %v1731
    %v2034 = vunpack.c.h.b16 %v1731
    %v2035 = vunpack.c.l.b16 %v1732
    %v2036 = vunpack.c.h.b16 %v1732
    %v2037 = vunpack.c.l.b16 %v1733
    %v2038 = vunpack.c.h.b16 %v1733
    %v2039 = vunpack.c.l.b16 %v1734
    %v2040 = vunpack.c.h.b16 %v1734
    %v2041 = vunpack.c.l.b16 %v1735
    %v2042 = vunpack.c.h.b16 %v1735
    %v2043 = vunpack.c.l.b16 %v1736
    %v2044 = vunpack.c.h.b16 %v1736
    %v2045 = vunpack.c.l.b16 %v1737
    %v2046 = vunpack.c.h.b16 %v1737
    %v2047 = vunpack.c.l.b16 %v1738
    %v2048 = vunpack.c.h.b16 %v1738
    %v2049 = vunpack.c.l.b16 %v1739
    %v2050 = vunpack.c.h.b16 %v1739
    %v2051 = vunpack.c.l.b16 %v1740
    %v2052 = vunpack.c.h.b16 %v1740
    %v2053 = vunpack.c.l.b16 %v1741
    %v2054 = vunpack.c.h.b16 %v1741
    %v2055 = vunpack.c.l.b16 %v1742
    %v2056 = vunpack.c.h.b16 %v1742
    %v2057 = vunpack.c.l.b16 %v1743
    %v2058 = vunpack.c.h.b16 %v1743
    %v2059 = vunpack.c.l.b16 %v1744
    %v2060 = vunpack.c.h.b16 %v1744
    %v2061 = vunpack.c.l.b16 %v1745
    %v2062 = vunpack.c.h.b16 %v1745
    %v2063 = vunpack.c.l.b16 %v1746
    %v2064 = vunpack.c.h.b16 %v1746
    %v2065 = vunpack.c.l.b16 %v1747
    %v2066 = vunpack.c.h.b16 %v1747
    %v2067 = vunpack.c.l.b16 %v1748
    %v2068 = vunpack.c.h.b16 %v1748
    %v2069 = vunpack.c.l.b16 %v1749
    %v2070 = vunpack.c.h.b16 %v1749
    %v2071 = vunpack.c.l.b16 %v1750
    %v2072 = vunpack.c.h.b16 %v1750
    %v2073 = vunpack.c.l.b16 %v1751
    %v2074 = vunpack.c.h.b16 %v1751
    %v2075 = vunpack.c.l.b16 %v1752
    %v2076 = vunpack.c.h.b16 %v1752
    %v2077 = vunpack.c.l.b16 %v1753
    %v2078 = vunpack.c.h.b16 %v1753
    %v2079 = vunpack.c.l.b16 %v1754
    %v2080 = vunpack.c.h.b16 %v1754
    %v2081 = vunpack.c.l.b16 %v1755
    %v2082 = vunpack.c.h.b16 %v1755
    %v2083 = vunpack.c.l.b16 %v1756
    %v2084 = vunpack.c.h.b16 %v1756
    %v2085 = vunpack.c.l.b16 %v1757
    %v2086 = vunpack.c.h.b16 %v1757
    %v2087 = vunpack.c.l.b16 %v1758
    %v2088 = vunpack.c.h.b16 %v1758
    %v2089 = vunpack.c.l.b16 %v1759
    %v2090 = vunpack.c.h.b16 %v1759
    %v2091 = vunpack.c.l.b16 %v1760
    %v2092 = vunpack.c.h.b16 %v1760
    %v2093 = vunpack.c.l.b16 %v1761
    %v2094 = vunpack.c.h.b16 %v1761
    %v2095 = vunpack.c.l.b16 %v1762
    %v2096 = vunpack.c.h.b16 %v1762
    %v2097 = vunpack.c.l.b16 %v1763
    %v2098 = vunpack.c.h.b16 %v1763
    %v2099 = vunpack.c.l.b16 %v1764
    %v2100 = vunpack.c.h.b16 %v1764
    %v2101 = vunpack.c.l.b16 %v1765
    %v2102 = vunpack.c.h.b16 %v1765
    %v2103 = vunpack.c.l.b16 %v1766
    %v2104 = vunpack.c.h.b16 %v1766
    %v2105 = vunpack.c.l.b16 %v1767
    %v2106 = vunpack.c.h.b16 %v1767
    %v2107 = vunpack.c.l.b16 %v1768
    %v2108 = vunpack.c.h.b16 %v1768
    %v2109 = vunpack.c.l.b16 %v1769
    %v2110 = vunpack.c.h.b16 %v1769
    %v2111 = vunpack.c.l.b16 %v1770
    %v2112 = vunpack.c.h.b16 %v1770
    %v2113 = vunpack.c.l.b16 %v1771
    %v2114 = vunpack.c.h.b16 %v1771
    %v2115 = vunpack.c.l.b16 %v1772
    %v2116 = vunpack.c.h.b16 %v1772
    %v2117 = vunpack.c.l.b16 %v1773
    %v2118 = vunpack.c.h.b16 %v1773
    %v2119 = vunpack.c.l.b16 %v1774
    %v2120 = vunpack.c.h.b16 %v1774
    %v2121 = vunpack.c.l.b16 %v1775
    %v2122 = vunpack.c.h.b16 %v1775
    %v2123 = vunpack.c.l.b16 %v1776
    %v2124 = vunpack.c.h.b16 %v1776
    %v2125 = vunpack.c.l.b16 %v1777
    %v2126 = vunpack.c.h.b16 %v1777
    %v2127 = vunpack.c.l.b16 %v1778
    %v2128 = vunpack.c.h.b16 %v1778
    %v2129 = vunpack.c.l.b16 %v1779
    %v2130 = vunpack.c.h.b16 %v1779
    %v2131 = vunpack.c.l.b16 %v1780
    %v2132 = vunpack.c.h.b16 %v1780
    %v2133 = vunpack.c.l.b16 %v1781
    %v2134 = vunpack.c.h.b16 %v1781
    %v2135 = vunpack.c.l.b16 %v1782
    %v2136 = vunpack.c.h.b16 %v1782
    %v2137 = vunpack.c.l.b16 %v1783
    %v2138 = vunpack.c.h.b16 %v1783
    %v2139 = vunpack.c.l.b16 %v1784
    %v2140 = vunpack.c.h.b16 %v1784
    %v2141 = vunpack.c.l.b16 %v1785
    %v2142 = vunpack.c.h.b16 %v1785
    %v2143 = vunpack.c.l.b16 %v1786
    %v2144 = vunpack.c.h.b16 %v1786
    %v2145 = vunpack.c.l.b16 %v1787
    %v2146 = vunpack.c.h.b16 %v1787
    %v2147 = vunpack.c.l.b16 %v1788
    %v2148 = vunpack.c.h.b16 %v1788
    %v2149 = vunpack.c.l.b16 %v1789
    %v2150 = vunpack.c.h.b16 %v1789
    %v2151 = vunpack.c.l.b16 %v1790
    %v2152 = vunpack.c.h.b16 %v1790
    %v2153 = vunpack.c.l.b16 %v1791
    %v2154 = vunpack.c.h.b16 %v1791
    %v2155 = vunpack.c.l.b16 %v1792
    %v2156 = vunpack.c.h.b16 %v1792
    %v2157 = vunpack.c.l.b16 %v1793
    %v2158 = vunpack.c.h.b16 %v1793
    %v2159 = vunpack.c.l.b16 %v1794
    %v2160 = vunpack.c.h.b16 %v1794
    %v2161 = vunpack.c.l.b16 %v1795
    %v2162 = vunpack.c.h.b16 %v1795
    %v2163 = vunpack.c.l.b16 %v1796
    %v2164 = vunpack.c.h.b16 %v1796
    %v2165 = vunpack.c.l.b16 %v1797
    %v2166 = vunpack.c.h.b16 %v1797
    %v2167 = vunpack.c.l.b16 %v1798
    %v2168 = vunpack.c.h.b16 %v1798
    %v2169 = vunpack.c.l.b16 %v1799
    %v2170 = vunpack.c.h.b16 %v1799
    %v2171 = vunpack.c.l.b16 %v1800
    %v2172 = vunpack.c.h.b16 %v1800
    %v2173 = vunpack.c.l.b16 %v1801
    %v2174 = vunpack.c.h.b16 %v1801
    %v2175 = vunpack.c.l.b16 %v1802
    %v2176 = vunpack.c.h.b16 %v1802
    %v2177 = vunpack.c.l.b16 %v1803
    %v2178 = vunpack.c.h.b16 %v1803
    %v2179 = vunpack.c.l.b16 %v1804
    %v2180 = vunpack.c.h.b16 %v1804
    %v2181 = vunpack.c.l.b16 %v1805
    %v2182 = vunpack.c.h.b16 %v1805
    %v2183 = vunpack.c.l.b16 %v1806
    %v2184 = vunpack.c.h.b16 %v1806
    %v2185 = vunpack.c.l.b16 %v1807
    %v2186 = vunpack.c.h.b16 %v1807
    %v2187 = vunpack.c.l.b16 %v1808
    %v2188 = vunpack.c.h.b16 %v1808
    %v2189 = vunpack.c.l.b16 %v1809
    %v2190 = vunpack.c.h.b16 %v1809
    %v2191 = vunpack.c.l.b16 %v1810
    %v2192 = vunpack.c.h.b16 %v1810
    %v2193 = vunpack.c.l.b16 %v1811
    %v2194 = vunpack.c.h.b16 %v1811
    %v2195 = vunpack.c.l.b16 %v1812
    %v2196 = vunpack.c.h.b16 %v1812
    %v2197 = vpack.c.b16 %v1945, %v1941
    %v2198 = vpack.c.b16 %v1946, %v1942
    %v2199 = vpack.c.b16 %v1947, %v1943
    %v2200 = vpack.c.b16 %v1948, %v1944
    %v2201 = vpack.c.b16 %v1953, %v1949
    %v2202 = vpack.c.b16 %v1954, %v1950
    %v2203 = vpack.c.b16 %v1955, %v1951
    %v2204 = vpack.c.b16 %v1956, %v1952
    %v2205 = vpack.c.b16 %v1961, %v1957
    %v2206 = vpack.c.b16 %v1962, %v1958
    %v2207 = vpack.c.b16 %v1963, %v1959
    %v2208 = vpack.c.b16 %v1964, %v1960
    %v2209 = vpack.c.b16 %v1969, %v1965
    %v2210 = vpack.c.b16 %v1970, %v1966
    %v2211 = vpack.c.b16 %v1971, %v1967
    %v2212 = vpack.c.b16 %v1972, %v1968
    %v2213 = vpack.c.b16 %v1977, %v1973
    %v2214 = vpack.c.b16 %v1978, %v1974
    %v2215 = vpack.c.b16 %v1979, %v1975
    %v2216 = vpack.c.b16 %v1980, %v1976
    %v2217 = vpack.c.b16 %v1985, %v1981
    %v2218 = vpack.c.b16 %v1986, %v1982
    %v2219 = vpack.c.b16 %v1987, %v1983
    %v2220 = vpack.c.b16 %v1988, %v1984
    %v2221 = vpack.c.b16 %v1993, %v1989
    %v2222 = vpack.c.b16 %v1994, %v1990
    %v2223 = vpack.c.b16 %v1995, %v1991
    %v2224 = vpack.c.b16 %v1996, %v1992
    %v2225 = vpack.c.b16 %v2001, %v1997
    %v2226 = vpack.c.b16 %v2002, %v1998
    %v2227 = vpack.c.b16 %v2003, %v1999
    %v2228 = vpack.c.b16 %v2004, %v2000
    %v2229 = vpack.c.b16 %v2009, %v2005
    %v2230 = vpack.c.b16 %v2010, %v2006
    %v2231 = vpack.c.b16 %v2011, %v2007
    %v2232 = vpack.c.b16 %v2012, %v2008
    %v2233 = vpack.c.b16 %v2017, %v2013
    %v2234 = vpack.c.b16 %v2018, %v2014
    %v2235 = vpack.c.b16 %v2019, %v2015
    %v2236 = vpack.c.b16 %v2020, %v2016
    %v2237 = vpack.c.b16 %v2025, %v2021
    %v2238 = vpack.c.b16 %v2026, %v2022
    %v2239 = vpack.c.b16 %v2027, %v2023
    %v2240 = vpack.c.b16 %v2028, %v2024
    %v2241 = vpack.c.b16 %v2033, %v2029
    %v2242 = vpack.c.b16 %v2034, %v2030
    %v2243 = vpack.c.b16 %v2035, %v2031
    %v2244 = vpack.c.b16 %v2036, %v2032
    %v2245 = vpack.c.b16 %v2041, %v2037
    %v2246 = vpack.c.b16 %v2042, %v2038
    %v2247 = vpack.c.b16 %v2043, %v2039
    %v2248 = vpack.c.b16 %v2044, %v2040
    %v2249 = vpack.c.b16 %v2049, %v2045
    %v2250 = vpack.c.b16 %v2050, %v2046
    %v2251 = vpack.c.b16 %v2051, %v2047
    %v2252 = vpack.c.b16 %v2052, %v2048
    %v2253 = vpack.c.b16 %v2057, %v2053
    %v2254 = vpack.c.b16 %v2058, %v2054
    %v2255 = vpack.c.b16 %v2059, %v2055
    %v2256 = vpack.c.b16 %v2060, %v2056
    %v2257 = vpack.c.b16 %v2065, %v2061
    %v2258 = vpack.c.b16 %v2066, %v2062
    %v2259 = vpack.c.b16 %v2067, %v2063
    %v2260 = vpack.c.b16 %v2068, %v2064
    %v2261 = vpack.c.b16 %v2073, %v2069
    %v2262 = vpack.c.b16 %v2074, %v2070
    %v2263 = vpack.c.b16 %v2075, %v2071
    %v2264 = vpack.c.b16 %v2076, %v2072
    %v2265 = vpack.c.b16 %v2081, %v2077
    %v2266 = vpack.c.b16 %v2082, %v2078
    %v2267 = vpack.c.b16 %v2083, %v2079
    %v2268 = vpack.c.b16 %v2084, %v2080
    %v2269 = vpack.c.b16 %v2089, %v2085
    %v2270 = vpack.c.b16 %v2090, %v2086
    %v2271 = vpack.c.b16 %v2091, %v2087
    %v2272 = vpack.c.b16 %v2092, %v2088
    %v2273 = vpack.c.b16 %v2097, %v2093
    %v2274 = vpack.c.b16 %v2098, %v2094
    %v2275 = vpack.c.b16 %v2099, %v2095
    %v2276 = vpack.c.b16 %v2100, %v2096
    %v2277 = vpack.c.b16 %v2105, %v2101
    %v2278 = vpack.c.b16 %v2106, %v2102
    %v2279 = vpack.c.b16 %v2107, %v2103
    %v2280 = vpack.c.b16 %v2108, %v2104
    %v2281 = vpack.c.b16 %v2113, %v2109
    %v2282 = vpack.c.b16 %v2114, %v2110
    %v2283 = vpack.c.b16 %v2115, %v2111
    %v2284 = vpack.c.b16 %v2116, %v2112
    %v2285 = vpack.c.b16 %v2121, %v2117
    %v2286 = vpack.c.b16 %v2122, %v2118
    %v2287 = vpack.c.b16 %v2123, %v2119
    %v2288 = vpack.c.b16 %v2124, %v2120
    %v2289 = vpack.c.b16 %v2129, %v2125
    %v2290 = vpack.c.b16 %v2130, %v2126
    %v2291 = vpack.c.b16 %v2131, %v2127
    %v2292 = vpack.c.b16 %v2132, %v2128
    %v2293 = vpack.c.b16 %v2137, %v2133
    %v2294 = vpack.c.b16 %v2138, %v2134
    %v2295 = vpack.c.b16 %v2139, %v2135
    %v2296 = vpack.c.b16 %v2140, %v2136
    %v2297 = vpack.c.b16 %v2145, %v2141
    %v2298 = vpack.c.b16 %v2146, %v2142
    %v2299 = vpack.c.b16 %v2147, %v2143
    %v2300 = vpack.c.b16 %v2148, %v2144
    %v2301 = vpack.c.b16 %v2153, %v2149
    %v2302 = vpack.c.b16 %v2154, %v2150
    %v2303 = vpack.c.b16 %v2155, %v2151
    %v2304 = vpack.c.b16 %v2156, %v2152
    %v2305 = vpack.c.b16 %v2161, %v2157
    %v2306 = vpack.c.b16 %v2162, %v2158
    %v2307 = vpack.c.b16 %v2163, %v2159
    %v2308 = vpack.c.b16 %v2164, %v2160
    %v2309 = vpack.c.b16 %v2169, %v2165
    %v2310 = vpack.c.b16 %v2170, %v2166
    %v2311 = vpack.c.b16 %v2171, %v2167
    %v2312 = vpack.c.b16 %v2172, %v2168
    %v2313 = vpack.c.b16 %v2177, %v2173
    %v2314 = vpack.c.b16 %v2178, %v2174
    %v2315 = vpack.c.b16 %v2179, %v2175
    %v2316 = vpack.c.b16 %v2180, %v2176
    %v2317 = vpack.c.b16 %v2185, %v2181
    %v2318 = vpack.c.b16 %v2186, %v2182
    %v2319 = vpack.c.b16 %v2187, %v2183
    %v2320 = vpack.c.b16 %v2188, %v2184
    %v2321 = vpack.c.b16 %v2193, %v2189
    %v2322 = vpack.c.b16 %v2194, %v2190
    %v2323 = vpack.c.b16 %v2195, %v2191
    %v2324 = vpack.c.b16 %v2196, %v2192
    %2453 = vmatprep.subr.bf16.mxu0 %v2198
    %2454 = vmatpush1.bf16.msra.mxu0 %v2197
    %2455 = vmatprep.subr.bf16.mxu0 %v2202
    %2456 = vmatpush1.bf16.msra.mxu0 %v2201
    %2457 = vmatprep.subr.bf16.mxu0 %v2206
    %2458 = vmatpush1.bf16.msra.mxu0 %v2205
    %2459 = vmatprep.subr.bf16.mxu0 %v2210
    %2460 = vmatpush1.bf16.msra.mxu0 %v2209
    %2461 = vmatprep.subr.bf16.mxu0 %v2214
    %2462 = vmatpush1.bf16.msra.mxu0 %v2213
    %2463 = vmatprep.subr.bf16.mxu0 %v2218
    %2464 = vmatpush1.bf16.msra.mxu0 %v2217
    %2465 = vmatprep.subr.bf16.mxu0 %v2222
    %2466 = vmatpush1.bf16.msra.mxu0 %v2221
    %2467 = vmatprep.subr.bf16.mxu0 %v2226
    %2468 = vmatpush1.bf16.msra.mxu0 %v2225
    %2469 = vmatprep.subr.bf16.mxu0 %v2230
    %2470 = vmatpush1.bf16.msra.mxu0 %v2229
    %2471 = vmatprep.subr.bf16.mxu0 %v2234
    %2472 = vmatpush1.bf16.msra.mxu0 %v2233
    %2473 = vmatprep.subr.bf16.mxu0 %v2238
    %2474 = vmatpush1.bf16.msra.mxu0 %v2237
    %2475 = vmatprep.subr.bf16.mxu0 %v2242
    %2476 = vmatpush1.bf16.msra.mxu0 %v2241
    %2477 = vmatprep.subr.bf16.mxu0 %v2246
    %2478 = vmatpush1.bf16.msra.mxu0 %v2245
    %2479 = vmatprep.subr.bf16.mxu0 %v2250
    %2480 = vmatpush1.bf16.msra.mxu0 %v2249
    %2481 = vmatprep.subr.bf16.mxu0 %v2254
    %2482 = vmatpush1.bf16.msra.mxu0 %v2253
    %2483 = vmatprep.subr.bf16.mxu0 %v2258
    %2484 = vmatpush1.bf16.msra.mxu0 %v2257
    %2485 = vmatprep.mubr.bf16.mxu0 %v1681
    %2486 = vmatmul.mubr.bf16.gmra.mrb[0].mxu0 %v1680
    %v2487 = vpop.f32.mrb[0].mxu0
    %v2488 = vadd.f32 0.0, %v2487
    %v2489 = vpop.f32.mrb[0].mxu0
    %v2490 = vadd.f32 0.0, %v2489
    %v2491 = vpop.f32.mrb[0].mxu0
    %v2492 = vpop.f32.mrb[0].mxu0
    %2493 = vdwg.mxu0
    %2494 = vmatprep.subr.bf16.mxu0 %v2262
    %2495 = vmatpush1.bf16.msra.mxu0 %v2261
    %2496 = vmatprep.subr.bf16.mxu0 %v2266
    %2497 = vmatpush1.bf16.msra.mxu0 %v2265
    %2498 = vmatprep.subr.bf16.mxu0 %v2270
    %2499 = vmatpush1.bf16.msra.mxu0 %v2269
    %2500 = vmatprep.subr.bf16.mxu0 %v2274
    %2501 = vmatpush1.bf16.msra.mxu0 %v2273
    %2502 = vmatprep.subr.bf16.mxu0 %v2278
    %2503 = vmatpush1.bf16.msra.mxu0 %v2277
    %2504 = vmatprep.subr.bf16.mxu0 %v2282
    %2505 = vmatpush1.bf16.msra.mxu0 %v2281
    %2506 = vmatprep.subr.bf16.mxu0 %v2286
    %2507 = vmatpush1.bf16.msra.mxu0 %v2285
    %2508 = vmatprep.subr.bf16.mxu0 %v2290
    %2509 = vmatpush1.bf16.msra.mxu0 %v2289
    %2510 = vmatprep.subr.bf16.mxu0 %v2294
    %2511 = vmatpush1.bf16.msra.mxu0 %v2293
    %2512 = vmatprep.subr.bf16.mxu0 %v2298
    %2513 = vmatpush1.bf16.msra.mxu0 %v2297
    %2514 = vmatprep.subr.bf16.mxu0 %v2302
    %2515 = vmatpush1.bf16.msra.mxu0 %v2301
    %2516 = vmatprep.subr.bf16.mxu0 %v2306
    %2517 = vmatpush1.bf16.msra.mxu0 %v2305
    %2518 = vmatprep.subr.bf16.mxu0 %v2310
    %2519 = vmatpush1.bf16.msra.mxu0 %v2309
    %2520 = vmatprep.subr.bf16.mxu0 %v2314
    %2521 = vmatpush1.bf16.msra.mxu0 %v2313
    %2522 = vmatprep.subr.bf16.mxu0 %v2318
    %2523 = vmatpush1.bf16.msra.mxu0 %v2317
    %2524 = vmatprep.subr.bf16.mxu0 %v2322
    %2525 = vmatpush1.bf16.msra.mxu0 %v2321
    %2526 = vmatprep.mubr.bf16.mxu0 %v1683
    %2527 = vmatmul.mubr.bf16.gmra.mrb[0].mxu0 %v1682
    %v2528 = vpop.f32.mrb[0].mxu0
    %v2529 = vadd.f32 %v2488, %v2528
    %v2530 = vpop.f32.mrb[0].mxu0
    %v2531 = vadd.f32 %v2490, %v2530
    %v2532 = vpop.f32.mrb[0].mxu0
    %v2533 = vpop.f32.mrb[0].mxu0
    %2534 = vdwg.mxu0
    %2535 = vmatprep.subr.bf16.mxu0 %v2200
    %2536 = vmatpush1.bf16.msra.mxu0 %v2199
    %2537 = vmatprep.subr.bf16.mxu0 %v2204
    %2538 = vmatpush1.bf16.msra.mxu0 %v2203
    %2539 = vmatprep.subr.bf16.mxu0 %v2208
    %2540 = vmatpush1.bf16.msra.mxu0 %v2207
    %2541 = vmatprep.subr.bf16.mxu0 %v2212
    %2542 = vmatpush1.bf16.msra.mxu0 %v2211
    %2543 = vmatprep.subr.bf16.mxu0 %v2216
    %2544 = vmatpush1.bf16.msra.mxu0 %v2215
    %2545 = vmatprep.subr.bf16.mxu0 %v2220
    %2546 = vmatpush1.bf16.msra.mxu0 %v2219
    %2547 = vmatprep.subr.bf16.mxu0 %v2224
    %2548 = vmatpush1.bf16.msra.mxu0 %v2223
    %2549 = vmatprep.subr.bf16.mxu0 %v2228
    %2550 = vmatpush1.bf16.msra.mxu0 %v2227
    %2551 = vmatprep.subr.bf16.mxu0 %v2232
    %2552 = vmatpush1.bf16.msra.mxu0 %v2231
    %2553 = vmatprep.subr.bf16.mxu0 %v2236
    %2554 = vmatpush1.bf16.msra.mxu0 %v2235
    %2555 = vmatprep.subr.bf16.mxu0 %v2240
    %2556 = vmatpush1.bf16.msra.mxu0 %v2239
    %2557 = vmatprep.subr.bf16.mxu0 %v2244
    %2558 = vmatpush1.bf16.msra.mxu0 %v2243
    %2559 = vmatprep.subr.bf16.mxu0 %v2248
    %2560 = vmatpush1.bf16.msra.mxu0 %v2247
    %2561 = vmatprep.subr.bf16.mxu0 %v2252
    %2562 = vmatpush1.bf16.msra.mxu0 %v2251
    %2563 = vmatprep.subr.bf16.mxu0 %v2256
    %2564 = vmatpush1.bf16.msra.mxu0 %v2255
    %2565 = vmatprep.subr.bf16.mxu0 %v2260
    %2566 = vmatpush1.bf16.msra.mxu0 %v2259
    %2567 = vmatprep.mubr.bf16.mxu0 %v1681
    %2568 = vmatmul.mubr.bf16.gmra.mrb[0].mxu0 %v1680
    %v2569 = vpop.f32.mrb[0].mxu0
    %v2570 = vadd.f32 0.0, %v2569
    %v2571 = vpop.f32.mrb[0].mxu0
    %v2572 = vadd.f32 0.0, %v2571
    %v2573 = vpop.f32.mrb[0].mxu0
    %v2574 = vpop.f32.mrb[0].mxu0
    %2575 = vdwg.mxu0
    %2576 = vmatprep.subr.bf16.mxu0 %v2264
    %2577 = vmatpush1.bf16.msra.mxu0 %v2263
    %2578 = vmatprep.subr.bf16.mxu0 %v2268
    %2579 = vmatpush1.bf16.msra.mxu0 %v2267
    %2580 = vmatprep.subr.bf16.mxu0 %v2272
    %2581 = vmatpush1.bf16.msra.mxu0 %v2271
    %2582 = vmatprep.subr.bf16.mxu0 %v2276
    %2583 = vmatpush1.bf16.msra.mxu0 %v2275
    %2584 = vmatprep.subr.bf16.mxu0 %v2280
    %2585 = vmatpush1.bf16.msra.mxu0 %v2279
    %2586 = vmatprep.subr.bf16.mxu0 %v2284
    %2587 = vmatpush1.bf16.msra.mxu0 %v2283
    %2588 = vmatprep.subr.bf16.mxu0 %v2288
    %2589 = vmatpush1.bf16.msra.mxu0 %v2287
    %2590 = vmatprep.subr.bf16.mxu0 %v2292
    %2591 = vmatpush1.bf16.msra.mxu0 %v2291
    %2592 = vmatprep.subr.bf16.mxu0 %v2296
    %2593 = vmatpush1.bf16.msra.mxu0 %v2295
    %2594 = vmatprep.subr.bf16.mxu0 %v2300
    %2595 = vmatpush1.bf16.msra.mxu0 %v2299
    %2596 = vmatprep.subr.bf16.mxu0 %v2304
    %2597 = vmatpush1.bf16.msra.mxu0 %v2303
    %2598 = vmatprep.subr.bf16.mxu0 %v2308
    %2599 = vmatpush1.bf16.msra.mxu0 %v2307
    %2600 = vmatprep.subr.bf16.mxu0 %v2312
    %2601 = vmatpush1.bf16.msra.mxu0 %v2311
    %2602 = vmatprep.subr.bf16.mxu0 %v2316
    %2603 = vmatpush1.bf16.msra.mxu0 %v2315
    %2604 = vmatprep.subr.bf16.mxu0 %v2320
    %2605 = vmatpush1.bf16.msra.mxu0 %v2319
    %2606 = vmatprep.subr.bf16.mxu0 %v2324
    %2607 = vmatpush1.bf16.msra.mxu0 %v2323
    %2608 = vmatprep.mubr.bf16.mxu0 %v1683
    %2609 = vmatmul.mubr.bf16.gmra.mrb[0].mxu0 %v1682
    %v2610 = vpop.f32.mrb[0].mxu0
    %v2611 = vadd.f32 %v2570, %v2610
    %v2612 = vpop.f32.mrb[0].mxu0
    %v2613 = vadd.f32 %v2572, %v2612
    %v2614 = vpop.f32.mrb[0].mxu0
    %v2615 = vpop.f32.mrb[0].mxu0
    %2616 = vdwg.mxu0
    %v2617 = vrot.slane %v2529, 4
    %v2618 = vadd.f32 %v2529, %v2617
    %v2619 = vrot.slane %v2618, 2
    %v2620 = vadd.f32 %v2618, %v2619
    %v2621 = vrot.slane %v2620, 1
    %v2622 = vadd.f32 %v2620, %v2621
    %v2623 = vrot.slane %v2531, 4
    %v2624 = vadd.f32 %v2531, %v2623
    %v2625 = vrot.slane %v2624, 2
    %v2626 = vadd.f32 %v2624, %v2625
    %v2627 = vrot.slane %v2626, 1
    %v2628 = vadd.f32 %v2626, %v2627
    %v2629 = vrot.slane %v2611, 4
    %v2630 = vadd.f32 %v2611, %v2629
    %v2631 = vrot.slane %v2630, 2
    %v2632 = vadd.f32 %v2630, %v2631
    %v2633 = vrot.slane %v2632, 1
    %v2634 = vadd.f32 %v2632, %v2633
    %v2635 = vrot.slane %v2613, 4
    %v2636 = vadd.f32 %v2613, %v2635
    %v2637 = vrot.slane %v2636, 2
    %v2638 = vadd.f32 %v2636, %v2637
    %v2639 = vrot.slane %v2638, 1
    %v2640 = vadd.f32 %v2638, %v2639
    %v2641 = vmul.f32 %v2622, %v575
    %v2642 = vmul.f32 %v2628, %v575
    %v2643 = vmul.f32 %v2634, %v575
    %v2644 = vmul.f32 %v2640, %v575
    %v2645 = vsub.f32 %v2529, %v2641
    %v2646 = vsub.f32 %v2531, %v2642
    %v2647 = vsub.f32 %v2611, %v2643
    %v2648 = vsub.f32 %v2613, %v2644
    %v2649 = vmul.f32 %v2645, %v2645
    %v2650 = vmul.f32 %v2646, %v2646
    %v2651 = vmul.f32 %v2647, %v2647
    %v2652 = vmul.f32 %v2648, %v2648
    %v2653 = vrot.slane %v2649, 4
    %v2654 = vadd.f32 %v2649, %v2653
    %v2655 = vrot.slane %v2654, 2
    %v2656 = vadd.f32 %v2654, %v2655
    %v2657 = vrot.slane %v2656, 1
    %v2658 = vadd.f32 %v2656, %v2657
    %v2659 = vrot.slane %v2650, 4
    %v2660 = vadd.f32 %v2650, %v2659
    %v2661 = vrot.slane %v2660, 2
    %v2662 = vadd.f32 %v2660, %v2661
    %v2663 = vrot.slane %v2662, 1
    %v2664 = vadd.f32 %v2662, %v2663
    %v2665 = vrot.slane %v2651, 4
    %v2666 = vadd.f32 %v2651, %v2665
    %v2667 = vrot.slane %v2666, 2
    %v2668 = vadd.f32 %v2666, %v2667
    %v2669 = vrot.slane %v2668, 1
    %v2670 = vadd.f32 %v2668, %v2669
    %v2671 = vrot.slane %v2652, 4
    %v2672 = vadd.f32 %v2652, %v2671
    %v2673 = vrot.slane %v2672, 2
    %v2674 = vadd.f32 %v2672, %v2673
    %v2675 = vrot.slane %v2674, 1
    %v2676 = vadd.f32 %v2674, %v2675
    %v2677 = vmul.f32 %v2658, %v575
    %v2678 = vmul.f32 %v2664, %v575
    %v2679 = vmul.f32 %v2670, %v575
    %v2680 = vmul.f32 %v2676, %v575
    %v2681 = vadd.f32 %v2677, 1e-05
    %v2682 = vadd.f32 %v2678, 1e-05
    %v2683 = vadd.f32 %v2679, 1e-05
    %v2684 = vadd.f32 %v2680, 1e-05
    %v2685 = vrsqrt.pop %v2681
    %v2686 = vrsqrt.pop %v2682
    %v2687 = vrsqrt.pop %v2683
    %v2688 = vrsqrt.pop %v2684
    %v2689 = vmul.f32 %v2645, %v2685
    %v2690 = vmul.f32 %v2646, %v2686
    %v2691 = vmul.f32 %v2647, %v2687
    %v2692 = vmul.f32 %v2648, %v2688
    %v2693 = vadd.f32 %v2689, %v644
    %v2694 = vadd.f32 %v2690, %v645
    %v2695 = vadd.f32 %v2691, %v646
    %v2696 = vadd.f32 %v2692, %v647
    %v2697 = vmul.f32 %v2693, 0.5
    %v2698 = vmul.f32 %v2694, 0.5
    %v2699 = vmul.f32 %v2695, 0.5
    %v2700 = vmul.f32 %v2696, 0.5
    %v2701 = vmul.f32 %v2693, 0.70710677
    %v2702 = vmul.f32 %v2694, 0.70710677
    %v2703 = vmul.f32 %v2695, 0.70710677
    %v2704 = vmul.f32 %v2696, 0.70710677
    %v2705 = verf.f32.pop %v2701
    %v2706 = verf.f32.pop %v2702
    %v2707 = verf.f32.pop %v2703
    %v2708 = verf.f32.pop %v2704
    %v2709 = vadd.f32 %v2705, 1.0
    %v2710 = vadd.f32 %v2706, 1.0
    %v2711 = vadd.f32 %v2707, 1.0
    %v2712 = vadd.f32 %v2708, 1.0
    %v2713 = vmul.f32 %v2697, %v2709
    %v2714 = vmul.f32 %v2698, %v2710
    %v2715 = vmul.f32 %v2699, %v2711
    %v2716 = vmul.f32 %v2700, %v2712
    %v2717 = vpack.c.bf16 %v2713, %v2713
    %v2718 = vpack.c.bf16 %v2714, %v2714
    %v2719 = vpack.c.bf16 %v2715, %v2715
    %v2720 = vpack.c.bf16 %v2716, %v2716
    %s2721 = scalar_lea.vmem [#allocation4], 2048
    %v2722 = vld [vmem:[%s2721] sm:$0xff]
    %v2723 = vld [vmem:[%s2721 + $0x8] sm:$0xff]
    %v2724 = vld [vmem:[%s2721 + $0x10] sm:$0xff]
    %v2725 = vld [vmem:[%s2721 + $0x18] sm:$0xff]
    %v2726 = vld [vmem:[%s2721 + $0x20] sm:$0xff]
    %v2727 = vld [vmem:[%s2721 + $0x28] sm:$0xff]
    %v2728 = vld [vmem:[%s2721 + $0x30] sm:$0xff]
    %v2729 = vld [vmem:[%s2721 + $0x38] sm:$0xff]
    %v2730 = vld [vmem:[%s2721 + $0x40] sm:$0xff]
    %v2731 = vld [vmem:[%s2721 + $0x48] sm:$0xff]
    %v2732 = vld [vmem:[%s2721 + $0x50] sm:$0xff]
    %v2733 = vld [vmem:[%s2721 + $0x58] sm:$0xff]
    %v2734 = vld [vmem:[%s2721 + $0x60] sm:$0xff]
    %v2735 = vld [vmem:[%s2721 + $0x68] sm:$0xff]
    %v2736 = vld [vmem:[%s2721 + $0x70] sm:$0xff]
    %v2737 = vld [vmem:[%s2721 + $0x78] sm:$0xff]
    %v2738 = vld [vmem:[%s2721 + $0x80] sm:$0xff]
    %v2739 = vld [vmem:[%s2721 + $0x88] sm:$0xff]
    %v2740 = vld [vmem:[%s2721 + $0x90] sm:$0xff]
    %v2741 = vld [vmem:[%s2721 + $0x98] sm:$0xff]
    %v2742 = vld [vmem:[%s2721 + $0xa0] sm:$0xff]
    %v2743 = vld [vmem:[%s2721 + $0xa8] sm:$0xff]
    %v2744 = vld [vmem:[%s2721 + $0xb0] sm:$0xff]
    %v2745 = vld [vmem:[%s2721 + $0xb8] sm:$0xff]
    %v2746 = vld [vmem:[%s2721 + $0xc0] sm:$0xff]
    %v2747 = vld [vmem:[%s2721 + $0xc8] sm:$0xff]
    %v2748 = vld [vmem:[%s2721 + $0xd0] sm:$0xff]
    %v2749 = vld [vmem:[%s2721 + $0xd8] sm:$0xff]
    %v2750 = vld [vmem:[%s2721 + $0xe0] sm:$0xff]
    %v2751 = vld [vmem:[%s2721 + $0xe8] sm:$0xff]
    %v2752 = vld [vmem:[%s2721 + $0xf0] sm:$0xff]
    %v2753 = vld [vmem:[%s2721 + $0xf8] sm:$0xff]
    %v2754 = vld [vmem:[%s2721 + $0x100] sm:$0xff]
    %v2755 = vld [vmem:[%s2721 + $0x108] sm:$0xff]
    %v2756 = vld [vmem:[%s2721 + $0x110] sm:$0xff]
    %v2757 = vld [vmem:[%s2721 + $0x118] sm:$0xff]
    %v2758 = vld [vmem:[%s2721 + $0x120] sm:$0xff]
    %v2759 = vld [vmem:[%s2721 + $0x128] sm:$0xff]
    %v2760 = vld [vmem:[%s2721 + $0x130] sm:$0xff]
    %v2761 = vld [vmem:[%s2721 + $0x138] sm:$0xff]
    %v2762 = vld [vmem:[%s2721 + $0x140] sm:$0xff]
    %v2763 = vld [vmem:[%s2721 + $0x148] sm:$0xff]
    %v2764 = vld [vmem:[%s2721 + $0x150] sm:$0xff]
    %v2765 = vld [vmem:[%s2721 + $0x158] sm:$0xff]
    %v2766 = vld [vmem:[%s2721 + $0x160] sm:$0xff]
    %v2767 = vld [vmem:[%s2721 + $0x168] sm:$0xff]
    %v2768 = vld [vmem:[%s2721 + $0x170] sm:$0xff]
    %v2769 = vld [vmem:[%s2721 + $0x178] sm:$0xff]
    %v2770 = vld [vmem:[%s2721 + $0x180] sm:$0xff]
    %v2771 = vld [vmem:[%s2721 + $0x188] sm:$0xff]
    %v2772 = vld [vmem:[%s2721 + $0x190] sm:$0xff]
    %v2773 = vld [vmem:[%s2721 + $0x198] sm:$0xff]
    %v2774 = vld [vmem:[%s2721 + $0x1a0] sm:$0xff]
    %v2775 = vld [vmem:[%s2721 + $0x1a8] sm:$0xff]
    %v2776 = vld [vmem:[%s2721 + $0x1b0] sm:$0xff]
    %v2777 = vld [vmem:[%s2721 + $0x1b8] sm:$0xff]
    %v2778 = vld [vmem:[%s2721 + $0x1c0] sm:$0xff]
    %v2779 = vld [vmem:[%s2721 + $0x1c8] sm:$0xff]
    %v2780 = vld [vmem:[%s2721 + $0x1d0] sm:$0xff]
    %v2781 = vld [vmem:[%s2721 + $0x1d8] sm:$0xff]
    %v2782 = vld [vmem:[%s2721 + $0x1e0] sm:$0xff]
    %v2783 = vld [vmem:[%s2721 + $0x1e8] sm:$0xff]
    %v2784 = vld [vmem:[%s2721 + $0x1f0] sm:$0xff]
    %v2785 = vld [vmem:[%s2721 + $0x1f8] sm:$0xff]
    %v2786 = vld [vmem:[%s2721 + $0x200] sm:$0xff]
    %v2787 = vld [vmem:[%s2721 + $0x208] sm:$0xff]
    %v2788 = vld [vmem:[%s2721 + $0x210] sm:$0xff]
    %v2789 = vld [vmem:[%s2721 + $0x218] sm:$0xff]
    %v2790 = vld [vmem:[%s2721 + $0x220] sm:$0xff]
    %v2791 = vld [vmem:[%s2721 + $0x228] sm:$0xff]
    %v2792 = vld [vmem:[%s2721 + $0x230] sm:$0xff]
    %v2793 = vld [vmem:[%s2721 + $0x238] sm:$0xff]
    %v2794 = vld [vmem:[%s2721 + $0x240] sm:$0xff]
    %v2795 = vld [vmem:[%s2721 + $0x248] sm:$0xff]
    %v2796 = vld [vmem:[%s2721 + $0x250] sm:$0xff]
    %v2797 = vld [vmem:[%s2721 + $0x258] sm:$0xff]
    %v2798 = vld [vmem:[%s2721 + $0x260] sm:$0xff]
    %v2799 = vld [vmem:[%s2721 + $0x268] sm:$0xff]
    %v2800 = vld [vmem:[%s2721 + $0x270] sm:$0xff]
    %v2801 = vld [vmem:[%s2721 + $0x278] sm:$0xff]
    %v2802 = vld [vmem:[%s2721 + $0x280] sm:$0xff]
    %v2803 = vld [vmem:[%s2721 + $0x288] sm:$0xff]
    %v2804 = vld [vmem:[%s2721 + $0x290] sm:$0xff]
    %v2805 = vld [vmem:[%s2721 + $0x298] sm:$0xff]
    %v2806 = vld [vmem:[%s2721 + $0x2a0] sm:$0xff]
    %v2807 = vld [vmem:[%s2721 + $0x2a8] sm:$0xff]
    %v2808 = vld [vmem:[%s2721 + $0x2b0] sm:$0xff]
    %v2809 = vld [vmem:[%s2721 + $0x2b8] sm:$0xff]
    %v2810 = vld [vmem:[%s2721 + $0x2c0] sm:$0xff]
    %v2811 = vld [vmem:[%s2721 + $0x2c8] sm:$0xff]
    %v2812 = vld [vmem:[%s2721 + $0x2d0] sm:$0xff]
    %v2813 = vld [vmem:[%s2721 + $0x2d8] sm:$0xff]
    %v2814 = vld [vmem:[%s2721 + $0x2e0] sm:$0xff]
    %v2815 = vld [vmem:[%s2721 + $0x2e8] sm:$0xff]
    %v2816 = vld [vmem:[%s2721 + $0x2f0] sm:$0xff]
    %v2817 = vld [vmem:[%s2721 + $0x2f8] sm:$0xff]
    %v2818 = vld [vmem:[%s2721 + $0x300] sm:$0xff]
    %v2819 = vld [vmem:[%s2721 + $0x308] sm:$0xff]
    %v2820 = vld [vmem:[%s2721 + $0x310] sm:$0xff]
    %v2821 = vld [vmem:[%s2721 + $0x318] sm:$0xff]
    %v2822 = vld [vmem:[%s2721 + $0x320] sm:$0xff]
    %v2823 = vld [vmem:[%s2721 + $0x328] sm:$0xff]
    %v2824 = vld [vmem:[%s2721 + $0x330] sm:$0xff]
    %v2825 = vld [vmem:[%s2721 + $0x338] sm:$0xff]
    %v2826 = vld [vmem:[%s2721 + $0x340] sm:$0xff]
    %v2827 = vld [vmem:[%s2721 + $0x348] sm:$0xff]
    %v2828 = vld [vmem:[%s2721 + $0x350] sm:$0xff]
    %v2829 = vld [vmem:[%s2721 + $0x358] sm:$0xff]
    %v2830 = vld [vmem:[%s2721 + $0x360] sm:$0xff]
    %v2831 = vld [vmem:[%s2721 + $0x368] sm:$0xff]
    %v2832 = vld [vmem:[%s2721 + $0x370] sm:$0xff]
    %v2833 = vld [vmem:[%s2721 + $0x378] sm:$0xff]
    %v2834 = vld [vmem:[%s2721 + $0x380] sm:$0xff]
    %v2835 = vld [vmem:[%s2721 + $0x388] sm:$0xff]
    %v2836 = vld [vmem:[%s2721 + $0x390] sm:$0xff]
    %v2837 = vld [vmem:[%s2721 + $0x398] sm:$0xff]
    %v2838 = vld [vmem:[%s2721 + $0x3a0] sm:$0xff]
    %v2839 = vld [vmem:[%s2721 + $0x3a8] sm:$0xff]
    %v2840 = vld [vmem:[%s2721 + $0x3b0] sm:$0xff]
    %v2841 = vld [vmem:[%s2721 + $0x3b8] sm:$0xff]
    %v2842 = vld [vmem:[%s2721 + $0x3c0] sm:$0xff]
    %v2843 = vld [vmem:[%s2721 + $0x3c8] sm:$0xff]
    %v2844 = vld [vmem:[%s2721 + $0x3d0] sm:$0xff]
    %v2845 = vld [vmem:[%s2721 + $0x3d8] sm:$0xff]
    %v2846 = vld [vmem:[%s2721 + $0x3e0] sm:$0xff]
    %v2847 = vld [vmem:[%s2721 + $0x3e8] sm:$0xff]
    %v2848 = vld [vmem:[%s2721 + $0x3f0] sm:$0xff]
    %v2849 = vld [vmem:[%s2721 + $0x3f8] sm:$0xff]
    %v2978 = vunpack.c.l.b16 %v2722
    %v2979 = vunpack.c.h.b16 %v2722
    %v2980 = vunpack.c.l.b16 %v2723
    %v2981 = vunpack.c.h.b16 %v2723
    %v2982 = vunpack.c.l.b16 %v2724
    %v2983 = vunpack.c.h.b16 %v2724
    %v2984 = vunpack.c.l.b16 %v2725
    %v2985 = vunpack.c.h.b16 %v2725
    %v2986 = vunpack.c.l.b16 %v2726
    %v2987 = vunpack.c.h.b16 %v2726
    %v2988 = vunpack.c.l.b16 %v2727
    %v2989 = vunpack.c.h.b16 %v2727
    %v2990 = vunpack.c.l.b16 %v2728
    %v2991 = vunpack.c.h.b16 %v2728
    %v2992 = vunpack.c.l.b16 %v2729
    %v2993 = vunpack.c.h.b16 %v2729
    %v2994 = vunpack.c.l.b16 %v2730
    %v2995 = vunpack.c.h.b16 %v2730
    %v2996 = vunpack.c.l.b16 %v2731
    %v2997 = vunpack.c.h.b16 %v2731
    %v2998 = vunpack.c.l.b16 %v2732
    %v2999 = vunpack.c.h.b16 %v2732
    %v3000 = vunpack.c.l.b16 %v2733
    %v3001 = vunpack.c.h.b16 %v2733
    %v3002 = vunpack.c.l.b16 %v2734
    %v3003 = vunpack.c.h.b16 %v2734
    %v3004 = vunpack.c.l.b16 %v2735
    %v3005 = vunpack.c.h.b16 %v2735
    %v3006 = vunpack.c.l.b16 %v2736
    %v3007 = vunpack.c.h.b16 %v2736
    %v3008 = vunpack.c.l.b16 %v2737
    %v3009 = vunpack.c.h.b16 %v2737
    %v3010 = vunpack.c.l.b16 %v2738
    %v3011 = vunpack.c.h.b16 %v2738
    %v3012 = vunpack.c.l.b16 %v2739
    %v3013 = vunpack.c.h.b16 %v2739
    %v3014 = vunpack.c.l.b16 %v2740
    %v3015 = vunpack.c.h.b16 %v2740
    %v3016 = vunpack.c.l.b16 %v2741
    %v3017 = vunpack.c.h.b16 %v2741
    %v3018 = vunpack.c.l.b16 %v2742
    %v3019 = vunpack.c.h.b16 %v2742
    %v3020 = vunpack.c.l.b16 %v2743
    %v3021 = vunpack.c.h.b16 %v2743
    %v3022 = vunpack.c.l.b16 %v2744
    %v3023 = vunpack.c.h.b16 %v2744
    %v3024 = vunpack.c.l.b16 %v2745
    %v3025 = vunpack.c.h.b16 %v2745
    %v3026 = vunpack.c.l.b16 %v2746
    %v3027 = vunpack.c.h.b16 %v2746
    %v3028 = vunpack.c.l.b16 %v2747
    %v3029 = vunpack.c.h.b16 %v2747
    %v3030 = vunpack.c.l.b16 %v2748
    %v3031 = vunpack.c.h.b16 %v2748
    %v3032 = vunpack.c.l.b16 %v2749
    %v3033 = vunpack.c.h.b16 %v2749
    %v3034 = vunpack.c.l.b16 %v2750
    %v3035 = vunpack.c.h.b16 %v2750
    %v3036 = vunpack.c.l.b16 %v2751
    %v3037 = vunpack.c.h.b16 %v2751
    %v3038 = vunpack.c.l.b16 %v2752
    %v3039 = vunpack.c.h.b16 %v2752
    %v3040 = vunpack.c.l.b16 %v2753
    %v3041 = vunpack.c.h.b16 %v2753
    %v3042 = vunpack.c.l.b16 %v2754
    %v3043 = vunpack.c.h.b16 %v2754
    %v3044 = vunpack.c.l.b16 %v2755
    %v3045 = vunpack.c.h.b16 %v2755
    %v3046 = vunpack.c.l.b16 %v2756
    %v3047 = vunpack.c.h.b16 %v2756
    %v3048 = vunpack.c.l.b16 %v2757
    %v3049 = vunpack.c.h.b16 %v2757
    %v3050 = vunpack.c.l.b16 %v2758
    %v3051 = vunpack.c.h.b16 %v2758
    %v3052 = vunpack.c.l.b16 %v2759
    %v3053 = vunpack.c.h.b16 %v2759
    %v3054 = vunpack.c.l.b16 %v2760
    %v3055 = vunpack.c.h.b16 %v2760
    %v3056 = vunpack.c.l.b16 %v2761
    %v3057 = vunpack.c.h.b16 %v2761
    %v3058 = vunpack.c.l.b16 %v2762
    %v3059 = vunpack.c.h.b16 %v2762
    %v3060 = vunpack.c.l.b16 %v2763
    %v3061 = vunpack.c.h.b16 %v2763
    %v3062 = vunpack.c.l.b16 %v2764
    %v3063 = vunpack.c.h.b16 %v2764
    %v3064 = vunpack.c.l.b16 %v2765
    %v3065 = vunpack.c.h.b16 %v2765
    %v3066 = vunpack.c.l.b16 %v2766
    %v3067 = vunpack.c.h.b16 %v2766
    %v3068 = vunpack.c.l.b16 %v2767
    %v3069 = vunpack.c.h.b16 %v2767
    %v3070 = vunpack.c.l.b16 %v2768
    %v3071 = vunpack.c.h.b16 %v2768
    %v3072 = vunpack.c.l.b16 %v2769
    %v3073 = vunpack.c.h.b16 %v2769
    %v3074 = vunpack.c.l.b16 %v2770
    %v3075 = vunpack.c.h.b16 %v2770
    %v3076 = vunpack.c.l.b16 %v2771
    %v3077 = vunpack.c.h.b16 %v2771
    %v3078 = vunpack.c.l.b16 %v2772
    %v3079 = vunpack.c.h.b16 %v2772
    %v3080 = vunpack.c.l.b16 %v2773
    %v3081 = vunpack.c.h.b16 %v2773
    %v3082 = vunpack.c.l.b16 %v2774
    %v3083 = vunpack.c.h.b16 %v2774
    %v3084 = vunpack.c.l.b16 %v2775
    %v3085 = vunpack.c.h.b16 %v2775
    %v3086 = vunpack.c.l.b16 %v2776
    %v3087 = vunpack.c.h.b16 %v2776
    %v3088 = vunpack.c.l.b16 %v2777
    %v3089 = vunpack.c.h.b16 %v2777
    %v3090 = vunpack.c.l.b16 %v2778
    %v3091 = vunpack.c.h.b16 %v2778
    %v3092 = vunpack.c.l.b16 %v2779
    %v3093 = vunpack.c.h.b16 %v2779
    %v3094 = vunpack.c.l.b16 %v2780
    %v3095 = vunpack.c.h.b16 %v2780
    %v3096 = vunpack.c.l.b16 %v2781
    %v3097 = vunpack.c.h.b16 %v2781
    %v3098 = vunpack.c.l.b16 %v2782
    %v3099 = vunpack.c.h.b16 %v2782
    %v3100 = vunpack.c.l.b16 %v2783
    %v3101 = vunpack.c.h.b16 %v2783
    %v3102 = vunpack.c.l.b16 %v2784
    %v3103 = vunpack.c.h.b16 %v2784
    %v3104 = vunpack.c.l.b16 %v2785
    %v3105 = vunpack.c.h.b16 %v2785
    %v3106 = vunpack.c.l.b16 %v2786
    %v3107 = vunpack.c.h.b16 %v2786
    %v3108 = vunpack.c.l.b16 %v2787
    %v3109 = vunpack.c.h.b16 %v2787
    %v3110 = vunpack.c.l.b16 %v2788
    %v3111 = vunpack.c.h.b16 %v2788
    %v3112 = vunpack.c.l.b16 %v2789
    %v3113 = vunpack.c.h.b16 %v2789
    %v3114 = vunpack.c.l.b16 %v2790
    %v3115 = vunpack.c.h.b16 %v2790
    %v3116 = vunpack.c.l.b16 %v2791
    %v3117 = vunpack.c.h.b16 %v2791
    %v3118 = vunpack.c.l.b16 %v2792
    %v3119 = vunpack.c.h.b16 %v2792
    %v3120 = vunpack.c.l.b16 %v2793
    %v3121 = vunpack.c.h.b16 %v2793
    %v3122 = vunpack.c.l.b16 %v2794
    %v3123 = vunpack.c.h.b16 %v2794
    %v3124 = vunpack.c.l.b16 %v2795
    %v3125 = vunpack.c.h.b16 %v2795
    %v3126 = vunpack.c.l.b16 %v2796
    %v3127 = vunpack.c.h.b16 %v2796
    %v3128 = vunpack.c.l.b16 %v2797
    %v3129 = vunpack.c.h.b16 %v2797
    %v3130 = vunpack.c.l.b16 %v2798
    %v3131 = vunpack.c.h.b16 %v2798
    %v3132 = vunpack.c.l.b16 %v2799
    %v3133 = vunpack.c.h.b16 %v2799
    %v3134 = vunpack.c.l.b16 %v2800
    %v3135 = vunpack.c.h.b16 %v2800
    %v3136 = vunpack.c.l.b16 %v2801
    %v3137 = vunpack.c.h.b16 %v2801
    %v3138 = vunpack.c.l.b16 %v2802
    %v3139 = vunpack.c.h.b16 %v2802
    %v3140 = vunpack.c.l.b16 %v2803
    %v3141 = vunpack.c.h.b16 %v2803
    %v3142 = vunpack.c.l.b16 %v2804
    %v3143 = vunpack.c.h.b16 %v2804
    %v3144 = vunpack.c.l.b16 %v2805
    %v3145 = vunpack.c.h.b16 %v2805
    %v3146 = vunpack.c.l.b16 %v2806
    %v3147 = vunpack.c.h.b16 %v2806
    %v3148 = vunpack.c.l.b16 %v2807
    %v3149 = vunpack.c.h.b16 %v2807
    %v3150 = vunpack.c.l.b16 %v2808
    %v3151 = vunpack.c.h.b16 %v2808
    %v3152 = vunpack.c.l.b16 %v2809
    %v3153 = vunpack.c.h.b16 %v2809
    %v3154 = vunpack.c.l.b16 %v2810
    %v3155 = vunpack.c.h.b16 %v2810
    %v3156 = vunpack.c.l.b16 %v2811
    %v3157 = vunpack.c.h.b16 %v2811
    %v3158 = vunpack.c.l.b16 %v2812
    %v3159 = vunpack.c.h.b16 %v2812
    %v3160 = vunpack.c.l.b16 %v2813
    %v3161 = vunpack.c.h.b16 %v2813
    %v3162 = vunpack.c.l.b16 %v2814
    %v3163 = vunpack.c.h.b16 %v2814
    %v3164 = vunpack.c.l.b16 %v2815
    %v3165 = vunpack.c.h.b16 %v2815
    %v3166 = vunpack.c.l.b16 %v2816
    %v3167 = vunpack.c.h.b16 %v2816
    %v3168 = vunpack.c.l.b16 %v2817
    %v3169 = vunpack.c.h.b16 %v2817
    %v3170 = vunpack.c.l.b16 %v2818
    %v3171 = vunpack.c.h.b16 %v2818
    %v3172 = vunpack.c.l.b16 %v2819
    %v3173 = vunpack.c.h.b16 %v2819
    %v3174 = vunpack.c.l.b16 %v2820
    %v3175 = vunpack.c.h.b16 %v2820
    %v3176 = vunpack.c.l.b16 %v2821
    %v3177 = vunpack.c.h.b16 %v2821
    %v3178 = vunpack.c.l.b16 %v2822
    %v3179 = vunpack.c.h.b16 %v2822
    %v3180 = vunpack.c.l.b16 %v2823
    %v3181 = vunpack.c.h.b16 %v2823
    %v3182 = vunpack.c.l.b16 %v2824
    %v3183 = vunpack.c.h.b16 %v2824
    %v3184 = vunpack.c.l.b16 %v2825
    %v3185 = vunpack.c.h.b16 %v2825
    %v3186 = vunpack.c.l.b16 %v2826
    %v3187 = vunpack.c.h.b16 %v2826
    %v3188 = vunpack.c.l.b16 %v2827
    %v3189 = vunpack.c.h.b16 %v2827
    %v3190 = vunpack.c.l.b16 %v2828
    %v3191 = vunpack.c.h.b16 %v2828
    %v3192 = vunpack.c.l.b16 %v2829
    %v3193 = vunpack.c.h.b16 %v2829
    %v3194 = vunpack.c.l.b16 %v2830
    %v3195 = vunpack.c.h.b16 %v2830
    %v3196 = vunpack.c.l.b16 %v2831
    %v3197 = vunpack.c.h.b16 %v2831
    %v3198 = vunpack.c.l.b16 %v2832
    %v3199 = vunpack.c.h.b16 %v2832
    %v3200 = vunpack.c.l.b16 %v2833
    %v3201 = vunpack.c.h.b16 %v2833
    %v3202 = vunpack.c.l.b16 %v2834
    %v3203 = vunpack.c.h.b16 %v2834
    %v3204 = vunpack.c.l.b16 %v2835
    %v3205 = vunpack.c.h.b16 %v2835
    %v3206 = vunpack.c.l.b16 %v2836
    %v3207 = vunpack.c.h.b16 %v2836
    %v3208 = vunpack.c.l.b16 %v2837
    %v3209 = vunpack.c.h.b16 %v2837
    %v3210 = vunpack.c.l.b16 %v2838
    %v3211 = vunpack.c.h.b16 %v2838
    %v3212 = vunpack.c.l.b16 %v2839
    %v3213 = vunpack.c.h.b16 %v2839
    %v3214 = vunpack.c.l.b16 %v2840
    %v3215 = vunpack.c.h.b16 %v2840
    %v3216 = vunpack.c.l.b16 %v2841
    %v3217 = vunpack.c.h.b16 %v2841
    %v3218 = vunpack.c.l.b16 %v2842
    %v3219 = vunpack.c.h.b16 %v2842
    %v3220 = vunpack.c.l.b16 %v2843
    %v3221 = vunpack.c.h.b16 %v2843
    %v3222 = vunpack.c.l.b16 %v2844
    %v3223 = vunpack.c.h.b16 %v2844
    %v3224 = vunpack.c.l.b16 %v2845
    %v3225 = vunpack.c.h.b16 %v2845
    %v3226 = vunpack.c.l.b16 %v2846
    %v3227 = vunpack.c.h.b16 %v2846
    %v3228 = vunpack.c.l.b16 %v2847
    %v3229 = vunpack.c.h.b16 %v2847
    %v3230 = vunpack.c.l.b16 %v2848
    %v3231 = vunpack.c.h.b16 %v2848
    %v3232 = vunpack.c.l.b16 %v2849
    %v3233 = vunpack.c.h.b16 %v2849
    %v3234 = vpack.c.b16 %v2982, %v2978
    %v3235 = vpack.c.b16 %v2983, %v2979
    %v3236 = vpack.c.b16 %v2984, %v2980
    %v3237 = vpack.c.b16 %v2985, %v2981
    %v3238 = vpack.c.b16 %v2990, %v2986
    %v3239 = vpack.c.b16 %v2991, %v2987
    %v3240 = vpack.c.b16 %v2992, %v2988
    %v3241 = vpack.c.b16 %v2993, %v2989
    %v3242 = vpack.c.b16 %v2998, %v2994
    %v3243 = vpack.c.b16 %v2999, %v2995
    %v3244 = vpack.c.b16 %v3000, %v2996
    %v3245 = vpack.c.b16 %v3001, %v2997
    %v3246 = vpack.c.b16 %v3006, %v3002
    %v3247 = vpack.c.b16 %v3007, %v3003
    %v3248 = vpack.c.b16 %v3008, %v3004
    %v3249 = vpack.c.b16 %v3009, %v3005
    %v3250 = vpack.c.b16 %v3014, %v3010
    %v3251 = vpack.c.b16 %v3015, %v3011
    %v3252 = vpack.c.b16 %v3016, %v3012
    %v3253 = vpack.c.b16 %v3017, %v3013
    %v3254 = vpack.c.b16 %v3022, %v3018
    %v3255 = vpack.c.b16 %v3023, %v3019
    %v3256 = vpack.c.b16 %v3024, %v3020
    %v3257 = vpack.c.b16 %v3025, %v3021
    %v3258 = vpack.c.b16 %v3030, %v3026
    %v3259 = vpack.c.b16 %v3031, %v3027
    %v3260 = vpack.c.b16 %v3032, %v3028
    %v3261 = vpack.c.b16 %v3033, %v3029
    %v3262 = vpack.c.b16 %v3038, %v3034
    %v3263 = vpack.c.b16 %v3039, %v3035
    %v3264 = vpack.c.b16 %v3040, %v3036
    %v3265 = vpack.c.b16 %v3041, %v3037
    %v3266 = vpack.c.b16 %v3046, %v3042
    %v3267 = vpack.c.b16 %v3047, %v3043
    %v3268 = vpack.c.b16 %v3048, %v3044
    %v3269 = vpack.c.b16 %v3049, %v3045
    %v3270 = vpack.c.b16 %v3054, %v3050
    %v3271 = vpack.c.b16 %v3055, %v3051
    %v3272 = vpack.c.b16 %v3056, %v3052
    %v3273 = vpack.c.b16 %v3057, %v3053
    %v3274 = vpack.c.b16 %v3062, %v3058
    %v3275 = vpack.c.b16 %v3063, %v3059
    %v3276 = vpack.c.b16 %v3064, %v3060
    %v3277 = vpack.c.b16 %v3065, %v3061
    %v3278 = vpack.c.b16 %v3070, %v3066
    %v3279 = vpack.c.b16 %v3071, %v3067
    %v3280 = vpack.c.b16 %v3072, %v3068
    %v3281 = vpack.c.b16 %v3073, %v3069
    %v3282 = vpack.c.b16 %v3078, %v3074
    %v3283 = vpack.c.b16 %v3079, %v3075
    %v3284 = vpack.c.b16 %v3080, %v3076
    %v3285 = vpack.c.b16 %v3081, %v3077
    %v3286 = vpack.c.b16 %v3086, %v3082
    %v3287 = vpack.c.b16 %v3087, %v3083
    %v3288 = vpack.c.b16 %v3088, %v3084
    %v3289 = vpack.c.b16 %v3089, %v3085
    %v3290 = vpack.c.b16 %v3094, %v3090
    %v3291 = vpack.c.b16 %v3095, %v3091
    %v3292 = vpack.c.b16 %v3096, %v3092
    %v3293 = vpack.c.b16 %v3097, %v3093
    %v3294 = vpack.c.b16 %v3102, %v3098
    %v3295 = vpack.c.b16 %v3103, %v3099
    %v3296 = vpack.c.b16 %v3104, %v3100
    %v3297 = vpack.c.b16 %v3105, %v3101
    %v3298 = vpack.c.b16 %v3110, %v3106
    %v3299 = vpack.c.b16 %v3111, %v3107
    %v3300 = vpack.c.b16 %v3112, %v3108
    %v3301 = vpack.c.b16 %v3113, %v3109
    %v3302 = vpack.c.b16 %v3118, %v3114
    %v3303 = vpack.c.b16 %v3119, %v3115
    %v3304 = vpack.c.b16 %v3120, %v3116
    %v3305 = vpack.c.b16 %v3121, %v3117
    %v3306 = vpack.c.b16 %v3126, %v3122
    %v3307 = vpack.c.b16 %v3127, %v3123
    %v3308 = vpack.c.b16 %v3128, %v3124
    %v3309 = vpack.c.b16 %v3129, %v3125
    %v3310 = vpack.c.b16 %v3134, %v3130
    %v3311 = vpack.c.b16 %v3135, %v3131
    %v3312 = vpack.c.b16 %v3136, %v3132
    %v3313 = vpack.c.b16 %v3137, %v3133
    %v3314 = vpack.c.b16 %v3142, %v3138
    %v3315 = vpack.c.b16 %v3143, %v3139
    %v3316 = vpack.c.b16 %v3144, %v3140
    %v3317 = vpack.c.b16 %v3145, %v3141
    %v3318 = vpack.c.b16 %v3150, %v3146
    %v3319 = vpack.c.b16 %v3151, %v3147
    %v3320 = vpack.c.b16 %v3152, %v3148
    %v3321 = vpack.c.b16 %v3153, %v3149
    %v3322 = vpack.c.b16 %v3158, %v3154
    %v3323 = vpack.c.b16 %v3159, %v3155
    %v3324 = vpack.c.b16 %v3160, %v3156
    %v3325 = vpack.c.b16 %v3161, %v3157
    %v3326 = vpack.c.b16 %v3166, %v3162
    %v3327 = vpack.c.b16 %v3167, %v3163
    %v3328 = vpack.c.b16 %v3168, %v3164
    %v3329 = vpack.c.b16 %v3169, %v3165
    %v3330 = vpack.c.b16 %v3174, %v3170
    %v3331 = vpack.c.b16 %v3175, %v3171
    %v3332 = vpack.c.b16 %v3176, %v3172
    %v3333 = vpack.c.b16 %v3177, %v3173
    %v3334 = vpack.c.b16 %v3182, %v3178
    %v3335 = vpack.c.b16 %v3183, %v3179
    %v3336 = vpack.c.b16 %v3184, %v3180
    %v3337 = vpack.c.b16 %v3185, %v3181
    %v3338 = vpack.c.b16 %v3190, %v3186
    %v3339 = vpack.c.b16 %v3191, %v3187
    %v3340 = vpack.c.b16 %v3192, %v3188
    %v3341 = vpack.c.b16 %v3193, %v3189
    %v3342 = vpack.c.b16 %v3198, %v3194
    %v3343 = vpack.c.b16 %v3199, %v3195
    %v3344 = vpack.c.b16 %v3200, %v3196
    %v3345 = vpack.c.b16 %v3201, %v3197
    %v3346 = vpack.c.b16 %v3206, %v3202
    %v3347 = vpack.c.b16 %v3207, %v3203
    %v3348 = vpack.c.b16 %v3208, %v3204
    %v3349 = vpack.c.b16 %v3209, %v3205
    %v3350 = vpack.c.b16 %v3214, %v3210
    %v3351 = vpack.c.b16 %v3215, %v3211
    %v3352 = vpack.c.b16 %v3216, %v3212
    %v3353 = vpack.c.b16 %v3217, %v3213
    %v3354 = vpack.c.b16 %v3222, %v3218
    %v3355 = vpack.c.b16 %v3223, %v3219
    %v3356 = vpack.c.b16 %v3224, %v3220
    %v3357 = vpack.c.b16 %v3225, %v3221
    %v3358 = vpack.c.b16 %v3230, %v3226
    %v3359 = vpack.c.b16 %v3231, %v3227
    %v3360 = vpack.c.b16 %v3232, %v3228
    %v3361 = vpack.c.b16 %v3233, %v3229
    %3490 = vmatprep.subr.bf16.mxu0 %v3235
    %3491 = vmatpush1.bf16.msra.mxu0 %v3234
    %3492 = vmatprep.subr.bf16.mxu0 %v3239
    %3493 = vmatpush1.bf16.msra.mxu0 %v3238
    %3494 = vmatprep.subr.bf16.mxu0 %v3243
    %3495 = vmatpush1.bf16.msra.mxu0 %v3242
    %3496 = vmatprep.subr.bf16.mxu0 %v3247
    %3497 = vmatpush1.bf16.msra.mxu0 %v3246
    %3498 = vmatprep.subr.bf16.mxu0 %v3251
    %3499 = vmatpush1.bf16.msra.mxu0 %v3250
    %3500 = vmatprep.subr.bf16.mxu0 %v3255
    %3501 = vmatpush1.bf16.msra.mxu0 %v3254
    %3502 = vmatprep.subr.bf16.mxu0 %v3259
    %3503 = vmatpush1.bf16.msra.mxu0 %v3258
    %3504 = vmatprep.subr.bf16.mxu0 %v3263
    %3505 = vmatpush1.bf16.msra.mxu0 %v3262
    %3506 = vmatprep.subr.bf16.mxu0 %v3267
    %3507 = vmatpush1.bf16.msra.mxu0 %v3266
    %3508 = vmatprep.subr.bf16.mxu0 %v3271
    %3509 = vmatpush1.bf16.msra.mxu0 %v3270
    %3510 = vmatprep.subr.bf16.mxu0 %v3275
    %3511 = vmatpush1.bf16.msra.mxu0 %v3274
    %3512 = vmatprep.subr.bf16.mxu0 %v3279
    %3513 = vmatpush1.bf16.msra.mxu0 %v3278
    %3514 = vmatprep.subr.bf16.mxu0 %v3283
    %3515 = vmatpush1.bf16.msra.mxu0 %v3282
    %3516 = vmatprep.subr.bf16.mxu0 %v3287
    %3517 = vmatpush1.bf16.msra.mxu0 %v3286
    %3518 = vmatprep.subr.bf16.mxu0 %v3291
    %3519 = vmatpush1.bf16.msra.mxu0 %v3290
    %3520 = vmatprep.subr.bf16.mxu0 %v3295
    %3521 = vmatpush1.bf16.msra.mxu0 %v3294
    %3522 = vmatprep.mubr.bf16.mxu0 %v2718
    %3523 = vmatmul.mubr.bf16.gmra.mrb[0].mxu0 %v2717
    %v3524 = vpop.f32.mrb[0].mxu0
    %v3525 = vadd.f32 0.0, %v3524
    %v3526 = vpop.f32.mrb[0].mxu0
    %v3527 = vadd.f32 0.0, %v3526
    %v3528 = vpop.f32.mrb[0].mxu0
    %v3529 = vpop.f32.mrb[0].mxu0
    %3530 = vdwg.mxu0
    %3531 = vmatprep.subr.bf16.mxu0 %v3299
    %3532 = vmatpush1.bf16.msra.mxu0 %v3298
    %3533 = vmatprep.subr.bf16.mxu0 %v3303
    %3534 = vmatpush1.bf16.msra.mxu0 %v3302
    %3535 = vmatprep.subr.bf16.mxu0 %v3307
    %3536 = vmatpush1.bf16.msra.mxu0 %v3306
    %3537 = vmatprep.subr.bf16.mxu0 %v3311
    %3538 = vmatpush1.bf16.msra.mxu0 %v3310
    %3539 = vmatprep.subr.bf16.mxu0 %v3315
    %3540 = vmatpush1.bf16.msra.mxu0 %v3314
    %3541 = vmatprep.subr.bf16.mxu0 %v3319
    %3542 = vmatpush1.bf16.msra.mxu0 %v3318
    %3543 = vmatprep.subr.bf16.mxu0 %v3323
    %3544 = vmatpush1.bf16.msra.mxu0 %v3322
    %3545 = vmatprep.subr.bf16.mxu0 %v3327
    %3546 = vmatpush1.bf16.msra.mxu0 %v3326
    %3547 = vmatprep.subr.bf16.mxu0 %v3331
    %3548 = vmatpush1.bf16.msra.mxu0 %v3330
    %3549 = vmatprep.subr.bf16.mxu0 %v3335
    %3550 = vmatpush1.bf16.msra.mxu0 %v3334
    %3551 = vmatprep.subr.bf16.mxu0 %v3339
    %3552 = vmatpush1.bf16.msra.mxu0 %v3338
    %3553 = vmatprep.subr.bf16.mxu0 %v3343
    %3554 = vmatpush1.bf16.msra.mxu0 %v3342
    %3555 = vmatprep.subr.bf16.mxu0 %v3347
    %3556 = vmatpush1.bf16.msra.mxu0 %v3346
    %3557 = vmatprep.subr.bf16.mxu0 %v3351
    %3558 = vmatpush1.bf16.msra.mxu0 %v3350
    %3559 = vmatprep.subr.bf16.mxu0 %v3355
    %3560 = vmatpush1.bf16.msra.mxu0 %v3354
    %3561 = vmatprep.subr.bf16.mxu0 %v3359
    %3562 = vmatpush1.bf16.msra.mxu0 %v3358
    %3563 = vmatprep.mubr.bf16.mxu0 %v2720
    %3564 = vmatmul.mubr.bf16.gmra.mrb[0].mxu0 %v2719
    %v3565 = vpop.f32.mrb[0].mxu0
    %v3566 = vadd.f32 %v3525, %v3565
    %v3567 = vpop.f32.mrb[0].mxu0
    %v3568 = vadd.f32 %v3527, %v3567
    %v3569 = vpop.f32.mrb[0].mxu0
    %v3570 = vpop.f32.mrb[0].mxu0
    %3571 = vdwg.mxu0
    %3572 = vmatprep.subr.bf16.mxu0 %v3237
    %3573 = vmatpush1.bf16.msra.mxu0 %v3236
    %3574 = vmatprep.subr.bf16.mxu0 %v3241
    %3575 = vmatpush1.bf16.msra.mxu0 %v3240
    %3576 = vmatprep.subr.bf16.mxu0 %v3245
    %3577 = vmatpush1.bf16.msra.mxu0 %v3244
    %3578 = vmatprep.subr.bf16.mxu0 %v3249
    %3579 = vmatpush1.bf16.msra.mxu0 %v3248
    %3580 = vmatprep.subr.bf16.mxu0 %v3253
    %3581 = vmatpush1.bf16.msra.mxu0 %v3252
    %3582 = vmatprep.subr.bf16.mxu0 %v3257
    %3583 = vmatpush1.bf16.msra.mxu0 %v3256
    %3584 = vmatprep.subr.bf16.mxu0 %v3261
    %3585 = vmatpush1.bf16.msra.mxu0 %v3260
    %3586 = vmatprep.subr.bf16.mxu0 %v3265
    %3587 = vmatpush1.bf16.msra.mxu0 %v3264
    %3588 = vmatprep.subr.bf16.mxu0 %v3269
    %3589 = vmatpush1.bf16.msra.mxu0 %v3268
    %3590 = vmatprep.subr.bf16.mxu0 %v3273
    %3591 = vmatpush1.bf16.msra.mxu0 %v3272
    %3592 = vmatprep.subr.bf16.mxu0 %v3277
    %3593 = vmatpush1.bf16.msra.mxu0 %v3276
    %3594 = vmatprep.subr.bf16.mxu0 %v3281
    %3595 = vmatpush1.bf16.msra.mxu0 %v3280
    %3596 = vmatprep.subr.bf16.mxu0 %v3285
    %3597 = vmatpush1.bf16.msra.mxu0 %v3284
    %3598 = vmatprep.subr.bf16.mxu0 %v3289
    %3599 = vmatpush1.bf16.msra.mxu0 %v3288
    %3600 = vmatprep.subr.bf16.mxu0 %v3293
    %3601 = vmatpush1.bf16.msra.mxu0 %v3292
    %3602 = vmatprep.subr.bf16.mxu0 %v3297
    %3603 = vmatpush1.bf16.msra.mxu0 %v3296
    %3604 = vmatprep.mubr.bf16.mxu0 %v2718
    %3605 = vmatmul.mubr.bf16.gmra.mrb[0].mxu0 %v2717
    %v3606 = vpop.f32.mrb[0].mxu0
    %v3607 = vadd.f32 0.0, %v3606
    %v3608 = vpop.f32.mrb[0].mxu0
    %v3609 = vadd.f32 0.0, %v3608
    %v3610 = vpop.f32.mrb[0].mxu0
    %v3611 = vpop.f32.mrb[0].mxu0
    %3612 = vdwg.mxu0
    %3613 = vmatprep.subr.bf16.mxu0 %v3301
    %3614 = vmatpush1.bf16.msra.mxu0 %v3300
    %3615 = vmatprep.subr.bf16.mxu0 %v3305
    %3616 = vmatpush1.bf16.msra.mxu0 %v3304
    %3617 = vmatprep.subr.bf16.mxu0 %v3309
    %3618 = vmatpush1.bf16.msra.mxu0 %v3308
    %3619 = vmatprep.subr.bf16.mxu0 %v3313
    %3620 = vmatpush1.bf16.msra.mxu0 %v3312
    %3621 = vmatprep.subr.bf16.mxu0 %v3317
    %3622 = vmatpush1.bf16.msra.mxu0 %v3316
    %3623 = vmatprep.subr.bf16.mxu0 %v3321
    %3624 = vmatpush1.bf16.msra.mxu0 %v3320
    %3625 = vmatprep.subr.bf16.mxu0 %v3325
    %3626 = vmatpush1.bf16.msra.mxu0 %v3324
    %3627 = vmatprep.subr.bf16.mxu0 %v3329
    %3628 = vmatpush1.bf16.msra.mxu0 %v3328
    %3629 = vmatprep.subr.bf16.mxu0 %v3333
    %3630 = vmatpush1.bf16.msra.mxu0 %v3332
    %3631 = vmatprep.subr.bf16.mxu0 %v3337
    %3632 = vmatpush1.bf16.msra.mxu0 %v3336
    %3633 = vmatprep.subr.bf16.mxu0 %v3341
    %3634 = vmatpush1.bf16.msra.mxu0 %v3340
    %3635 = vmatprep.subr.bf16.mxu0 %v3345
    %3636 = vmatpush1.bf16.msra.mxu0 %v3344
    %3637 = vmatprep.subr.bf16.mxu0 %v3349
    %3638 = vmatpush1.bf16.msra.mxu0 %v3348
    %3639 = vmatprep.subr.bf16.mxu0 %v3353
    %3640 = vmatpush1.bf16.msra.mxu0 %v3352
    %3641 = vmatprep.subr.bf16.mxu0 %v3357
    %3642 = vmatpush1.bf16.msra.mxu0 %v3356
    %3643 = vmatprep.subr.bf16.mxu0 %v3361
    %3644 = vmatpush1.bf16.msra.mxu0 %v3360
    %3645 = vmatprep.mubr.bf16.mxu0 %v2720
    %3646 = vmatmul.mubr.bf16.gmra.mrb[0].mxu0 %v2719
    %v3647 = vpop.f32.mrb[0].mxu0
    %v3648 = vadd.f32 %v3607, %v3647
    %v3649 = vpop.f32.mrb[0].mxu0
    %v3650 = vadd.f32 %v3609, %v3649
    %v3651 = vpop.f32.mrb[0].mxu0
    %v3652 = vpop.f32.mrb[0].mxu0
    %3653 = vdwg.mxu0
    %v3654 = vrot.slane %v3566, 4
    %v3655 = vadd.f32 %v3566, %v3654
    %v3656 = vrot.slane %v3655, 2
    %v3657 = vadd.f32 %v3655, %v3656
    %v3658 = vrot.slane %v3657, 1
    %v3659 = vadd.f32 %v3657, %v3658
    %v3660 = vrot.slane %v3568, 4
    %v3661 = vadd.f32 %v3568, %v3660
    %v3662 = vrot.slane %v3661, 2
    %v3663 = vadd.f32 %v3661, %v3662
    %v3664 = vrot.slane %v3663, 1
    %v3665 = vadd.f32 %v3663, %v3664
    %v3666 = vrot.slane %v3648, 4
    %v3667 = vadd.f32 %v3648, %v3666
    %v3668 = vrot.slane %v3667, 2
    %v3669 = vadd.f32 %v3667, %v3668
    %v3670 = vrot.slane %v3669, 1
    %v3671 = vadd.f32 %v3669, %v3670
    %v3672 = vrot.slane %v3650, 4
    %v3673 = vadd.f32 %v3650, %v3672
    %v3674 = vrot.slane %v3673, 2
    %v3675 = vadd.f32 %v3673, %v3674
    %v3676 = vrot.slane %v3675, 1
    %v3677 = vadd.f32 %v3675, %v3676
    %v3678 = vmul.f32 %v3659, %v575
    %v3679 = vmul.f32 %v3665, %v575
    %v3680 = vmul.f32 %v3671, %v575
    %v3681 = vmul.f32 %v3677, %v575
    %v3682 = vsub.f32 %v3566, %v3678
    %v3683 = vsub.f32 %v3568, %v3679
    %v3684 = vsub.f32 %v3648, %v3680
    %v3685 = vsub.f32 %v3650, %v3681
    %v3686 = vmul.f32 %v3682, %v3682
    %v3687 = vmul.f32 %v3683, %v3683
    %v3688 = vmul.f32 %v3684, %v3684
    %v3689 = vmul.f32 %v3685, %v3685
    %v3690 = vrot.slane %v3686, 4
    %v3691 = vadd.f32 %v3686, %v3690
    %v3692 = vrot.slane %v3691, 2
    %v3693 = vadd.f32 %v3691, %v3692
    %v3694 = vrot.slane %v3693, 1
    %v3695 = vadd.f32 %v3693, %v3694
    %v3696 = vrot.slane %v3687, 4
    %v3697 = vadd.f32 %v3687, %v3696
    %v3698 = vrot.slane %v3697, 2
    %v3699 = vadd.f32 %v3697, %v3698
    %v3700 = vrot.slane %v3699, 1
    %v3701 = vadd.f32 %v3699, %v3700
    %v3702 = vrot.slane %v3688, 4
    %v3703 = vadd.f32 %v3688, %v3702
    %v3704 = vrot.slane %v3703, 2
    %v3705 = vadd.f32 %v3703, %v3704
    %v3706 = vrot.slane %v3705, 1
    %v3707 = vadd.f32 %v3705, %v3706
    %v3708 = vrot.slane %v3689, 4
    %v3709 = vadd.f32 %v3689, %v3708
    %v3710 = vrot.slane %v3709, 2
    %v3711 = vadd.f32 %v3709, %v3710
    %v3712 = vrot.slane %v3711, 1
    %v3713 = vadd.f32 %v3711, %v3712
    %v3714 = vmul.f32 %v3695, %v575
    %v3715 = vmul.f32 %v3701, %v575
    %v3716 = vmul.f32 %v3707, %v575
    %v3717 = vmul.f32 %v3713, %v575
    %v3718 = vadd.f32 %v3714, 1e-05
    %v3719 = vadd.f32 %v3715, 1e-05
    %v3720 = vadd.f32 %v3716, 1e-05
    %v3721 = vadd.f32 %v3717, 1e-05
    %v3722 = vrsqrt.pop %v3718
    %v3723 = vrsqrt.pop %v3719
    %v3724 = vrsqrt.pop %v3720
    %v3725 = vrsqrt.pop %v3721
    %v3726 = vmul.f32 %v3682, %v3722
    %v3727 = vmul.f32 %v3683, %v3723
    %v3728 = vmul.f32 %v3684, %v3724
    %v3729 = vmul.f32 %v3685, %v3725
    %v3730 = vmul.f32 %v3726, 0.5
    %v3731 = vmul.f32 %v3727, 0.5
    %v3732 = vmul.f32 %v3728, 0.5
    %v3733 = vmul.f32 %v3729, 0.5
    %v3734 = vmul.f32 %v3726, 0.70710677
    %v3735 = vmul.f32 %v3727, 0.70710677
    %v3736 = vmul.f32 %v3728, 0.70710677
    %v3737 = vmul.f32 %v3729, 0.70710677
    %v3738 = verf.f32.pop %v3734
    %v3739 = verf.f32.pop %v3735
    %v3740 = verf.f32.pop %v3736
    %v3741 = verf.f32.pop %v3737
    %v3742 = vadd.f32 %v3738, 1.0
    %v3743 = vadd.f32 %v3739, 1.0
    %v3744 = vadd.f32 %v3740, 1.0
    %v3745 = vadd.f32 %v3741, 1.0
    %v3746 = vmul.f32 %v3730, %v3742
    %v3747 = vmul.f32 %v3731, %v3743
    %v3748 = vmul.f32 %v3732, %v3744
    %v3749 = vmul.f32 %v3733, %v3745
    %v3750 = vpack.c.bf16 %v3746, %v3746
    %v3751 = vpack.c.bf16 %v3747, %v3747
    %v3752 = vpack.c.bf16 %v3748, %v3748
    %v3753 = vpack.c.bf16 %v3749, %v3749
    %s3754 = scalar_lea.vmem [#allocation4], 3072
    %v3755 = vld [vmem:[%s3754] sm:$0xff]
    %v3756 = vld [vmem:[%s3754 + $0x8] sm:$0xff]
    %v3757 = vld [vmem:[%s3754 + $0x10] sm:$0xff]
    %v3758 = vld [vmem:[%s3754 + $0x18] sm:$0xff]
    %v3759 = vld [vmem:[%s3754 + $0x20] sm:$0xff]
    %v3760 = vld [vmem:[%s3754 + $0x28] sm:$0xff]
    %v3761 = vld [vmem:[%s3754 + $0x30] sm:$0xff]
    %v3762 = vld [vmem:[%s3754 + $0x38] sm:$0xff]
    %v3763 = vld [vmem:[%s3754 + $0x40] sm:$0xff]
    %v3764 = vld [vmem:[%s3754 + $0x48] sm:$0xff]
    %v3765 = vld [vmem:[%s3754 + $0x50] sm:$0xff]
    %v3766 = vld [vmem:[%s3754 + $0x58] sm:$0xff]
    %v3767 = vld [vmem:[%s3754 + $0x60] sm:$0xff]
    %v3768 = vld [vmem:[%s3754 + $0x68] sm:$0xff]
    %v3769 = vld [vmem:[%s3754 + $0x70] sm:$0xff]
    %v3770 = vld [vmem:[%s3754 + $0x78] sm:$0xff]
    %v3771 = vld [vmem:[%s3754 + $0x80] sm:$0xff]
    %v3772 = vld [vmem:[%s3754 + $0x88] sm:$0xff]
    %v3773 = vld [vmem:[%s3754 + $0x90] sm:$0xff]
    %v3774 = vld [vmem:[%s3754 + $0x98] sm:$0xff]
    %v3775 = vld [vmem:[%s3754 + $0xa0] sm:$0xff]
    %v3776 = vld [vmem:[%s3754 + $0xa8] sm:$0xff]
    %v3777 = vld [vmem:[%s3754 + $0xb0] sm:$0xff]
    %v3778 = vld [vmem:[%s3754 + $0xb8] sm:$0xff]
    %v3779 = vld [vmem:[%s3754 + $0xc0] sm:$0xff]
    %v3780 = vld [vmem:[%s3754 + $0xc8] sm:$0xff]
    %v3781 = vld [vmem:[%s3754 + $0xd0] sm:$0xff]
    %v3782 = vld [vmem:[%s3754 + $0xd8] sm:$0xff]
    %v3783 = vld [vmem:[%s3754 + $0xe0] sm:$0xff]
    %v3784 = vld [vmem:[%s3754 + $0xe8] sm:$0xff]
    %v3785 = vld [vmem:[%s3754 + $0xf0] sm:$0xff]
    %v3786 = vld [vmem:[%s3754 + $0xf8] sm:$0xff]
    %v3787 = vld [vmem:[%s3754 + $0x100] sm:$0xff]
    %v3788 = vld [vmem:[%s3754 + $0x108] sm:$0xff]
    %v3789 = vld [vmem:[%s3754 + $0x110] sm:$0xff]
    %v3790 = vld [vmem:[%s3754 + $0x118] sm:$0xff]
    %v3791 = vld [vmem:[%s3754 + $0x120] sm:$0xff]
    %v3792 = vld [vmem:[%s3754 + $0x128] sm:$0xff]
    %v3793 = vld [vmem:[%s3754 + $0x130] sm:$0xff]
    %v3794 = vld [vmem:[%s3754 + $0x138] sm:$0xff]
    %v3795 = vld [vmem:[%s3754 + $0x140] sm:$0xff]
    %v3796 = vld [vmem:[%s3754 + $0x148] sm:$0xff]
    %v3797 = vld [vmem:[%s3754 + $0x150] sm:$0xff]
    %v3798 = vld [vmem:[%s3754 + $0x158] sm:$0xff]
    %v3799 = vld [vmem:[%s3754 + $0x160] sm:$0xff]
    %v3800 = vld [vmem:[%s3754 + $0x168] sm:$0xff]
    %v3801 = vld [vmem:[%s3754 + $0x170] sm:$0xff]
    %v3802 = vld [vmem:[%s3754 + $0x178] sm:$0xff]
    %v3803 = vld [vmem:[%s3754 + $0x180] sm:$0xff]
    %v3804 = vld [vmem:[%s3754 + $0x188] sm:$0xff]
    %v3805 = vld [vmem:[%s3754 + $0x190] sm:$0xff]
    %v3806 = vld [vmem:[%s3754 + $0x198] sm:$0xff]
    %v3807 = vld [vmem:[%s3754 + $0x1a0] sm:$0xff]
    %v3808 = vld [vmem:[%s3754 + $0x1a8] sm:$0xff]
    %v3809 = vld [vmem:[%s3754 + $0x1b0] sm:$0xff]
    %v3810 = vld [vmem:[%s3754 + $0x1b8] sm:$0xff]
    %v3811 = vld [vmem:[%s3754 + $0x1c0] sm:$0xff]
    %v3812 = vld [vmem:[%s3754 + $0x1c8] sm:$0xff]
    %v3813 = vld [vmem:[%s3754 + $0x1d0] sm:$0xff]
    %v3814 = vld [vmem:[%s3754 + $0x1d8] sm:$0xff]
    %v3815 = vld [vmem:[%s3754 + $0x1e0] sm:$0xff]
    %v3816 = vld [vmem:[%s3754 + $0x1e8] sm:$0xff]
    %v3817 = vld [vmem:[%s3754 + $0x1f0] sm:$0xff]
    %v3818 = vld [vmem:[%s3754 + $0x1f8] sm:$0xff]
    %v3819 = vld [vmem:[%s3754 + $0x200] sm:$0xff]
    %v3820 = vld [vmem:[%s3754 + $0x208] sm:$0xff]
    %v3821 = vld [vmem:[%s3754 + $0x210] sm:$0xff]
    %v3822 = vld [vmem:[%s3754 + $0x218] sm:$0xff]
    %v3823 = vld [vmem:[%s3754 + $0x220] sm:$0xff]
    %v3824 = vld [vmem:[%s3754 + $0x228] sm:$0xff]
    %v3825 = vld [vmem:[%s3754 + $0x230] sm:$0xff]
    %v3826 = vld [vmem:[%s3754 + $0x238] sm:$0xff]
    %v3827 = vld [vmem:[%s3754 + $0x240] sm:$0xff]
    %v3828 = vld [vmem:[%s3754 + $0x248] sm:$0xff]
    %v3829 = vld [vmem:[%s3754 + $0x250] sm:$0xff]
    %v3830 = vld [vmem:[%s3754 + $0x258] sm:$0xff]
    %v3831 = vld [vmem:[%s3754 + $0x260] sm:$0xff]
    %v3832 = vld [vmem:[%s3754 + $0x268] sm:$0xff]
    %v3833 = vld [vmem:[%s3754 + $0x270] sm:$0xff]
    %v3834 = vld [vmem:[%s3754 + $0x278] sm:$0xff]
    %v3835 = vld [vmem:[%s3754 + $0x280] sm:$0xff]
    %v3836 = vld [vmem:[%s3754 + $0x288] sm:$0xff]
    %v3837 = vld [vmem:[%s3754 + $0x290] sm:$0xff]
    %v3838 = vld [vmem:[%s3754 + $0x298] sm:$0xff]
    %v3839 = vld [vmem:[%s3754 + $0x2a0] sm:$0xff]
    %v3840 = vld [vmem:[%s3754 + $0x2a8] sm:$0xff]
    %v3841 = vld [vmem:[%s3754 + $0x2b0] sm:$0xff]
    %v3842 = vld [vmem:[%s3754 + $0x2b8] sm:$0xff]
    %v3843 = vld [vmem:[%s3754 + $0x2c0] sm:$0xff]
    %v3844 = vld [vmem:[%s3754 + $0x2c8] sm:$0xff]
    %v3845 = vld [vmem:[%s3754 + $0x2d0] sm:$0xff]
    %v3846 = vld [vmem:[%s3754 + $0x2d8] sm:$0xff]
    %v3847 = vld [vmem:[%s3754 + $0x2e0] sm:$0xff]
    %v3848 = vld [vmem:[%s3754 + $0x2e8] sm:$0xff]
    %v3849 = vld [vmem:[%s3754 + $0x2f0] sm:$0xff]
    %v3850 = vld [vmem:[%s3754 + $0x2f8] sm:$0xff]
    %v3851 = vld [vmem:[%s3754 + $0x300] sm:$0xff]
    %v3852 = vld [vmem:[%s3754 + $0x308] sm:$0xff]
    %v3853 = vld [vmem:[%s3754 + $0x310] sm:$0xff]
    %v3854 = vld [vmem:[%s3754 + $0x318] sm:$0xff]
    %v3855 = vld [vmem:[%s3754 + $0x320] sm:$0xff]
    %v3856 = vld [vmem:[%s3754 + $0x328] sm:$0xff]
    %v3857 = vld [vmem:[%s3754 + $0x330] sm:$0xff]
    %v3858 = vld [vmem:[%s3754 + $0x338] sm:$0xff]
    %v3859 = vld [vmem:[%s3754 + $0x340] sm:$0xff]
    %v3860 = vld [vmem:[%s3754 + $0x348] sm:$0xff]
    %v3861 = vld [vmem:[%s3754 + $0x350] sm:$0xff]
    %v3862 = vld [vmem:[%s3754 + $0x358] sm:$0xff]
    %v3863 = vld [vmem:[%s3754 + $0x360] sm:$0xff]
    %v3864 = vld [vmem:[%s3754 + $0x368] sm:$0xff]
    %v3865 = vld [vmem:[%s3754 + $0x370] sm:$0xff]
    %v3866 = vld [vmem:[%s3754 + $0x378] sm:$0xff]
    %v3867 = vld [vmem:[%s3754 + $0x380] sm:$0xff]
    %v3868 = vld [vmem:[%s3754 + $0x388] sm:$0xff]
    %v3869 = vld [vmem:[%s3754 + $0x390] sm:$0xff]
    %v3870 = vld [vmem:[%s3754 + $0x398] sm:$0xff]
    %v3871 = vld [vmem:[%s3754 + $0x3a0] sm:$0xff]
    %v3872 = vld [vmem:[%s3754 + $0x3a8] sm:$0xff]
    %v3873 = vld [vmem:[%s3754 + $0x3b0] sm:$0xff]
    %v3874 = vld [vmem:[%s3754 + $0x3b8] sm:$0xff]
    %v3875 = vld [vmem:[%s3754 + $0x3c0] sm:$0xff]
    %v3876 = vld [vmem:[%s3754 + $0x3c8] sm:$0xff]
    %v3877 = vld [vmem:[%s3754 + $0x3d0] sm:$0xff]
    %v3878 = vld [vmem:[%s3754 + $0x3d8] sm:$0xff]
    %v3879 = vld [vmem:[%s3754 + $0x3e0] sm:$0xff]
    %v3880 = vld [vmem:[%s3754 + $0x3e8] sm:$0xff]
    %v3881 = vld [vmem:[%s3754 + $0x3f0] sm:$0xff]
    %v3882 = vld [vmem:[%s3754 + $0x3f8] sm:$0xff]
    %v4011 = vunpack.c.l.b16 %v3755
    %v4012 = vunpack.c.h.b16 %v3755
    %v4013 = vunpack.c.l.b16 %v3756
    %v4014 = vunpack.c.h.b16 %v3756
    %v4015 = vunpack.c.l.b16 %v3757
    %v4016 = vunpack.c.h.b16 %v3757
    %v4017 = vunpack.c.l.b16 %v3758
    %v4018 = vunpack.c.h.b16 %v3758
    %v4019 = vunpack.c.l.b16 %v3759
    %v4020 = vunpack.c.h.b16 %v3759
    %v4021 = vunpack.c.l.b16 %v3760
    %v4022 = vunpack.c.h.b16 %v3760
    %v4023 = vunpack.c.l.b16 %v3761
    %v4024 = vunpack.c.h.b16 %v3761
    %v4025 = vunpack.c.l.b16 %v3762
    %v4026 = vunpack.c.h.b16 %v3762
    %v4027 = vunpack.c.l.b16 %v3763
    %v4028 = vunpack.c.h.b16 %v3763
    %v4029 = vunpack.c.l.b16 %v3764
    %v4030 = vunpack.c.h.b16 %v3764
    %v4031 = vunpack.c.l.b16 %v3765
    %v4032 = vunpack.c.h.b16 %v3765
    %v4033 = vunpack.c.l.b16 %v3766
    %v4034 = vunpack.c.h.b16 %v3766
    %v4035 = vunpack.c.l.b16 %v3767
    %v4036 = vunpack.c.h.b16 %v3767
    %v4037 = vunpack.c.l.b16 %v3768
    %v4038 = vunpack.c.h.b16 %v3768
    %v4039 = vunpack.c.l.b16 %v3769
    %v4040 = vunpack.c.h.b16 %v3769
    %v4041 = vunpack.c.l.b16 %v3770
    %v4042 = vunpack.c.h.b16 %v3770
    %v4043 = vunpack.c.l.b16 %v3771
    %v4044 = vunpack.c.h.b16 %v3771
    %v4045 = vunpack.c.l.b16 %v3772
    %v4046 = vunpack.c.h.b16 %v3772
    %v4047 = vunpack.c.l.b16 %v3773
    %v4048 = vunpack.c.h.b16 %v3773
    %v4049 = vunpack.c.l.b16 %v3774
    %v4050 = vunpack.c.h.b16 %v3774
    %v4051 = vunpack.c.l.b16 %v3775
    %v4052 = vunpack.c.h.b16 %v3775
    %v4053 = vunpack.c.l.b16 %v3776
    %v4054 = vunpack.c.h.b16 %v3776
    %v4055 = vunpack.c.l.b16 %v3777
    %v4056 = vunpack.c.h.b16 %v3777
    %v4057 = vunpack.c.l.b16 %v3778
    %v4058 = vunpack.c.h.b16 %v3778
    %v4059 = vunpack.c.l.b16 %v3779
    %v4060 = vunpack.c.h.b16 %v3779
    %v4061 = vunpack.c.l.b16 %v3780
    %v4062 = vunpack.c.h.b16 %v3780
    %v4063 = vunpack.c.l.b16 %v3781
    %v4064 = vunpack.c.h.b16 %v3781
    %v4065 = vunpack.c.l.b16 %v3782
    %v4066 = vunpack.c.h.b16 %v3782
    %v4067 = vunpack.c.l.b16 %v3783
    %v4068 = vunpack.c.h.b16 %v3783
    %v4069 = vunpack.c.l.b16 %v3784
    %v4070 = vunpack.c.h.b16 %v3784
    %v4071 = vunpack.c.l.b16 %v3785
    %v4072 = vunpack.c.h.b16 %v3785
    %v4073 = vunpack.c.l.b16 %v3786
    %v4074 = vunpack.c.h.b16 %v3786
    %v4075 = vunpack.c.l.b16 %v3787
    %v4076 = vunpack.c.h.b16 %v3787
    %v4077 = vunpack.c.l.b16 %v3788
    %v4078 = vunpack.c.h.b16 %v3788
    %v4079 = vunpack.c.l.b16 %v3789
    %v4080 = vunpack.c.h.b16 %v3789
    %v4081 = vunpack.c.l.b16 %v3790
    %v4082 = vunpack.c.h.b16 %v3790
    %v4083 = vunpack.c.l.b16 %v3791
    %v4084 = vunpack.c.h.b16 %v3791
    %v4085 = vunpack.c.l.b16 %v3792
    %v4086 = vunpack.c.h.b16 %v3792
    %v4087 = vunpack.c.l.b16 %v3793
    %v4088 = vunpack.c.h.b16 %v3793
    %v4089 = vunpack.c.l.b16 %v3794
    %v4090 = vunpack.c.h.b16 %v3794
    %v4091 = vunpack.c.l.b16 %v3795
    %v4092 = vunpack.c.h.b16 %v3795
    %v4093 = vunpack.c.l.b16 %v3796
    %v4094 = vunpack.c.h.b16 %v3796
    %v4095 = vunpack.c.l.b16 %v3797
    %v4096 = vunpack.c.h.b16 %v3797
    %v4097 = vunpack.c.l.b16 %v3798
    %v4098 = vunpack.c.h.b16 %v3798
    %v4099 = vunpack.c.l.b16 %v3799
    %v4100 = vunpack.c.h.b16 %v3799
    %v4101 = vunpack.c.l.b16 %v3800
    %v4102 = vunpack.c.h.b16 %v3800
    %v4103 = vunpack.c.l.b16 %v3801
    %v4104 = vunpack.c.h.b16 %v3801
    %v4105 = vunpack.c.l.b16 %v3802
    %v4106 = vunpack.c.h.b16 %v3802
    %v4107 = vunpack.c.l.b16 %v3803
    %v4108 = vunpack.c.h.b16 %v3803
    %v4109 = vunpack.c.l.b16 %v3804
    %v4110 = vunpack.c.h.b16 %v3804
    %v4111 = vunpack.c.l.b16 %v3805
    %v4112 = vunpack.c.h.b16 %v3805
    %v4113 = vunpack.c.l.b16 %v3806
    %v4114 = vunpack.c.h.b16 %v3806
    %v4115 = vunpack.c.l.b16 %v3807
    %v4116 = vunpack.c.h.b16 %v3807
    %v4117 = vunpack.c.l.b16 %v3808
    %v4118 = vunpack.c.h.b16 %v3808
    %v4119 = vunpack.c.l.b16 %v3809
    %v4120 = vunpack.c.h.b16 %v3809
    %v4121 = vunpack.c.l.b16 %v3810
    %v4122 = vunpack.c.h.b16 %v3810
    %v4123 = vunpack.c.l.b16 %v3811
    %v4124 = vunpack.c.h.b16 %v3811
    %v4125 = vunpack.c.l.b16 %v3812
    %v4126 = vunpack.c.h.b16 %v3812
    %v4127 = vunpack.c.l.b16 %v3813
    %v4128 = vunpack.c.h.b16 %v3813
    %v4129 = vunpack.c.l.b16 %v3814
    %v4130 = vunpack.c.h.b16 %v3814
    %v4131 = vunpack.c.l.b16 %v3815
    %v4132 = vunpack.c.h.b16 %v3815
    %v4133 = vunpack.c.l.b16 %v3816
    %v4134 = vunpack.c.h.b16 %v3816
    %v4135 = vunpack.c.l.b16 %v3817
    %v4136 = vunpack.c.h.b16 %v3817
    %v4137 = vunpack.c.l.b16 %v3818
    %v4138 = vunpack.c.h.b16 %v3818
    %v4139 = vunpack.c.l.b16 %v3819
    %v4140 = vunpack.c.h.b16 %v3819
    %v4141 = vunpack.c.l.b16 %v3820
    %v4142 = vunpack.c.h.b16 %v3820
    %v4143 = vunpack.c.l.b16 %v3821
    %v4144 = vunpack.c.h.b16 %v3821
    %v4145 = vunpack.c.l.b16 %v3822
    %v4146 = vunpack.c.h.b16 %v3822
    %v4147 = vunpack.c.l.b16 %v3823
    %v4148 = vunpack.c.h.b16 %v3823
    %v4149 = vunpack.c.l.b16 %v3824
    %v4150 = vunpack.c.h.b16 %v3824
    %v4151 = vunpack.c.l.b16 %v3825
    %v4152 = vunpack.c.h.b16 %v3825
    %v4153 = vunpack.c.l.b16 %v3826
    %v4154 = vunpack.c.h.b16 %v3826
    %v4155 = vunpack.c.l.b16 %v3827
    %v4156 = vunpack.c.h.b16 %v3827
    %v4157 = vunpack.c.l.b16 %v3828
    %v4158 = vunpack.c.h.b16 %v3828
    %v4159 = vunpack.c.l.b16 %v3829
    %v4160 = vunpack.c.h.b16 %v3829
    %v4161 = vunpack.c.l.b16 %v3830
    %v4162 = vunpack.c.h.b16 %v3830
    %v4163 = vunpack.c.l.b16 %v3831
    %v4164 = vunpack.c.h.b16 %v3831
    %v4165 = vunpack.c.l.b16 %v3832
    %v4166 = vunpack.c.h.b16 %v3832
    %v4167 = vunpack.c.l.b16 %v3833
    %v4168 = vunpack.c.h.b16 %v3833
    %v4169 = vunpack.c.l.b16 %v3834
    %v4170 = vunpack.c.h.b16 %v3834
    %v4171 = vunpack.c.l.b16 %v3835
    %v4172 = vunpack.c.h.b16 %v3835
    %v4173 = vunpack.c.l.b16 %v3836
    %v4174 = vunpack.c.h.b16 %v3836
    %v4175 = vunpack.c.l.b16 %v3837
    %v4176 = vunpack.c.h.b16 %v3837
    %v4177 = vunpack.c.l.b16 %v3838
    %v4178 = vunpack.c.h.b16 %v3838
    %v4179 = vunpack.c.l.b16 %v3839
    %v4180 = vunpack.c.h.b16 %v3839
    %v4181 = vunpack.c.l.b16 %v3840
    %v4182 = vunpack.c.h.b16 %v3840
    %v4183 = vunpack.c.l.b16 %v3841
    %v4184 = vunpack.c.h.b16 %v3841
    %v4185 = vunpack.c.l.b16 %v3842
    %v4186 = vunpack.c.h.b16 %v3842
    %v4187 = vunpack.c.l.b16 %v3843
    %v4188 = vunpack.c.h.b16 %v3843
    %v4189 = vunpack.c.l.b16 %v3844
    %v4190 = vunpack.c.h.b16 %v3844
    %v4191 = vunpack.c.l.b16 %v3845
    %v4192 = vunpack.c.h.b16 %v3845
    %v4193 = vunpack.c.l.b16 %v3846
    %v4194 = vunpack.c.h.b16 %v3846
    %v4195 = vunpack.c.l.b16 %v3847
    %v4196 = vunpack.c.h.b16 %v3847
    %v4197 = vunpack.c.l.b16 %v3848
    %v4198 = vunpack.c.h.b16 %v3848
    %v4199 = vunpack.c.l.b16 %v3849
    %v4200 = vunpack.c.h.b16 %v3849
    %v4201 = vunpack.c.l.b16 %v3850
    %v4202 = vunpack.c.h.b16 %v3850
    %v4203 = vunpack.c.l.b16 %v3851
    %v4204 = vunpack.c.h.b16 %v3851
    %v4205 = vunpack.c.l.b16 %v3852
    %v4206 = vunpack.c.h.b16 %v3852
    %v4207 = vunpack.c.l.b16 %v3853
    %v4208 = vunpack.c.h.b16 %v3853
    %v4209 = vunpack.c.l.b16 %v3854
    %v4210 = vunpack.c.h.b16 %v3854
    %v4211 = vunpack.c.l.b16 %v3855
    %v4212 = vunpack.c.h.b16 %v3855
    %v4213 = vunpack.c.l.b16 %v3856
    %v4214 = vunpack.c.h.b16 %v3856
    %v4215 = vunpack.c.l.b16 %v3857
    %v4216 = vunpack.c.h.b16 %v3857
    %v4217 = vunpack.c.l.b16 %v3858
    %v4218 = vunpack.c.h.b16 %v3858
    %v4219 = vunpack.c.l.b16 %v3859
    %v4220 = vunpack.c.h.b16 %v3859
    %v4221 = vunpack.c.l.b16 %v3860
    %v4222 = vunpack.c.h.b16 %v3860
    %v4223 = vunpack.c.l.b16 %v3861
    %v4224 = vunpack.c.h.b16 %v3861
    %v4225 = vunpack.c.l.b16 %v3862
    %v4226 = vunpack.c.h.b16 %v3862
    %v4227 = vunpack.c.l.b16 %v3863
    %v4228 = vunpack.c.h.b16 %v3863
    %v4229 = vunpack.c.l.b16 %v3864
    %v4230 = vunpack.c.h.b16 %v3864
    %v4231 = vunpack.c.l.b16 %v3865
    %v4232 = vunpack.c.h.b16 %v3865
    %v4233 = vunpack.c.l.b16 %v3866
    %v4234 = vunpack.c.h.b16 %v3866
    %v4235 = vunpack.c.l.b16 %v3867
    %v4236 = vunpack.c.h.b16 %v3867
    %v4237 = vunpack.c.l.b16 %v3868
    %v4238 = vunpack.c.h.b16 %v3868
    %v4239 = vunpack.c.l.b16 %v3869
    %v4240 = vunpack.c.h.b16 %v3869
    %v4241 = vunpack.c.l.b16 %v3870
    %v4242 = vunpack.c.h.b16 %v3870
    %v4243 = vunpack.c.l.b16 %v3871
    %v4244 = vunpack.c.h.b16 %v3871
    %v4245 = vunpack.c.l.b16 %v3872
    %v4246 = vunpack.c.h.b16 %v3872
    %v4247 = vunpack.c.l.b16 %v3873
    %v4248 = vunpack.c.h.b16 %v3873
    %v4249 = vunpack.c.l.b16 %v3874
    %v4250 = vunpack.c.h.b16 %v3874
    %v4251 = vunpack.c.l.b16 %v3875
    %v4252 = vunpack.c.h.b16 %v3875
    %v4253 = vunpack.c.l.b16 %v3876
    %v4254 = vunpack.c.h.b16 %v3876
    %v4255 = vunpack.c.l.b16 %v3877
    %v4256 = vunpack.c.h.b16 %v3877
    %v4257 = vunpack.c.l.b16 %v3878
    %v4258 = vunpack.c.h.b16 %v3878
    %v4259 = vunpack.c.l.b16 %v3879
    %v4260 = vunpack.c.h.b16 %v3879
    %v4261 = vunpack.c.l.b16 %v3880
    %v4262 = vunpack.c.h.b16 %v3880
    %v4263 = vunpack.c.l.b16 %v3881
    %v4264 = vunpack.c.h.b16 %v3881
    %v4265 = vunpack.c.l.b16 %v3882
    %v4266 = vunpack.c.h.b16 %v3882
    %v4267 = vpack.c.b16 %v4015, %v4011
    %v4268 = vpack.c.b16 %v4016, %v4012
    %v4269 = vpack.c.b16 %v4017, %v4013
    %v4270 = vpack.c.b16 %v4018, %v4014
    %v4271 = vpack.c.b16 %v4023, %v4019
    %v4272 = vpack.c.b16 %v4024, %v4020
    %v4273 = vpack.c.b16 %v4025, %v4021
    %v4274 = vpack.c.b16 %v4026, %v4022
    %v4275 = vpack.c.b16 %v4031, %v4027
    %v4276 = vpack.c.b16 %v4032, %v4028
    %v4277 = vpack.c.b16 %v4033, %v4029
    %v4278 = vpack.c.b16 %v4034, %v4030
    %v4279 = vpack.c.b16 %v4039, %v4035
    %v4280 = vpack.c.b16 %v4040, %v4036
    %v4281 = vpack.c.b16 %v4041, %v4037
    %v4282 = vpack.c.b16 %v4042, %v4038
    %v4283 = vpack.c.b16 %v4047, %v4043
    %v4284 = vpack.c.b16 %v4048, %v4044
    %v4285 = vpack.c.b16 %v4049, %v4045
    %v4286 = vpack.c.b16 %v4050, %v4046
    %v4287 = vpack.c.b16 %v4055, %v4051
    %v4288 = vpack.c.b16 %v4056, %v4052
    %v4289 = vpack.c.b16 %v4057, %v4053
    %v4290 = vpack.c.b16 %v4058, %v4054
    %v4291 = vpack.c.b16 %v4063, %v4059
    %v4292 = vpack.c.b16 %v4064, %v4060
    %v4293 = vpack.c.b16 %v4065, %v4061
    %v4294 = vpack.c.b16 %v4066, %v4062
    %v4295 = vpack.c.b16 %v4071, %v4067
    %v4296 = vpack.c.b16 %v4072, %v4068
    %v4297 = vpack.c.b16 %v4073, %v4069
    %v4298 = vpack.c.b16 %v4074, %v4070
    %v4299 = vpack.c.b16 %v4079, %v4075
    %v4300 = vpack.c.b16 %v4080, %v4076
    %v4301 = vpack.c.b16 %v4081, %v4077
    %v4302 = vpack.c.b16 %v4082, %v4078
    %v4303 = vpack.c.b16 %v4087, %v4083
    %v4304 = vpack.c.b16 %v4088, %v4084
    %v4305 = vpack.c.b16 %v4089, %v4085
    %v4306 = vpack.c.b16 %v4090, %v4086
    %v4307 = vpack.c.b16 %v4095, %v4091
    %v4308 = vpack.c.b16 %v4096, %v4092
    %v4309 = vpack.c.b16 %v4097, %v4093
    %v4310 = vpack.c.b16 %v4098, %v4094
    %v4311 = vpack.c.b16 %v4103, %v4099
    %v4312 = vpack.c.b16 %v4104, %v4100
    %v4313 = vpack.c.b16 %v4105, %v4101
    %v4314 = vpack.c.b16 %v4106, %v4102
    %v4315 = vpack.c.b16 %v4111, %v4107
    %v4316 = vpack.c.b16 %v4112, %v4108
    %v4317 = vpack.c.b16 %v4113, %v4109
    %v4318 = vpack.c.b16 %v4114, %v4110
    %v4319 = vpack.c.b16 %v4119, %v4115
    %v4320 = vpack.c.b16 %v4120, %v4116
    %v4321 = vpack.c.b16 %v4121, %v4117
    %v4322 = vpack.c.b16 %v4122, %v4118
    %v4323 = vpack.c.b16 %v4127, %v4123
    %v4324 = vpack.c.b16 %v4128, %v4124
    %v4325 = vpack.c.b16 %v4129, %v4125
    %v4326 = vpack.c.b16 %v4130, %v4126
    %v4327 = vpack.c.b16 %v4135, %v4131
    %v4328 = vpack.c.b16 %v4136, %v4132
    %v4329 = vpack.c.b16 %v4137, %v4133
    %v4330 = vpack.c.b16 %v4138, %v4134
    %v4331 = vpack.c.b16 %v4143, %v4139
    %v4332 = vpack.c.b16 %v4144, %v4140
    %v4333 = vpack.c.b16 %v4145, %v4141
    %v4334 = vpack.c.b16 %v4146, %v4142
    %v4335 = vpack.c.b16 %v4151, %v4147
    %v4336 = vpack.c.b16 %v4152, %v4148
    %v4337 = vpack.c.b16 %v4153, %v4149
    %v4338 = vpack.c.b16 %v4154, %v4150
    %v4339 = vpack.c.b16 %v4159, %v4155
    %v4340 = vpack.c.b16 %v4160, %v4156
    %v4341 = vpack.c.b16 %v4161, %v4157
    %v4342 = vpack.c.b16 %v4162, %v4158
    %v4343 = vpack.c.b16 %v4167, %v4163
    %v4344 = vpack.c.b16 %v4168, %v4164
    %v4345 = vpack.c.b16 %v4169, %v4165
    %v4346 = vpack.c.b16 %v4170, %v4166
    %v4347 = vpack.c.b16 %v4175, %v4171
    %v4348 = vpack.c.b16 %v4176, %v4172
    %v4349 = vpack.c.b16 %v4177, %v4173
    %v4350 = vpack.c.b16 %v4178, %v4174
    %v4351 = vpack.c.b16 %v4183, %v4179
    %v4352 = vpack.c.b16 %v4184, %v4180
    %v4353 = vpack.c.b16 %v4185, %v4181
    %v4354 = vpack.c.b16 %v4186, %v4182
    %v4355 = vpack.c.b16 %v4191, %v4187
    %v4356 = vpack.c.b16 %v4192, %v4188
    %v4357 = vpack.c.b16 %v4193, %v4189
    %v4358 = vpack.c.b16 %v4194, %v4190
    %v4359 = vpack.c.b16 %v4199, %v4195
    %v4360 = vpack.c.b16 %v4200, %v4196
    %v4361 = vpack.c.b16 %v4201, %v4197
    %v4362 = vpack.c.b16 %v4202, %v4198
    %v4363 = vpack.c.b16 %v4207, %v4203
    %v4364 = vpack.c.b16 %v4208, %v4204
    %v4365 = vpack.c.b16 %v4209, %v4205
    %v4366 = vpack.c.b16 %v4210, %v4206
    %v4367 = vpack.c.b16 %v4215, %v4211
    %v4368 = vpack.c.b16 %v4216, %v4212
    %v4369 = vpack.c.b16 %v4217, %v4213
    %v4370 = vpack.c.b16 %v4218, %v4214
    %v4371 = vpack.c.b16 %v4223, %v4219
    %v4372 = vpack.c.b16 %v4224, %v4220
    %v4373 = vpack.c.b16 %v4225, %v4221
    %v4374 = vpack.c.b16 %v4226, %v4222
    %v4375 = vpack.c.b16 %v4231, %v4227
    %v4376 = vpack.c.b16 %v4232, %v4228
    %v4377 = vpack.c.b16 %v4233, %v4229
    %v4378 = vpack.c.b16 %v4234, %v4230
    %v4379 = vpack.c.b16 %v4239, %v4235
    %v4380 = vpack.c.b16 %v4240, %v4236
    %v4381 = vpack.c.b16 %v4241, %v4237
    %v4382 = vpack.c.b16 %v4242, %v4238
    %v4383 = vpack.c.b16 %v4247, %v4243
    %v4384 = vpack.c.b16 %v4248, %v4244
    %v4385 = vpack.c.b16 %v4249, %v4245
    %v4386 = vpack.c.b16 %v4250, %v4246
    %v4387 = vpack.c.b16 %v4255, %v4251
    %v4388 = vpack.c.b16 %v4256, %v4252
    %v4389 = vpack.c.b16 %v4257, %v4253
    %v4390 = vpack.c.b16 %v4258, %v4254
    %v4391 = vpack.c.b16 %v4263, %v4259
    %v4392 = vpack.c.b16 %v4264, %v4260
    %v4393 = vpack.c.b16 %v4265, %v4261
    %v4394 = vpack.c.b16 %v4266, %v4262
    %4523 = vmatprep.subr.bf16.mxu0 %v4268
    %4524 = vmatpush1.bf16.msra.mxu0 %v4267
    %4525 = vmatprep.subr.bf16.mxu0 %v4272
    %4526 = vmatpush1.bf16.msra.mxu0 %v4271
    %4527 = vmatprep.subr.bf16.mxu0 %v4276
    %4528 = vmatpush1.bf16.msra.mxu0 %v4275
    %4529 = vmatprep.subr.bf16.mxu0 %v4280
    %4530 = vmatpush1.bf16.msra.mxu0 %v4279
    %4531 = vmatprep.subr.bf16.mxu0 %v4284
    %4532 = vmatpush1.bf16.msra.mxu0 %v4283
    %4533 = vmatprep.subr.bf16.mxu0 %v4288
    %4534 = vmatpush1.bf16.msra.mxu0 %v4287
    %4535 = vmatprep.subr.bf16.mxu0 %v4292
    %4536 = vmatpush1.bf16.msra.mxu0 %v4291
    %4537 = vmatprep.subr.bf16.mxu0 %v4296
    %4538 = vmatpush1.bf16.msra.mxu0 %v4295
    %4539 = vmatprep.subr.bf16.mxu0 %v4300
    %4540 = vmatpush1.bf16.msra.mxu0 %v4299
    %4541 = vmatprep.subr.bf16.mxu0 %v4304
    %4542 = vmatpush1.bf16.msra.mxu0 %v4303
    %4543 = vmatprep.subr.bf16.mxu0 %v4308
    %4544 = vmatpush1.bf16.msra.mxu0 %v4307
    %4545 = vmatprep.subr.bf16.mxu0 %v4312
    %4546 = vmatpush1.bf16.msra.mxu0 %v4311
    %4547 = vmatprep.subr.bf16.mxu0 %v4316
    %4548 = vmatpush1.bf16.msra.mxu0 %v4315
    %4549 = vmatprep.subr.bf16.mxu0 %v4320
    %4550 = vmatpush1.bf16.msra.mxu0 %v4319
    %4551 = vmatprep.subr.bf16.mxu0 %v4324
    %4552 = vmatpush1.bf16.msra.mxu0 %v4323
    %4553 = vmatprep.subr.bf16.mxu0 %v4328
    %4554 = vmatpush1.bf16.msra.mxu0 %v4327
    %4555 = vmatprep.mubr.bf16.mxu0 %v3751
    %4556 = vmatmul.mubr.bf16.gmra.mrb[0].mxu0 %v3750
    %v4557 = vpop.f32.mrb[0].mxu0
    %v4558 = vadd.f32 0.0, %v4557
    %v4559 = vpop.f32.mrb[0].mxu0
    %v4560 = vadd.f32 0.0, %v4559
    %v4561 = vpop.f32.mrb[0].mxu0
    %v4562 = vpop.f32.mrb[0].mxu0
    %4563 = vdwg.mxu0
    %4564 = vmatprep.subr.bf16.mxu0 %v4332
    %4565 = vmatpush1.bf16.msra.mxu0 %v4331
    %4566 = vmatprep.subr.bf16.mxu0 %v4336
    %4567 = vmatpush1.bf16.msra.mxu0 %v4335
    %4568 = vmatprep.subr.bf16.mxu0 %v4340
    %4569 = vmatpush1.bf16.msra.mxu0 %v4339
    %4570 = vmatprep.subr.bf16.mxu0 %v4344
    %4571 = vmatpush1.bf16.msra.mxu0 %v4343
    %4572 = vmatprep.subr.bf16.mxu0 %v4348
    %4573 = vmatpush1.bf16.msra.mxu0 %v4347
    %4574 = vmatprep.subr.bf16.mxu0 %v4352
    %4575 = vmatpush1.bf16.msra.mxu0 %v4351
    %4576 = vmatprep.subr.bf16.mxu0 %v4356
    %4577 = vmatpush1.bf16.msra.mxu0 %v4355
    %4578 = vmatprep.subr.bf16.mxu0 %v4360
    %4579 = vmatpush1.bf16.msra.mxu0 %v4359
    %4580 = vmatprep.subr.bf16.mxu0 %v4364
    %4581 = vmatpush1.bf16.msra.mxu0 %v4363
    %4582 = vmatprep.subr.bf16.mxu0 %v4368
    %4583 = vmatpush1.bf16.msra.mxu0 %v4367
    %4584 = vmatprep.subr.bf16.mxu0 %v4372
    %4585 = vmatpush1.bf16.msra.mxu0 %v4371
    %4586 = vmatprep.subr.bf16.mxu0 %v4376
    %4587 = vmatpush1.bf16.msra.mxu0 %v4375
    %4588 = vmatprep.subr.bf16.mxu0 %v4380
    %4589 = vmatpush1.bf16.msra.mxu0 %v4379
    %4590 = vmatprep.subr.bf16.mxu0 %v4384
    %4591 = vmatpush1.bf16.msra.mxu0 %v4383
    %4592 = vmatprep.subr.bf16.mxu0 %v4388
    %4593 = vmatpush1.bf16.msra.mxu0 %v4387
    %4594 = vmatprep.subr.bf16.mxu0 %v4392
    %4595 = vmatpush1.bf16.msra.mxu0 %v4391
    %4596 = vmatprep.mubr.bf16.mxu0 %v3753
    %4597 = vmatmul.mubr.bf16.gmra.mrb[0].mxu0 %v3752
    %v4598 = vpop.f32.mrb[0].mxu0
    %v4599 = vadd.f32 %v4558, %v4598
    %v4600 = vpop.f32.mrb[0].mxu0
    %v4601 = vadd.f32 %v4560, %v4600
    %v4602 = vpop.f32.mrb[0].mxu0
    %v4603 = vpop.f32.mrb[0].mxu0
    %4604 = vdwg.mxu0
    %4605 = vmatprep.subr.bf16.mxu0 %v4270
    %4606 = vmatpush1.bf16.msra.mxu0 %v4269
    %4607 = vmatprep.subr.bf16.mxu0 %v4274
    %4608 = vmatpush1.bf16.msra.mxu0 %v4273
    %4609 = vmatprep.subr.bf16.mxu0 %v4278
    %4610 = vmatpush1.bf16.msra.mxu0 %v4277
    %4611 = vmatprep.subr.bf16.mxu0 %v4282
    %4612 = vmatpush1.bf16.msra.mxu0 %v4281
    %4613 = vmatprep.subr.bf16.mxu0 %v4286
    %4614 = vmatpush1.bf16.msra.mxu0 %v4285
    %4615 = vmatprep.subr.bf16.mxu0 %v4290
    %4616 = vmatpush1.bf16.msra.mxu0 %v4289
    %4617 = vmatprep.subr.bf16.mxu0 %v4294
    %4618 = vmatpush1.bf16.msra.mxu0 %v4293
    %4619 = vmatprep.subr.bf16.mxu0 %v4298
    %4620 = vmatpush1.bf16.msra.mxu0 %v4297
    %4621 = vmatprep.subr.bf16.mxu0 %v4302
    %4622 = vmatpush1.bf16.msra.mxu0 %v4301
    %4623 = vmatprep.subr.bf16.mxu0 %v4306
    %4624 = vmatpush1.bf16.msra.mxu0 %v4305
    %4625 = vmatprep.subr.bf16.mxu0 %v4310
    %4626 = vmatpush1.bf16.msra.mxu0 %v4309
    %4627 = vmatprep.subr.bf16.mxu0 %v4314
    %4628 = vmatpush1.bf16.msra.mxu0 %v4313
    %4629 = vmatprep.subr.bf16.mxu0 %v4318
    %4630 = vmatpush1.bf16.msra.mxu0 %v4317
    %4631 = vmatprep.subr.bf16.mxu0 %v4322
    %4632 = vmatpush1.bf16.msra.mxu0 %v4321
    %4633 = vmatprep.subr.bf16.mxu0 %v4326
    %4634 = vmatpush1.bf16.msra.mxu0 %v4325
    %4635 = vmatprep.subr.bf16.mxu0 %v4330
    %4636 = vmatpush1.bf16.msra.mxu0 %v4329
    %4637 = vmatprep.mubr.bf16.mxu0 %v3751
    %4638 = vmatmul.mubr.bf16.gmra.mrb[0].mxu0 %v3750
    %v4639 = vpop.f32.mrb[0].mxu0
    %v4640 = vadd.f32 0.0, %v4639
    %v4641 = vpop.f32.mrb[0].mxu0
    %v4642 = vadd.f32 0.0, %v4641
    %v4643 = vpop.f32.mrb[0].mxu0
    %v4644 = vpop.f32.mrb[0].mxu0
    %4645 = vdwg.mxu0
    %4646 = vmatprep.subr.bf16.mxu0 %v4334
    %4647 = vmatpush1.bf16.msra.mxu0 %v4333
    %4648 = vmatprep.subr.bf16.mxu0 %v4338
    %4649 = vmatpush1.bf16.msra.mxu0 %v4337
    %4650 = vmatprep.subr.bf16.mxu0 %v4342
    %4651 = vmatpush1.bf16.msra.mxu0 %v4341
    %4652 = vmatprep.subr.bf16.mxu0 %v4346
    %4653 = vmatpush1.bf16.msra.mxu0 %v4345
    %4654 = vmatprep.subr.bf16.mxu0 %v4350
    %4655 = vmatpush1.bf16.msra.mxu0 %v4349
    %4656 = vmatprep.subr.bf16.mxu0 %v4354
    %4657 = vmatpush1.bf16.msra.mxu0 %v4353
    %4658 = vmatprep.subr.bf16.mxu0 %v4358
    %4659 = vmatpush1.bf16.msra.mxu0 %v4357
    %4660 = vmatprep.subr.bf16.mxu0 %v4362
    %4661 = vmatpush1.bf16.msra.mxu0 %v4361
    %4662 = vmatprep.subr.bf16.mxu0 %v4366
    %4663 = vmatpush1.bf16.msra.mxu0 %v4365
    %4664 = vmatprep.subr.bf16.mxu0 %v4370
    %4665 = vmatpush1.bf16.msra.mxu0 %v4369
    %4666 = vmatprep.subr.bf16.mxu0 %v4374
    %4667 = vmatpush1.bf16.msra.mxu0 %v4373
    %4668 = vmatprep.subr.bf16.mxu0 %v4378
    %4669 = vmatpush1.bf16.msra.mxu0 %v4377
    %4670 = vmatprep.subr.bf16.mxu0 %v4382
    %4671 = vmatpush1.bf16.msra.mxu0 %v4381
    %4672 = vmatprep.subr.bf16.mxu0 %v4386
    %4673 = vmatpush1.bf16.msra.mxu0 %v4385
    %4674 = vmatprep.subr.bf16.mxu0 %v4390
    %4675 = vmatpush1.bf16.msra.mxu0 %v4389
    %4676 = vmatprep.subr.bf16.mxu0 %v4394
    %4677 = vmatpush1.bf16.msra.mxu0 %v4393
    %4678 = vmatprep.mubr.bf16.mxu0 %v3753
    %4679 = vmatmul.mubr.bf16.gmra.mrb[0].mxu0 %v3752
    %v4680 = vpop.f32.mrb[0].mxu0
    %v4681 = vadd.f32 %v4640, %v4680
    %v4682 = vpop.f32.mrb[0].mxu0
    %v4683 = vadd.f32 %v4642, %v4682
    %v4684 = vpop.f32.mrb[0].mxu0
    %v4685 = vpop.f32.mrb[0].mxu0
    %4686 = vdwg.mxu0
    %v4687 = vrot.slane %v4599, 4
    %v4688 = vadd.f32 %v4599, %v4687
    %v4689 = vrot.slane %v4688, 2
    %v4690 = vadd.f32 %v4688, %v4689
    %v4691 = vrot.slane %v4690, 1
    %v4692 = vadd.f32 %v4690, %v4691
    %v4693 = vrot.slane %v4601, 4
    %v4694 = vadd.f32 %v4601, %v4693
    %v4695 = vrot.slane %v4694, 2
    %v4696 = vadd.f32 %v4694, %v4695
    %v4697 = vrot.slane %v4696, 1
    %v4698 = vadd.f32 %v4696, %v4697
    %v4699 = vrot.slane %v4681, 4
    %v4700 = vadd.f32 %v4681, %v4699
    %v4701 = vrot.slane %v4700, 2
    %v4702 = vadd.f32 %v4700, %v4701
    %v4703 = vrot.slane %v4702, 1
    %v4704 = vadd.f32 %v4702, %v4703
    %v4705 = vrot.slane %v4683, 4
    %v4706 = vadd.f32 %v4683, %v4705
    %v4707 = vrot.slane %v4706, 2
    %v4708 = vadd.f32 %v4706, %v4707
    %v4709 = vrot.slane %v4708, 1
    %v4710 = vadd.f32 %v4708, %v4709
    %v4711 = vmul.f32 %v4692, %v575
    %v4712 = vmul.f32 %v4698, %v575
    %v4713 = vmul.f32 %v4704, %v575
    %v4714 = vmul.f32 %v4710, %v575
    %v4715 = vsub.f32 %v4599, %v4711
    %v4716 = vsub.f32 %v4601, %v4712
    %v4717 = vsub.f32 %v4681, %v4713
    %v4718 = vsub.f32 %v4683, %v4714
    %v4719 = vmul.f32 %v4715, %v4715
    %v4720 = vmul.f32 %v4716, %v4716
    %v4721 = vmul.f32 %v4717, %v4717
    %v4722 = vmul.f32 %v4718, %v4718
    %v4723 = vrot.slane %v4719, 4
    %v4724 = vadd.f32 %v4719, %v4723
    %v4725 = vrot.slane %v4724, 2
    %v4726 = vadd.f32 %v4724, %v4725
    %v4727 = vrot.slane %v4726, 1
    %v4728 = vadd.f32 %v4726, %v4727
    %v4729 = vrot.slane %v4720, 4
    %v4730 = vadd.f32 %v4720, %v4729
    %v4731 = vrot.slane %v4730, 2
    %v4732 = vadd.f32 %v4730, %v4731
    %v4733 = vrot.slane %v4732, 1
    %v4734 = vadd.f32 %v4732, %v4733
    %v4735 = vrot.slane %v4721, 4
    %v4736 = vadd.f32 %v4721, %v4735
    %v4737 = vrot.slane %v4736, 2
    %v4738 = vadd.f32 %v4736, %v4737
    %v4739 = vrot.slane %v4738, 1
    %v4740 = vadd.f32 %v4738, %v4739
    %v4741 = vrot.slane %v4722, 4
    %v4742 = vadd.f32 %v4722, %v4741
    %v4743 = vrot.slane %v4742, 2
    %v4744 = vadd.f32 %v4742, %v4743
    %v4745 = vrot.slane %v4744, 1
    %v4746 = vadd.f32 %v4744, %v4745
    %v4747 = vmul.f32 %v4728, %v575
    %v4748 = vmul.f32 %v4734, %v575
    %v4749 = vmul.f32 %v4740, %v575
    %v4750 = vmul.f32 %v4746, %v575
    %v4751 = vadd.f32 %v4747, 1e-05
    %v4752 = vadd.f32 %v4748, 1e-05
    %v4753 = vadd.f32 %v4749, 1e-05
    %v4754 = vadd.f32 %v4750, 1e-05
    %v4755 = vrsqrt.pop %v4751
    %v4756 = vrsqrt.pop %v4752
    %v4757 = vrsqrt.pop %v4753
    %v4758 = vrsqrt.pop %v4754
    %v4759 = vmul.f32 %v4715, %v4755
    %v4760 = vmul.f32 %v4716, %v4756
    %v4761 = vmul.f32 %v4717, %v4757
    %v4762 = vmul.f32 %v4718, %v4758
    %v4763 = vadd.f32 %v4759, %v2713
    %v4764 = vadd.f32 %v4760, %v2714
    %v4765 = vadd.f32 %v4761, %v2715
    %v4766 = vadd.f32 %v4762, %v2716
    %v4767 = vmul.f32 %v4763, 0.5
    %v4768 = vmul.f32 %v4764, 0.5
    %v4769 = vmul.f32 %v4765, 0.5
    %v4770 = vmul.f32 %v4766, 0.5
    %v4771 = vmul.f32 %v4763, 0.70710677
    %v4772 = vmul.f32 %v4764, 0.70710677
    %v4773 = vmul.f32 %v4765, 0.70710677
    %v4774 = vmul.f32 %v4766, 0.70710677
    %v4775 = verf.f32.pop %v4771
    %v4776 = verf.f32.pop %v4772
    %v4777 = verf.f32.pop %v4773
    %v4778 = verf.f32.pop %v4774
    %v4779 = vadd.f32 %v4775, 1.0
    %v4780 = vadd.f32 %v4776, 1.0
    %v4781 = vadd.f32 %v4777, 1.0
    %v4782 = vadd.f32 %v4778, 1.0
    %v4783 = vmul.f32 %v4767, %v4779
    %v4784 = vmul.f32 %v4768, %v4780
    %v4785 = vmul.f32 %v4769, %v4781
    %v4786 = vmul.f32 %v4770, %v4782
    %v4787 = vpack.c.bf16 %v4783, %v4783
    %v4788 = vpack.c.bf16 %v4784, %v4784
    %v4789 = vpack.c.bf16 %v4785, %v4785
    %v4790 = vpack.c.bf16 %v4786, %v4786
    %v4791 = vld [vmem:[#allocation6] sm:$0xf]
    %v4792 = vld [vmem:[#allocation6 + $0x4] sm:$0xf]
    %v4793 = vld [vmem:[#allocation6 + $0x8] sm:$0xf]
    %v4794 = vld [vmem:[#allocation6 + $0xc] sm:$0xf]
    %v4795 = vld [vmem:[#allocation6 + $0x10] sm:$0xf]
    %v4796 = vld [vmem:[#allocation6 + $0x14] sm:$0xf]
    %v4797 = vld [vmem:[#allocation6 + $0x18] sm:$0xf]
    %v4798 = vld [vmem:[#allocation6 + $0x1c] sm:$0xf]
    %v4799 = vld [vmem:[#allocation6 + $0x20] sm:$0xf]
    %v4800 = vld [vmem:[#allocation6 + $0x24] sm:$0xf]
    %v4801 = vld [vmem:[#allocation6 + $0x28] sm:$0xf]
    %v4802 = vld [vmem:[#allocation6 + $0x2c] sm:$0xf]
    %v4803 = vld [vmem:[#allocation6 + $0x30] sm:$0xf]
    %v4804 = vld [vmem:[#allocation6 + $0x34] sm:$0xf]
    %v4805 = vld [vmem:[#allocation6 + $0x38] sm:$0xf]
    %v4806 = vld [vmem:[#allocation6 + $0x3c] sm:$0xf]
    %v4807 = vld [vmem:[#allocation6 + $0x40] sm:$0xf]
    %v4808 = vld [vmem:[#allocation6 + $0x44] sm:$0xf]
    %v4809 = vld [vmem:[#allocation6 + $0x48] sm:$0xf]
    %v4810 = vld [vmem:[#allocation6 + $0x4c] sm:$0xf]
    %v4811 = vld [vmem:[#allocation6 + $0x50] sm:$0xf]
    %v4812 = vld [vmem:[#allocation6 + $0x54] sm:$0xf]
    %v4813 = vld [vmem:[#allocation6 + $0x58] sm:$0xf]
    %v4814 = vld [vmem:[#allocation6 + $0x5c] sm:$0xf]
    %v4815 = vld [vmem:[#allocation6 + $0x60] sm:$0xf]
    %v4816 = vld [vmem:[#allocation6 + $0x64] sm:$0xf]
    %v4817 = vld [vmem:[#allocation6 + $0x68] sm:$0xf]
    %v4818 = vld [vmem:[#allocation6 + $0x6c] sm:$0xf]
    %v4819 = vld [vmem:[#allocation6 + $0x70] sm:$0xf]
    %v4820 = vld [vmem:[#allocation6 + $0x74] sm:$0xf]
    %v4821 = vld [vmem:[#allocation6 + $0x78] sm:$0xf]
    %v4822 = vld [vmem:[#allocation6 + $0x7c] sm:$0xf]
    %v4823 = vld [vmem:[#allocation6 + $0x80] sm:$0xf]
    %v4824 = vld [vmem:[#allocation6 + $0x84] sm:$0xf]
    %v4825 = vld [vmem:[#allocation6 + $0x88] sm:$0xf]
    %v4826 = vld [vmem:[#allocation6 + $0x8c] sm:$0xf]
    %v4827 = vld [vmem:[#allocation6 + $0x90] sm:$0xf]
    %v4828 = vld [vmem:[#allocation6 + $0x94] sm:$0xf]
    %v4829 = vld [vmem:[#allocation6 + $0x98] sm:$0xf]
    %v4830 = vld [vmem:[#allocation6 + $0x9c] sm:$0xf]
    %v4831 = vld [vmem:[#allocation6 + $0xa0] sm:$0xf]
    %v4832 = vld [vmem:[#allocation6 + $0xa4] sm:$0xf]
    %v4833 = vld [vmem:[#allocation6 + $0xa8] sm:$0xf]
    %v4834 = vld [vmem:[#allocation6 + $0xac] sm:$0xf]
    %v4835 = vld [vmem:[#allocation6 + $0xb0] sm:$0xf]
    %v4836 = vld [vmem:[#allocation6 + $0xb4] sm:$0xf]
    %v4837 = vld [vmem:[#allocation6 + $0xb8] sm:$0xf]
    %v4838 = vld [vmem:[#allocation6 + $0xbc] sm:$0xf]
    %v4839 = vld [vmem:[#allocation6 + $0xc0] sm:$0xf]
    %v4840 = vld [vmem:[#allocation6 + $0xc4] sm:$0xf]
    %v4841 = vld [vmem:[#allocation6 + $0xc8] sm:$0xf]
    %v4842 = vld [vmem:[#allocation6 + $0xcc] sm:$0xf]
    %v4843 = vld [vmem:[#allocation6 + $0xd0] sm:$0xf]
    %v4844 = vld [vmem:[#allocation6 + $0xd4] sm:$0xf]
    %v4845 = vld [vmem:[#allocation6 + $0xd8] sm:$0xf]
    %v4846 = vld [vmem:[#allocation6 + $0xdc] sm:$0xf]
    %v4847 = vld [vmem:[#allocation6 + $0xe0] sm:$0xf]
    %v4848 = vld [vmem:[#allocation6 + $0xe4] sm:$0xf]
    %v4849 = vld [vmem:[#allocation6 + $0xe8] sm:$0xf]
    %v4850 = vld [vmem:[#allocation6 + $0xec] sm:$0xf]
    %v4851 = vld [vmem:[#allocation6 + $0xf0] sm:$0xf]
    %v4852 = vld [vmem:[#allocation6 + $0xf4] sm:$0xf]
    %v4853 = vld [vmem:[#allocation6 + $0xf8] sm:$0xf]
    %v4854 = vld [vmem:[#allocation6 + $0xfc] sm:$0xf]
    %v4855 = vld [vmem:[#allocation7] sm:$0x1]
    %v4857 = vlaneseq
    %v4858 = vshrl.u32 %v4857, 7
    %v4859 = vsub.s32 0, %v4858
    %v4860 = vrot.slane %v4855, %v4859
    %v4926 = vunpack.c.l.b16 %v4791
    %v4927 = vunpack.c.l.b16 %v4792
    %v4928 = vunpack.c.l.b16 %v4793
    %v4929 = vunpack.c.l.b16 %v4794
    %v4930 = vunpack.c.l.b16 %v4795
    %v4931 = vunpack.c.l.b16 %v4796
    %v4932 = vunpack.c.l.b16 %v4797
    %v4933 = vunpack.c.l.b16 %v4798
    %v4934 = vunpack.c.l.b16 %v4799
    %v4935 = vunpack.c.l.b16 %v4800
    %v4936 = vunpack.c.l.b16 %v4801
    %v4937 = vunpack.c.l.b16 %v4802
    %v4938 = vunpack.c.l.b16 %v4803
    %v4939 = vunpack.c.l.b16 %v4804
    %v4940 = vunpack.c.l.b16 %v4805
    %v4941 = vunpack.c.l.b16 %v4806
    %v4942 = vunpack.c.l.b16 %v4807
    %v4943 = vunpack.c.l.b16 %v4808
    %v4944 = vunpack.c.l.b16 %v4809
    %v4945 = vunpack.c.l.b16 %v4810
    %v4946 = vunpack.c.l.b16 %v4811
    %v4947 = vunpack.c.l.b16 %v4812
    %v4948 = vunpack.c.l.b16 %v4813
    %v4949 = vunpack.c.l.b16 %v4814
    %v4950 = vunpack.c.l.b16 %v4815
    %v4951 = vunpack.c.l.b16 %v4816
    %v4952 = vunpack.c.l.b16 %v4817
    %v4953 = vunpack.c.l.b16 %v4818
    %v4954 = vunpack.c.l.b16 %v4819
    %v4955 = vunpack.c.l.b16 %v4820
    %v4956 = vunpack.c.l.b16 %v4821
    %v4957 = vunpack.c.l.b16 %v4822
    %v4958 = vunpack.c.l.b16 %v4823
    %v4959 = vunpack.c.l.b16 %v4824
    %v4960 = vunpack.c.l.b16 %v4825
    %v4961 = vunpack.c.l.b16 %v4826
    %v4962 = vunpack.c.l.b16 %v4827
    %v4963 = vunpack.c.l.b16 %v4828
    %v4964 = vunpack.c.l.b16 %v4829
    %v4965 = vunpack.c.l.b16 %v4830
    %v4966 = vunpack.c.l.b16 %v4831
    %v4967 = vunpack.c.l.b16 %v4832
    %v4968 = vunpack.c.l.b16 %v4833
    %v4969 = vunpack.c.l.b16 %v4834
    %v4970 = vunpack.c.l.b16 %v4835
    %v4971 = vunpack.c.l.b16 %v4836
    %v4972 = vunpack.c.l.b16 %v4837
    %v4973 = vunpack.c.l.b16 %v4838
    %v4974 = vunpack.c.l.b16 %v4839
    %v4975 = vunpack.c.l.b16 %v4840
    %v4976 = vunpack.c.l.b16 %v4841
    %v4977 = vunpack.c.l.b16 %v4842
    %v4978 = vunpack.c.l.b16 %v4843
    %v4979 = vunpack.c.l.b16 %v4844
    %v4980 = vunpack.c.l.b16 %v4845
    %v4981 = vunpack.c.l.b16 %v4846
    %v4982 = vunpack.c.l.b16 %v4847
    %v4983 = vunpack.c.l.b16 %v4848
    %v4984 = vunpack.c.l.b16 %v4849
    %v4985 = vunpack.c.l.b16 %v4850
    %v4986 = vunpack.c.l.b16 %v4851
    %v4987 = vunpack.c.l.b16 %v4852
    %v4988 = vunpack.c.l.b16 %v4853
    %v4989 = vunpack.c.l.b16 %v4854
    %v4990 = vpack.c.b16 %v4927, %v4926
    %v4991 = vpack.c.b16 %v4929, %v4928
    %v4992 = vpack.c.b16 %v4931, %v4930
    %v4993 = vpack.c.b16 %v4933, %v4932
    %v4994 = vpack.c.b16 %v4935, %v4934
    %v4995 = vpack.c.b16 %v4937, %v4936
    %v4996 = vpack.c.b16 %v4939, %v4938
    %v4997 = vpack.c.b16 %v4941, %v4940
    %v4998 = vpack.c.b16 %v4943, %v4942
    %v4999 = vpack.c.b16 %v4945, %v4944
    %v5000 = vpack.c.b16 %v4947, %v4946
    %v5001 = vpack.c.b16 %v4949, %v4948
    %v5002 = vpack.c.b16 %v4951, %v4950
    %v5003 = vpack.c.b16 %v4953, %v4952
    %v5004 = vpack.c.b16 %v4955, %v4954
    %v5005 = vpack.c.b16 %v4957, %v4956
    %v5006 = vpack.c.b16 %v4959, %v4958
    %v5007 = vpack.c.b16 %v4961, %v4960
    %v5008 = vpack.c.b16 %v4963, %v4962
    %v5009 = vpack.c.b16 %v4965, %v4964
    %v5010 = vpack.c.b16 %v4967, %v4966
    %v5011 = vpack.c.b16 %v4969, %v4968
    %v5012 = vpack.c.b16 %v4971, %v4970
    %v5013 = vpack.c.b16 %v4973, %v4972
    %v5014 = vpack.c.b16 %v4975, %v4974
    %v5015 = vpack.c.b16 %v4977, %v4976
    %v5016 = vpack.c.b16 %v4979, %v4978
    %v5017 = vpack.c.b16 %v4981, %v4980
    %v5018 = vpack.c.b16 %v4983, %v4982
    %v5019 = vpack.c.b16 %v4985, %v4984
    %v5020 = vpack.c.b16 %v4987, %v4986
    %v5021 = vpack.c.b16 %v4989, %v4988
    %5054 = vmatprep.subr.bf16.mxu0 0
    %5055 = vmatpush1.bf16.msra.mxu0 %v4990
    %5056 = vmatprep.subr.bf16.mxu0 0
    %5057 = vmatpush1.bf16.msra.mxu0 %v4991
    %5058 = vmatprep.subr.bf16.mxu0 0
    %5059 = vmatpush1.bf16.msra.mxu0 %v4992
    %5060 = vmatprep.subr.bf16.mxu0 0
    %5061 = vmatpush1.bf16.msra.mxu0 %v4993
    %5062 = vmatprep.subr.bf16.mxu0 0
    %5063 = vmatpush1.bf16.msra.mxu0 %v4994
    %5064 = vmatprep.subr.bf16.mxu0 0
    %5065 = vmatpush1.bf16.msra.mxu0 %v4995
    %5066 = vmatprep.subr.bf16.mxu0 0
    %5067 = vmatpush1.bf16.msra.mxu0 %v4996
    %5068 = vmatprep.subr.bf16.mxu0 0
    %5069 = vmatpush1.bf16.msra.mxu0 %v4997
    %5070 = vmatprep.subr.bf16.mxu0 0
    %5071 = vmatpush1.bf16.msra.mxu0 %v4998
    %5072 = vmatprep.subr.bf16.mxu0 0
    %5073 = vmatpush1.bf16.msra.mxu0 %v4999
    %5074 = vmatprep.subr.bf16.mxu0 0
    %5075 = vmatpush1.bf16.msra.mxu0 %v5000
    %5076 = vmatprep.subr.bf16.mxu0 0
    %5077 = vmatpush1.bf16.msra.mxu0 %v5001
    %5078 = vmatprep.subr.bf16.mxu0 0
    %5079 = vmatpush1.bf16.msra.mxu0 %v5002
    %5080 = vmatprep.subr.bf16.mxu0 0
    %5081 = vmatpush1.bf16.msra.mxu0 %v5003
    %5082 = vmatprep.subr.bf16.mxu0 0
    %5083 = vmatpush1.bf16.msra.mxu0 %v5004
    %5084 = vmatprep.subr.bf16.mxu0 0
    %5085 = vmatpush1.bf16.msra.mxu0 %v5005
    %5086 = vmatprep.mubr.bf16.mxu0 %v4788
    %5087 = vmatmul.mubr.bf16.gmra.mrb[0].mxu0 %v4787
    %v5088 = vpop.f32.mrb[0].mxu0
    %v5089 = vadd.f32 %v4860, %v5088
    %v5090 = vpop.f32.mrb[0].mxu0
    %v5091 = vpop.f32.mrb[0].mxu0
    %v5092 = vpop.f32.mrb[0].mxu0
    %5093 = vdwg.mxu0
    %5094 = vmatprep.subr.bf16.mxu0 0
    %5095 = vmatpush1.bf16.msra.mxu0 %v5006
    %5096 = vmatprep.subr.bf16.mxu0 0
    %5097 = vmatpush1.bf16.msra.mxu0 %v5007
    %5098 = vmatprep.subr.bf16.mxu0 0
    %5099 = vmatpush1.bf16.msra.mxu0 %v5008
    %5100 = vmatprep.subr.bf16.mxu0 0
    %5101 = vmatpush1.bf16.msra.mxu0 %v5009
    %5102 = vmatprep.subr.bf16.mxu0 0
    %5103 = vmatpush1.bf16.msra.mxu0 %v5010
    %5104 = vmatprep.subr.bf16.mxu0 0
    %5105 = vmatpush1.bf16.msra.mxu0 %v5011
    %5106 = vmatprep.subr.bf16.mxu0 0
    %5107 = vmatpush1.bf16.msra.mxu0 %v5012
    %5108 = vmatprep.subr.bf16.mxu0 0
    %5109 = vmatpush1.bf16.msra.mxu0 %v5013
    %5110 = vmatprep.subr.bf16.mxu0 0
    %5111 = vmatpush1.bf16.msra.mxu0 %v5014
    %5112 = vmatprep.subr.bf16.mxu0 0
    %5113 = vmatpush1.bf16.msra.mxu0 %v5015
    %5114 = vmatprep.subr.bf16.mxu0 0
    %5115 = vmatpush1.bf16.msra.mxu0 %v5016
    %5116 = vmatprep.subr.bf16.mxu0 0
    %5117 = vmatpush1.bf16.msra.mxu0 %v5017
    %5118 = vmatprep.subr.bf16.mxu0 0
    %5119 = vmatpush1.bf16.msra.mxu0 %v5018
    %5120 = vmatprep.subr.bf16.mxu0 0
    %5121 = vmatpush1.bf16.msra.mxu0 %v5019
    %5122 = vmatprep.subr.bf16.mxu0 0
    %5123 = vmatpush1.bf16.msra.mxu0 %v5020
    %5124 = vmatprep.subr.bf16.mxu0 0
    %5125 = vmatpush1.bf16.msra.mxu0 %v5021
    %5126 = vmatprep.mubr.bf16.mxu0 %v4790
    %5127 = vmatmul.mubr.bf16.gmra.mrb[0].mxu0 %v4789
    %v5128 = vpop.f32.mrb[0].mxu0
    %v5129 = vadd.f32 %v5089, %v5128
    %v5130 = vpop.f32.mrb[0].mxu0
    %v5131 = vpop.f32.mrb[0].mxu0
    %v5132 = vpop.f32.mrb[0].mxu0
    %5133 = vdwg.mxu0
    %v5134 = vld [vmem:[%s1] sm:$0xff]
    %v5135 = vadd.f32 %v5129, %v5134
    %5136 = vst [vmem:[%s6] sm:$0xff] %v5135
    // Predicated region
    $region42: #{forward.1} parent=1 // pred_check
      _
    $region43: #{forward.1} parent=1 // pred_check_branch
      %5138 = sbr.rel (0) target = $region45
    $region44: #{forward.1} parent=1 // pred_region
      _
    $region45: #{forward.1} parent=1 // pred_fallthru
      _
    // Predicated region
    $region46: #{forward.1} parent=1 // pred_check
      _
    $region47: #{forward.1} parent=1 // pred_check_branch
      %5140 = sbr.rel (0) target = $region49
    $region48: #{forward.1} parent=1 // pred_region
      _
    $region49: #{forward.1} parent=1 // pred_fallthru
      _
    %5141 = vsyncpa [#allocation3], 1
    %5142 = vsyncpa [#allocation5], 1
    %5143 = vsyncpa [#allocation8], 1

</llo_original>
